<compile_context>
chip_gen: v5e
topology: v5e:2x2
jax: 0.10.0
libtpu: 0.0.40
codegen_flags: <defaults>
</compile_context>

<pallas_src>
import functools

import jax
import jax.numpy as jnp
from jax import lax
from jax.experimental import pallas as pl
from jax.experimental.pallas import tpu as pltpu

EPS = 1e-6
_INV_SQRT2 = 0.7071067811865475
_LANES = 128


def _round_up(n, m):
    return ((n + m - 1) // m) * m


def _erf(x):
    """erf via Abramowitz & Stegun 7.1.26 (|err| <= 1.5e-7).

    Uses only abs/exp/mul/add/where, so it lowers on the VPU/EUP without relying on
    an erf lowering rule in Mosaic; matches torch.nn.GELU's exact-erf formulation to
    f32 noise."""
    p = 0.3275911
    a1, a2, a3, a4, a5 = (0.254829592, -0.284496736, 1.421413741,
                          -1.453152027, 1.061405429)
    ax = jnp.abs(x)
    t = 1.0 / (1.0 + p * ax)
    poly = ((((a5 * t + a4) * t + a3) * t + a2) * t + a1) * t
    e = 1.0 - poly * jnp.exp(-ax * ax)
    return jnp.where(x >= 0, e, -e)


# ---------------------------------------------------------------------------
# Fused kernel: the whole ConvBlock for one image, entirely in VMEM
# ---------------------------------------------------------------------------
def _conv_block_kernel(x_ref, w_ref, pgb_ref, wf_ref, bf_ref, o_ref, act_ref,
                       *, couts, cp, s0):
    """x_ref   : (1, s0, s0, cp)   input image, channels zero-padded to cp lanes (f32)
       w_ref   : (4, 3, 3, cp, cp) stem conv weights, bf16, w[l, kh, kw, cin, cout]
       pgb_ref : (4, 3, cp)        packed per-layer [conv bias, LN gamma, LN beta] (f32)
       wf_ref  : (cp, fp)          final 1x1 conv weight, bf16
       bf_ref  : (1, fp)           final 1x1 conv bias (f32)
       o_ref   : (1, 1, fp)        final 1x1 conv output for this image
       act_ref : (s0+2, s0+2, cp)  padded activation scratch (per-layer windows reuse it)
    """

    def write_padded(interior, m):
        # (m, m, cp) interior + 1-pixel zero ring -> act_ref[0:m+2, 0:m+2, :].
        # Only the ring strips are zeroed (not the whole buffer).
        p = m + 2
        zrow = jnp.zeros((1, p, cp), jnp.float32)
        act_ref[0:1, 0:p, :] = zrow
        act_ref[p - 1:p, 0:p, :] = zrow
        zcol = jnp.zeros((m, 1, cp), jnp.float32)
        act_ref[1:1 + m, 0:1, :] = zcol
        act_ref[1:1 + m, p - 1:p, :] = zcol
        act_ref[1:1 + m, 1:1 + m, :] = interior

    # Layer-1 input.  For m = s0 this covers every addressable row/col of act_ref,
    # so the over-read "padding" columns of the smaller layers below read finite,
    # initialized data (they are discarded anyway).
    write_padded(x_ref[0], s0)

    s = s0
    y = None
    for l, cout in enumerate(couts):
        o = s // 2      # true output resolution of this stride-2 conv
        m = 8 * o       # M rows: each output row padded to 8 columns so all reshapes
                        # keep a full (8, 128) minor tile (layout no-ops); the extra
                        # columns (c >= o) are junk pixels that are never written back.

        # 3x3 / stride-2 conv as 9 taps -> 9 bf16 MXU matmuls.  Column stride-2 is a
        # native sublane-strided load; row stride-2 is a free outer-dim select.
        # Partial sums stay in a traced f32 value (no VMEM accumulator round trips).
        acc = None
        for kh in range(3):
            for kw in range(3):
                tap = act_ref[pl.ds(kh, 2 * o), pl.ds(kw, 8, stride=2), :]  # (2o, 8, cp)
                tap = tap.reshape(o, 2, 8, cp)[:, 0]                        # even rows
                tap = tap.reshape(m, cp).astype(jnp.bfloat16)               # bf16 MXU operand
                d = jnp.dot(tap, w_ref[l, kh, kw],
                            preferred_element_type=jnp.float32)
                acc = d if acc is None else acc + d

        y = acc + pgb_ref[l, 0:1, :]     # conv bias (zero on padded lanes)

        # channels_first LayerNorm over the REAL `cout` lanes.  y is exactly zero on
        # padded lanes (zero weight columns + zero bias), so unmasked lane sums divided
        # by the real channel count are exact; gamma/beta are zero-padded, so padded
        # lanes stay exactly zero afterwards.  Single pass: var = E[y^2] - mean^2.
        inv_c = 1.0 / float(cout)
        u = jnp.sum(y, axis=-1, keepdims=True) * inv_c
        e2 = jnp.sum(y * y, axis=-1, keepdims=True) * inv_c
        y = (y - u) * lax.rsqrt(e2 - u * u + EPS)          # rsqrt -> EUP slot
        y = pgb_ref[l, 1:2, :] * y + pgb_ref[l, 2:3, :]    # gamma, beta

        # exact-erf GELU (matches torch.nn.GELU default)
        y = 0.5 * y * (1.0 + _erf(y * _INV_SQRT2))

        if l + 1 < len(couts):
            # keep only the o real columns of each 8-wide row; write padded window
            write_padded(y.reshape(o, 8, cp)[:, 0:o, :], o)
        s = o

    # Final 1x1 conv on the single surviving pixel (row 0 of the last (8, cp) slab).
    out = jnp.dot(y.astype(jnp.bfloat16), wf_ref[...],
                  preferred_element_type=jnp.float32)
    o_ref[...] = (out[0:1, :] + bf_ref[...]).reshape(o_ref.shape).astype(o_ref.dtype)


# ---------------------------------------------------------------------------
# Wrapper: param packing (lane padding, bf16 MXU operands) + single pallas_call
# ---------------------------------------------------------------------------
def conv_block_forward(x_nchw, params):
    n, cin0, h, w0 = x_nchw.shape
    assert h == 16 and w0 == 16, "fused kernel assumes 16x16 input (4 stride-2 layers -> 1x1)"
    s0 = h

    stem = params["stem"]
    wf, bf = params["final"]
    couts = tuple(int(wl.shape[0]) for (wl, _, _, _) in stem)
    fin = int(wf.shape[0])
    cp = _round_up(max(couts + (cin0,)), _LANES)
    fp = _round_up(fin, _LANES)

    # ---- pack parameters: bf16 matmul operands, f32 bias/gamma/beta, all channel
    #      dims zero-padded to cp / fp lanes ----
    w_stack = jnp.zeros((4, 3, 3, cp, cp), jnp.bfloat16)
    pgb = jnp.zeros((4, 3, cp), jnp.float32)
    for l, (wl, bl, gl, betal) in enumerate(stem):
        co, ci = int(wl.shape[0]), int(wl.shape[1])
        wt = jnp.transpose(wl, (2, 3, 1, 0)).astype(jnp.bfloat16)   # (kh, kw, cin, cout)
        w_stack = w_stack.at[l, :, :, :ci, :co].set(wt)
        pgb = pgb.at[l, 0, :co].set(bl)
        pgb = pgb.at[l, 1, :co].set(gl)
        pgb = pgb.at[l, 2, :co].set(betal)
    wf_mat = jnp.zeros((cp, fp), jnp.bfloat16).at[:couts[-1], :fin].set(
        wf.reshape(fin, couts[-1]).T.astype(jnp.bfloat16))
    bf_row = jnp.zeros((1, fp), jnp.float32).at[0, :fin].set(bf)

    # ---- input: NCHW -> NHWC, zero-pad channels to cp lanes ----
    x = jnp.transpose(x_nchw, (0, 2, 3, 1)).astype(jnp.float32)
    x = jnp.pad(x, ((0, 0), (0, 0), (0, 0), (0, cp - cin0)))

    kernel = functools.partial(_conv_block_kernel, couts=couts, cp=cp, s0=s0)
    out = pl.pallas_call(
        kernel,
        out_shape=jax.ShapeDtypeStruct((n, 1, fp), jnp.float32),
        grid=(n,),
        in_specs=[
            pl.BlockSpec((1, s0, s0, cp), lambda i: (i, 0, 0, 0)),
            pl.BlockSpec((4, 3, 3, cp, cp), lambda i: (0, 0, 0, 0, 0)),
            pl.BlockSpec((4, 3, cp), lambda i: (0, 0, 0)),
            pl.BlockSpec((cp, fp), lambda i: (0, 0)),
            pl.BlockSpec((1, fp), lambda i: (0, 0)),
        ],
        out_specs=pl.BlockSpec((1, 1, fp), lambda i: (i, 0, 0)),
        scratch_shapes=[
            pltpu.VMEM((s0 + 2, s0 + 2, cp), jnp.float32),
        ],
        compiler_params=pltpu.CompilerParams(
            dimension_semantics=("parallel",),
            vmem_limit_bytes=32 * 1024 * 1024,
        ),
    )(x, w_stack, pgb, wf_mat, bf_row)

    out = out.reshape(n, fp)[:, :fin]
    return out[:, :, None, None]  # NCHW (n, fin, 1, 1)


# ---------------------------------------------------------------------------
# Deterministic parameter init (shapes follow ConvBlock.__init__)
# ---------------------------------------------------------------------------
def init_params(key, siz=4, end_siz=8, fin_dim=384):
    fin = siz * end_siz if fin_dim != 432 else 432
    chans = [3, siz, siz * 2, siz * 4, siz * 8]
    stem = []
    for i in range(4):
        key, k1, k2 = jax.random.split(key, 3)
        cin, cout = chans[i], chans[i + 1]
        w = jax.random.normal(k1, (cout, cin, 3, 3), jnp.float32) * 0.1
        b = jax.random.normal(k2, (cout,), jnp.float32) * 0.05
        g = jnp.ones((cout,), jnp.float32)
        beta = jnp.zeros((cout,), jnp.float32)
        stem.append((w, b, g, beta))
    key, k1, k2 = jax.random.split(key, 3)
    wf = jax.random.normal(k1, (fin, chans[-1], 1, 1), jnp.float32) * 0.1
    bf = jax.random.normal(k2, (fin,), jnp.float32) * 0.05
    return {"stem": stem, "final": (wf, bf)}


# ---------------------------------------------------------------------------
# Pure-JAX reference (correctness check)
# ---------------------------------------------------------------------------
def _ref_forward(x, params):
    y = x
    for (w, b, g, beta) in params["stem"]:
        y = lax.conv_general_dilated(y, w, (2, 2), [(1, 1), (1, 1)],
                                     dimension_numbers=("NCHW", "OIHW", "NCHW"))
        y = y + b[None, :, None, None]
        u = y.mean(1, keepdims=True)
        s = ((y - u) ** 2).mean(1, keepdims=True)
        y = (y - u) / jnp.sqrt(s + EPS)
        y = g[None, :, None, None] * y + beta[None, :, None, None]
        y = 0.5 * y * (1.0 + lax.erf(y * _INV_SQRT2))
    wf, bf = params["final"]
    y = lax.conv_general_dilated(y, wf, (1, 1), [(0, 0), (0, 0)],
                                 dimension_numbers=("NCHW", "OIHW", "NCHW"))
    return y + bf[None, :, None, None]


if __name__ == "__main__":
    key = jax.random.PRNGKey(0)
    key, kx = jax.random.split(key)
    x = jax.random.normal(kx, (2, 3, 16, 16), jnp.float32)   # NCHW
    params = init_params(key, siz=4, end_siz=8, fin_dim=384)  # fin -> 32

    fwd = jax.jit(conv_block_forward)
    out = jax.block_until_ready(fwd(x, params))

    ref = jax.block_until_ready(_ref_forward(x, params))
    assert out.shape == ref.shape == (2, 32, 1, 1), (out.shape, ref.shape)
    err = float(jnp.max(jnp.abs(out - ref)))
    # bf16 MXU operands (f32 accumulate + f32 LN/GELU): tolerance relaxed vs pure-f32.
    assert jnp.allclose(out, ref, atol=5e-2, rtol=5e-2), err

    print("KERNEL_OK")
</pallas_src>

<mosaic_0001>
module attributes {stable_mosaic.version = 11 : i64} {
  func.func @_conv_block_kernel(%arg0: i32, %arg1: memref<1x16x16x128xf32, #tpu.memory_space<vmem>>, %arg2: memref<4x3x3x128x128xbf16, #tpu.memory_space<vmem>>, %arg3: memref<4x3x128xf32, #tpu.memory_space<vmem>>, %arg4: memref<128x128xbf16, #tpu.memory_space<vmem>>, %arg5: memref<1x128xf32, #tpu.memory_space<vmem>>, %arg6: memref<1x1x128xf32, #tpu.memory_space<vmem>>, %arg7: memref<18x18x128xf32, #tpu.memory_space<vmem>>) attributes {dimension_semantics = [#tpu.dimension_semantics<parallel>], iteration_bounds = array<i64: 2>, scalar_prefetch = 0 : i64, scratch_operands = 1 : i64, tpu.core_type = #tpu.core_type<tc>, window_params = [{transform_indices = @transform_0, window_bounds = array<i64: 1, 16, 16, 128>}, {pipeline_mode = #tpu.pipeline_mode<synchronous>, transform_indices = @transform_1, window_bounds = array<i64: 4, 3, 3, 128, 128>}, {pipeline_mode = #tpu.pipeline_mode<synchronous>, transform_indices = @transform_2, window_bounds = array<i64: 4, 3, 128>}, {pipeline_mode = #tpu.pipeline_mode<synchronous>, transform_indices = @transform_3, window_bounds = array<i64: 128, 128>}, {pipeline_mode = #tpu.pipeline_mode<synchronous>, transform_indices = @transform_4, window_bounds = array<i64: 1, 128>}, {transform_indices = @transform_5, window_bounds = array<i64: 1, 1, 128>}]} {
    %c0 = arith.constant 0 : index
    %c0_0 = arith.constant 0 : index
    %c0_1 = arith.constant 0 : index
    %c0_2 = arith.constant 0 : index
    %0 = vector.load %arg1[%c0, %c0_0, %c0_1, %c0_2] : memref<1x16x16x128xf32, #tpu.memory_space<vmem>>, vector<1x16x16x128xf32>
    %1 = vector.shape_cast %0 : vector<1x16x16x128xf32> to vector<16x16x128xf32>
    %cst = arith.constant 0.000000e+00 : f32
    %2 = vector.broadcast %cst : f32 to vector<1x18x128xf32>
    %c0_3 = arith.constant 0 : index
    %c0_4 = arith.constant 0 : index
    %c0_5 = arith.constant 0 : index
    %3 = vector.load %arg7[%c0_3, %c0_4, %c0_5] : memref<18x18x128xf32, #tpu.memory_space<vmem>>, vector<1x18x128xf32>
    tpu.vector_store %arg7[%c0_3, %c0_4, %c0_5], %2 {strides = array<i32>} : memref<18x18x128xf32, #tpu.memory_space<vmem>>, vector<1x18x128xf32>,
    %c17 = arith.constant 17 : index
    %c0_6 = arith.constant 0 : index
    %c0_7 = arith.constant 0 : index
    %4 = vector.load %arg7[%c17, %c0_6, %c0_7] : memref<18x18x128xf32, #tpu.memory_space<vmem>>, vector<1x18x128xf32>
    tpu.vector_store %arg7[%c17, %c0_6, %c0_7], %2 {strides = array<i32>} : memref<18x18x128xf32, #tpu.memory_space<vmem>>, vector<1x18x128xf32>,
    %cst_8 = arith.constant 0.000000e+00 : f32
    %5 = vector.broadcast %cst_8 : f32 to vector<16x1x128xf32>
    %c1 = arith.constant 1 : index
    %c0_9 = arith.constant 0 : index
    %c0_10 = arith.constant 0 : index
    %6 = vector.load %arg7[%c1, %c0_9, %c0_10] : memref<18x18x128xf32, #tpu.memory_space<vmem>>, vector<16x1x128xf32>
    tpu.vector_store %arg7[%c1, %c0_9, %c0_10], %5 {strides = array<i32>} : memref<18x18x128xf32, #tpu.memory_space<vmem>>, vector<16x1x128xf32>,
    %c1_11 = arith.constant 1 : index
    %c17_12 = arith.constant 17 : index
    %c0_13 = arith.constant 0 : index
    %7 = vector.load %arg7[%c1_11, %c17_12, %c0_13] : memref<18x18x128xf32, #tpu.memory_space<vmem>>, vector<16x1x128xf32>
    tpu.vector_store %arg7[%c1_11, %c17_12, %c0_13], %5 {strides = array<i32>} : memref<18x18x128xf32, #tpu.memory_space<vmem>>, vector<16x1x128xf32>,
    %c1_14 = arith.constant 1 : index
    %c1_15 = arith.constant 1 : index
    %c0_16 = arith.constant 0 : index
    %8 = vector.load %arg7[%c1_14, %c1_15, %c0_16] : memref<18x18x128xf32, #tpu.memory_space<vmem>>, vector<16x16x128xf32>
    tpu.vector_store %arg7[%c1_14, %c1_15, %c0_16], %1 {strides = array<i32>} : memref<18x18x128xf32, #tpu.memory_space<vmem>>, vector<16x16x128xf32>,
    %c0_17 = arith.constant 0 : index
    %c0_18 = arith.constant 0 : index
    %c0_19 = arith.constant 0 : index
    %9 = tpu.strided_load %arg7[%c0_17, %c0_18, %c0_19] {strides = array<i32: 1, 2, 1>} : memref<18x18x128xf32, #tpu.memory_space<vmem>>, vector<16x8x128xf32>
    %10 = vector.shape_cast %9 : vector<16x8x128xf32> to vector<8x2x8x128xf32>
    %11 = vector.extract_strided_slice %10 {offsets = [0, 0, 0, 0], sizes = [8, 1, 8, 128], strides = [1, 1, 1, 1]} : vector<8x2x8x128xf32> to vector<8x1x8x128xf32>
    %12 = vector.shape_cast %11 : vector<8x1x8x128xf32> to vector<8x8x128xf32>
    %13 = vector.shape_cast %12 : vector<8x8x128xf32> to vector<64x128xf32>
    %14 = arith.truncf %13 : vector<64x128xf32> to vector<64x128xbf16>
    %c0_20 = arith.constant 0 : index
    %c0_21 = arith.constant 0 : index
    %c0_22 = arith.constant 0 : index
    %c0_23 = arith.constant 0 : index
    %c0_24 = arith.constant 0 : index
    %15 = vector.load %arg2[%c0_20, %c0_21, %c0_22, %c0_23, %c0_24] : memref<4x3x3x128x128xbf16, #tpu.memory_space<vmem>>, vector<1x1x1x128x128xbf16>
    %16 = vector.shape_cast %15 : vector<1x1x1x128x128xbf16> to vector<128x128xbf16>
    %cst_25 = arith.constant dense<0.000000e+00> : vector<64x128xf32>
    %17 = tpu.matmul %14, %16, %cst_25 {dimension_numbers = #tpu.dot_dimension_numbers<[1], [0], [0], [1], [0, 0, 1, 1], [], []>} : vector<64x128xbf16>, vector<128x128xbf16>, vector<64x128xf32> -> vector<64x128xf32>
    %c0_26 = arith.constant 0 : index
    %c1_27 = arith.constant 1 : index
    %c0_28 = arith.constant 0 : index
    %18 = tpu.strided_load %arg7[%c0_26, %c1_27, %c0_28] {strides = array<i32: 1, 2, 1>} : memref<18x18x128xf32, #tpu.memory_space<vmem>>, vector<16x8x128xf32>
    %19 = vector.shape_cast %18 : vector<16x8x128xf32> to vector<8x2x8x128xf32>
    %20 = vector.extract_strided_slice %19 {offsets = [0, 0, 0, 0], sizes = [8, 1, 8, 128], strides = [1, 1, 1, 1]} : vector<8x2x8x128xf32> to vector<8x1x8x128xf32>
    %21 = vector.shape_cast %20 : vector<8x1x8x128xf32> to vector<8x8x128xf32>
    %22 = vector.shape_cast %21 : vector<8x8x128xf32> to vector<64x128xf32>
    %23 = arith.truncf %22 : vector<64x128xf32> to vector<64x128xbf16>
    %c0_29 = arith.constant 0 : index
    %c0_30 = arith.constant 0 : index
    %c1_31 = arith.constant 1 : index
    %c0_32 = arith.constant 0 : index
    %c0_33 = arith.constant 0 : index
    %24 = vector.load %arg2[%c0_29, %c0_30, %c1_31, %c0_32, %c0_33] : memref<4x3x3x128x128xbf16, #tpu.memory_space<vmem>>, vector<1x1x1x128x128xbf16>
    %25 = vector.shape_cast %24 : vector<1x1x1x128x128xbf16> to vector<128x128xbf16>
    %cst_34 = arith.constant dense<0.000000e+00> : vector<64x128xf32>
    %26 = tpu.matmul %23, %25, %cst_34 {dimension_numbers = #tpu.dot_dimension_numbers<[1], [0], [0], [1], [0, 0, 1, 1], [], []>} : vector<64x128xbf16>, vector<128x128xbf16>, vector<64x128xf32> -> vector<64x128xf32>
    %27 = arith.addf %17, %26 : vector<64x128xf32>
    %c0_35 = arith.constant 0 : index
    %c2 = arith.constant 2 : index
    %c0_36 = arith.constant 0 : index
    %28 = tpu.strided_load %arg7[%c0_35, %c2, %c0_36] {strides = array<i32: 1, 2, 1>} : memref<18x18x128xf32, #tpu.memory_space<vmem>>, vector<16x8x128xf32>
    %29 = vector.shape_cast %28 : vector<16x8x128xf32> to vector<8x2x8x128xf32>
    %30 = vector.extract_strided_slice %29 {offsets = [0, 0, 0, 0], sizes = [8, 1, 8, 128], strides = [1, 1, 1, 1]} : vector<8x2x8x128xf32> to vector<8x1x8x128xf32>
    %31 = vector.shape_cast %30 : vector<8x1x8x128xf32> to vector<8x8x128xf32>
    %32 = vector.shape_cast %31 : vector<8x8x128xf32> to vector<64x128xf32>
    %33 = arith.truncf %32 : vector<64x128xf32> to vector<64x128xbf16>
    %c0_37 = arith.constant 0 : index
    %c0_38 = arith.constant 0 : index
    %c2_39 = arith.constant 2 : index
    %c0_40 = arith.constant 0 : index
    %c0_41 = arith.constant 0 : index
    %34 = vector.load %arg2[%c0_37, %c0_38, %c2_39, %c0_40, %c0_41] : memref<4x3x3x128x128xbf16, #tpu.memory_space<vmem>>, vector<1x1x1x128x128xbf16>
    %35 = vector.shape_cast %34 : vector<1x1x1x128x128xbf16> to vector<128x128xbf16>
    %cst_42 = arith.constant dense<0.000000e+00> : vector<64x128xf32>
    %36 = tpu.matmul %33, %35, %cst_42 {dimension_numbers = #tpu.dot_dimension_numbers<[1], [0], [0], [1], [0, 0, 1, 1], [], []>} : vector<64x128xbf16>, vector<128x128xbf16>, vector<64x128xf32> -> vector<64x128xf32>
    %37 = arith.addf %27, %36 : vector<64x128xf32>
    %c1_43 = arith.constant 1 : index
    %c0_44 = arith.constant 0 : index
    %c0_45 = arith.constant 0 : index
    %38 = tpu.strided_load %arg7[%c1_43, %c0_44, %c0_45] {strides = array<i32: 1, 2, 1>} : memref<18x18x128xf32, #tpu.memory_space<vmem>>, vector<16x8x128xf32>
    %39 = vector.shape_cast %38 : vector<16x8x128xf32> to vector<8x2x8x128xf32>
    %40 = vector.extract_strided_slice %39 {offsets = [0, 0, 0, 0], sizes = [8, 1, 8, 128], strides = [1, 1, 1, 1]} : vector<8x2x8x128xf32> to vector<8x1x8x128xf32>
    %41 = vector.shape_cast %40 : vector<8x1x8x128xf32> to vector<8x8x128xf32>
    %42 = vector.shape_cast %41 : vector<8x8x128xf32> to vector<64x128xf32>
    %43 = arith.truncf %42 : vector<64x128xf32> to vector<64x128xbf16>
    %c0_46 = arith.constant 0 : index
    %c1_47 = arith.constant 1 : index
    %c0_48 = arith.constant 0 : index
    %c0_49 = arith.constant 0 : index
    %c0_50 = arith.constant 0 : index
    %44 = vector.load %arg2[%c0_46, %c1_47, %c0_48, %c0_49, %c0_50] : memref<4x3x3x128x128xbf16, #tpu.memory_space<vmem>>, vector<1x1x1x128x128xbf16>
    %45 = vector.shape_cast %44 : vector<1x1x1x128x128xbf16> to vector<128x128xbf16>
    %cst_51 = arith.constant dense<0.000000e+00> : vector<64x128xf32>
    %46 = tpu.matmul %43, %45, %cst_51 {dimension_numbers = #tpu.dot_dimension_numbers<[1], [0], [0], [1], [0, 0, 1, 1], [], []>} : vector<64x128xbf16>, vector<128x128xbf16>, vector<64x128xf32> -> vector<64x128xf32>
    %47 = arith.addf %37, %46 : vector<64x128xf32>
    %c1_52 = arith.constant 1 : index
    %c1_53 = arith.constant 1 : index
    %c0_54 = arith.constant 0 : index
    %48 = tpu.strided_load %arg7[%c1_52, %c1_53, %c0_54] {strides = array<i32: 1, 2, 1>} : memref<18x18x128xf32, #tpu.memory_space<vmem>>, vector<16x8x128xf32>
    %49 = vector.shape_cast %48 : vector<16x8x128xf32> to vector<8x2x8x128xf32>
    %50 = vector.extract_strided_slice %49 {offsets = [0, 0, 0, 0], sizes = [8, 1, 8, 128], strides = [1, 1, 1, 1]} : vector<8x2x8x128xf32> to vector<8x1x8x128xf32>
    %51 = vector.shape_cast %50 : vector<8x1x8x128xf32> to vector<8x8x128xf32>
    %52 = vector.shape_cast %51 : vector<8x8x128xf32> to vector<64x128xf32>
    %53 = arith.truncf %52 : vector<64x128xf32> to vector<64x128xbf16>
    %c0_55 = arith.constant 0 : index
    %c1_56 = arith.constant 1 : index
    %c1_57 = arith.constant 1 : index
    %c0_58 = arith.constant 0 : index
    %c0_59 = arith.constant 0 : index
    %54 = vector.load %arg2[%c0_55, %c1_56, %c1_57, %c0_58, %c0_59] : memref<4x3x3x128x128xbf16, #tpu.memory_space<vmem>>, vector<1x1x1x128x128xbf16>
    %55 = vector.shape_cast %54 : vector<1x1x1x128x128xbf16> to vector<128x128xbf16>
    %cst_60 = arith.constant dense<0.000000e+00> : vector<64x128xf32>
    %56 = tpu.matmul %53, %55, %cst_60 {dimension_numbers = #tpu.dot_dimension_numbers<[1], [0], [0], [1], [0, 0, 1, 1], [], []>} : vector<64x128xbf16>, vector<128x128xbf16>, vector<64x128xf32> -> vector<64x128xf32>
    %57 = arith.addf %47, %56 : vector<64x128xf32>
    %c1_61 = arith.constant 1 : index
    %c2_62 = arith.constant 2 : index
    %c0_63 = arith.constant 0 : index
    %58 = tpu.strided_load %arg7[%c1_61, %c2_62, %c0_63] {strides = array<i32: 1, 2, 1>} : memref<18x18x128xf32, #tpu.memory_space<vmem>>, vector<16x8x128xf32>
    %59 = vector.shape_cast %58 : vector<16x8x128xf32> to vector<8x2x8x128xf32>
    %60 = vector.extract_strided_slice %59 {offsets = [0, 0, 0, 0], sizes = [8, 1, 8, 128], strides = [1, 1, 1, 1]} : vector<8x2x8x128xf32> to vector<8x1x8x128xf32>
    %61 = vector.shape_cast %60 : vector<8x1x8x128xf32> to vector<8x8x128xf32>
    %62 = vector.shape_cast %61 : vector<8x8x128xf32> to vector<64x128xf32>
    %63 = arith.truncf %62 : vector<64x128xf32> to vector<64x128xbf16>
    %c0_64 = arith.constant 0 : index
    %c1_65 = arith.constant 1 : index
    %c2_66 = arith.constant 2 : index
    %c0_67 = arith.constant 0 : index
    %c0_68 = arith.constant 0 : index
    %64 = vector.load %arg2[%c0_64, %c1_65, %c2_66, %c0_67, %c0_68] : memref<4x3x3x128x128xbf16, #tpu.memory_space<vmem>>, vector<1x1x1x128x128xbf16>
    %65 = vector.shape_cast %64 : vector<1x1x1x128x128xbf16> to vector<128x128xbf16>
    %cst_69 = arith.constant dense<0.000000e+00> : vector<64x128xf32>
    %66 = tpu.matmul %63, %65, %cst_69 {dimension_numbers = #tpu.dot_dimension_numbers<[1], [0], [0], [1], [0, 0, 1, 1], [], []>} : vector<64x128xbf16>, vector<128x128xbf16>, vector<64x128xf32> -> vector<64x128xf32>
    %67 = arith.addf %57, %66 : vector<64x128xf32>
    %c2_70 = arith.constant 2 : index
    %c0_71 = arith.constant 0 : index
    %c0_72 = arith.constant 0 : index
    %68 = tpu.strided_load %arg7[%c2_70, %c0_71, %c0_72] {strides = array<i32: 1, 2, 1>} : memref<18x18x128xf32, #tpu.memory_space<vmem>>, vector<16x8x128xf32>
    %69 = vector.shape_cast %68 : vector<16x8x128xf32> to vector<8x2x8x128xf32>
    %70 = vector.extract_strided_slice %69 {offsets = [0, 0, 0, 0], sizes = [8, 1, 8, 128], strides = [1, 1, 1, 1]} : vector<8x2x8x128xf32> to vector<8x1x8x128xf32>
    %71 = vector.shape_cast %70 : vector<8x1x8x128xf32> to vector<8x8x128xf32>
    %72 = vector.shape_cast %71 : vector<8x8x128xf32> to vector<64x128xf32>
    %73 = arith.truncf %72 : vector<64x128xf32> to vector<64x128xbf16>
    %c0_73 = arith.constant 0 : index
    %c2_74 = arith.constant 2 : index
    %c0_75 = arith.constant 0 : index
    %c0_76 = arith.constant 0 : index
    %c0_77 = arith.constant 0 : index
    %74 = vector.load %arg2[%c0_73, %c2_74, %c0_75, %c0_76, %c0_77] : memref<4x3x3x128x128xbf16, #tpu.memory_space<vmem>>, vector<1x1x1x128x128xbf16>
    %75 = vector.shape_cast %74 : vector<1x1x1x128x128xbf16> to vector<128x128xbf16>
    %cst_78 = arith.constant dense<0.000000e+00> : vector<64x128xf32>
    %76 = tpu.matmul %73, %75, %cst_78 {dimension_numbers = #tpu.dot_dimension_numbers<[1], [0], [0], [1], [0, 0, 1, 1], [], []>} : vector<64x128xbf16>, vector<128x128xbf16>, vector<64x128xf32> -> vector<64x128xf32>
    %77 = arith.addf %67, %76 : vector<64x128xf32>
    %c2_79 = arith.constant 2 : index
    %c1_80 = arith.constant 1 : index
    %c0_81 = arith.constant 0 : index
    %78 = tpu.strided_load %arg7[%c2_79, %c1_80, %c0_81] {strides = array<i32: 1, 2, 1>} : memref<18x18x128xf32, #tpu.memory_space<vmem>>, vector<16x8x128xf32>
    %79 = vector.shape_cast %78 : vector<16x8x128xf32> to vector<8x2x8x128xf32>
    %80 = vector.extract_strided_slice %79 {offsets = [0, 0, 0, 0], sizes = [8, 1, 8, 128], strides = [1, 1, 1, 1]} : vector<8x2x8x128xf32> to vector<8x1x8x128xf32>
    %81 = vector.shape_cast %80 : vector<8x1x8x128xf32> to vector<8x8x128xf32>
    %82 = vector.shape_cast %81 : vector<8x8x128xf32> to vector<64x128xf32>
    %83 = arith.truncf %82 : vector<64x128xf32> to vector<64x128xbf16>
    %c0_82 = arith.constant 0 : index
    %c2_83 = arith.constant 2 : index
    %c1_84 = arith.constant 1 : index
    %c0_85 = arith.constant 0 : index
    %c0_86 = arith.constant 0 : index
    %84 = vector.load %arg2[%c0_82, %c2_83, %c1_84, %c0_85, %c0_86] : memref<4x3x3x128x128xbf16, #tpu.memory_space<vmem>>, vector<1x1x1x128x128xbf16>
    %85 = vector.shape_cast %84 : vector<1x1x1x128x128xbf16> to vector<128x128xbf16>
    %cst_87 = arith.constant dense<0.000000e+00> : vector<64x128xf32>
    %86 = tpu.matmul %83, %85, %cst_87 {dimension_numbers = #tpu.dot_dimension_numbers<[1], [0], [0], [1], [0, 0, 1, 1], [], []>} : vector<64x128xbf16>, vector<128x128xbf16>, vector<64x128xf32> -> vector<64x128xf32>
    %87 = arith.addf %77, %86 : vector<64x128xf32>
    %c2_88 = arith.constant 2 : index
    %c2_89 = arith.constant 2 : index
    %c0_90 = arith.constant 0 : index
    %88 = tpu.strided_load %arg7[%c2_88, %c2_89, %c0_90] {strides = array<i32: 1, 2, 1>} : memref<18x18x128xf32, #tpu.memory_space<vmem>>, vector<16x8x128xf32>
    %89 = vector.shape_cast %88 : vector<16x8x128xf32> to vector<8x2x8x128xf32>
    %90 = vector.extract_strided_slice %89 {offsets = [0, 0, 0, 0], sizes = [8, 1, 8, 128], strides = [1, 1, 1, 1]} : vector<8x2x8x128xf32> to vector<8x1x8x128xf32>
    %91 = vector.shape_cast %90 : vector<8x1x8x128xf32> to vector<8x8x128xf32>
    %92 = vector.shape_cast %91 : vector<8x8x128xf32> to vector<64x128xf32>
    %93 = arith.truncf %92 : vector<64x128xf32> to vector<64x128xbf16>
    %c0_91 = arith.constant 0 : index
    %c2_92 = arith.constant 2 : index
    %c2_93 = arith.constant 2 : index
    %c0_94 = arith.constant 0 : index
    %c0_95 = arith.constant 0 : index
    %94 = vector.load %arg2[%c0_91, %c2_92, %c2_93, %c0_94, %c0_95] : memref<4x3x3x128x128xbf16, #tpu.memory_space<vmem>>, vector<1x1x1x128x128xbf16>
    %95 = vector.shape_cast %94 : vector<1x1x1x128x128xbf16> to vector<128x128xbf16>
    %cst_96 = arith.constant dense<0.000000e+00> : vector<64x128xf32>
    %96 = tpu.matmul %93, %95, %cst_96 {dimension_numbers = #tpu.dot_dimension_numbers<[1], [0], [0], [1], [0, 0, 1, 1], [], []>} : vector<64x128xbf16>, vector<128x128xbf16>, vector<64x128xf32> -> vector<64x128xf32>
    %97 = arith.addf %87, %96 : vector<64x128xf32>
    %c0_97 = arith.constant 0 : index
    %c0_98 = arith.constant 0 : index
    %c0_99 = arith.constant 0 : index
    %98 = vector.load %arg3[%c0_97, %c0_98, %c0_99] : memref<4x3x128xf32, #tpu.memory_space<vmem>>, vector<1x1x128xf32>
    %99 = vector.shape_cast %98 : vector<1x1x128xf32> to vector<1x128xf32>
    %100 = vector.broadcast %99 : vector<1x128xf32> to vector<64x128xf32>
    %101 = arith.addf %97, %100 : vector<64x128xf32>
    %cst_100 = arith.constant dense<0.000000e+00> : vector<64xf32>
    %102 = vector.multi_reduction <add>, %101, %cst_100 [1] : vector<64x128xf32> to vector<64xf32>
    %103 = vector.shape_cast %102 : vector<64xf32> to vector<64x1xf32>
    %cst_101 = arith.constant 2.500000e-01 : f32
    %104 = vector.broadcast %cst_101 : f32 to vector<64x1xf32>
    %105 = arith.mulf %103, %104 : vector<64x1xf32>
    %106 = arith.mulf %101, %101 : vector<64x128xf32>
    %cst_102 = arith.constant dense<0.000000e+00> : vector<64xf32>
    %107 = vector.multi_reduction <add>, %106, %cst_102 [1] : vector<64x128xf32> to vector<64xf32>
    %108 = vector.shape_cast %107 : vector<64xf32> to vector<64x1xf32>
    %cst_103 = arith.constant 2.500000e-01 : f32
    %109 = vector.broadcast %cst_103 : f32 to vector<64x1xf32>
    %110 = arith.mulf %108, %109 : vector<64x1xf32>
    %111 = vector.broadcast %105 : vector<64x1xf32> to vector<64x128xf32>
    %112 = arith.subf %101, %111 : vector<64x128xf32>
    %113 = arith.mulf %105, %105 : vector<64x1xf32>
    %114 = arith.subf %110, %113 : vector<64x1xf32>
    %cst_104 = arith.constant 9.99999997E-7 : f32
    %115 = vector.broadcast %cst_104 : f32 to vector<64x1xf32>
    %116 = arith.addf %114, %115 : vector<64x1xf32>
    %117 = math.rsqrt %116 : vector<64x1xf32>
    %118 = vector.broadcast %117 : vector<64x1xf32> to vector<64x128xf32>
    %119 = arith.mulf %112, %118 : vector<64x128xf32>
    %c0_105 = arith.constant 0 : index
    %c1_106 = arith.constant 1 : index
    %c0_107 = arith.constant 0 : index
    %120 = vector.load %arg3[%c0_105, %c1_106, %c0_107] : memref<4x3x128xf32, #tpu.memory_space<vmem>>, vector<1x1x128xf32>
    %121 = vector.shape_cast %120 : vector<1x1x128xf32> to vector<1x128xf32>
    %122 = vector.broadcast %121 : vector<1x128xf32> to vector<64x128xf32>
    %123 = arith.mulf %122, %119 : vector<64x128xf32>
    %c0_108 = arith.constant 0 : index
    %c2_109 = arith.constant 2 : index
    %c0_110 = arith.constant 0 : index
    %124 = vector.load %arg3[%c0_108, %c2_109, %c0_110] : memref<4x3x128xf32, #tpu.memory_space<vmem>>, vector<1x1x128xf32>
    %125 = vector.shape_cast %124 : vector<1x1x128xf32> to vector<1x128xf32>
    %126 = vector.broadcast %125 : vector<1x128xf32> to vector<64x128xf32>
    %127 = arith.addf %123, %126 : vector<64x128xf32>
    %cst_111 = arith.constant 5.000000e-01 : f32
    %128 = vector.broadcast %cst_111 : f32 to vector<64x128xf32>
    %129 = arith.mulf %128, %127 : vector<64x128xf32>
    %cst_112 = arith.constant 0.707106769 : f32
    %130 = vector.broadcast %cst_112 : f32 to vector<64x128xf32>
    %131 = arith.mulf %127, %130 : vector<64x128xf32>
    %132 = math.absf %131 : vector<64x128xf32>
    %cst_113 = arith.constant 0.327591091 : f32
    %133 = vector.broadcast %cst_113 : f32 to vector<64x128xf32>
    %134 = arith.mulf %133, %132 : vector<64x128xf32>
    %cst_114 = arith.constant 1.000000e+00 : f32
    %135 = vector.broadcast %cst_114 : f32 to vector<64x128xf32>
    %136 = arith.addf %135, %134 : vector<64x128xf32>
    %cst_115 = arith.constant 1.000000e+00 : f32
    %137 = vector.broadcast %cst_115 : f32 to vector<64x128xf32>
    %138 = arith.divf %137, %136 : vector<64x128xf32>
    %cst_116 = arith.constant 1.06140542 : f32
    %139 = vector.broadcast %cst_116 : f32 to vector<64x128xf32>
    %140 = arith.mulf %139, %138 : vector<64x128xf32>
    %cst_117 = arith.constant -1.45315206 : f32
    %141 = vector.broadcast %cst_117 : f32 to vector<64x128xf32>
    %142 = arith.addf %140, %141 : vector<64x128xf32>
    %143 = arith.mulf %142, %138 : vector<64x128xf32>
    %cst_118 = arith.constant 1.42141378 : f32
    %144 = vector.broadcast %cst_118 : f32 to vector<64x128xf32>
    %145 = arith.addf %143, %144 : vector<64x128xf32>
    %146 = arith.mulf %145, %138 : vector<64x128xf32>
    %cst_119 = arith.constant -0.284496725 : f32
    %147 = vector.broadcast %cst_119 : f32 to vector<64x128xf32>
    %148 = arith.addf %146, %147 : vector<64x128xf32>
    %149 = arith.mulf %148, %138 : vector<64x128xf32>
    %cst_120 = arith.constant 0.254829586 : f32
    %150 = vector.broadcast %cst_120 : f32 to vector<64x128xf32>
    %151 = arith.addf %149, %150 : vector<64x128xf32>
    %152 = arith.mulf %151, %138 : vector<64x128xf32>
    %cst_121 = arith.constant 0.000000e+00 : f32
    %153 = vector.broadcast %cst_121 : f32 to vector<64x128xf32>
    %154 = arith.subf %153, %132 : vector<64x128xf32>
    %155 = arith.mulf %154, %132 : vector<64x128xf32>
    %156 = math.exp %155 : vector<64x128xf32>
    %157 = arith.mulf %152, %156 : vector<64x128xf32>
    %cst_122 = arith.constant 1.000000e+00 : f32
    %158 = vector.broadcast %cst_122 : f32 to vector<64x128xf32>
    %159 = arith.subf %158, %157 : vector<64x128xf32>
    %cst_123 = arith.constant 0.000000e+00 : f32
    %160 = vector.broadcast %cst_123 : f32 to vector<64x128xf32>
    %161 = arith.cmpf oge, %131, %160 : vector<64x128xf32>
    %cst_124 = arith.constant 0.000000e+00 : f32
    %162 = vector.broadcast %cst_124 : f32 to vector<64x128xf32>
    %163 = arith.subf %162, %159 : vector<64x128xf32>
    %164 = arith.select %161, %159, %163 : vector<64x128xi1>, vector<64x128xf32>
    %cst_125 = arith.constant 1.000000e+00 : f32
    %165 = vector.broadcast %cst_125 : f32 to vector<64x128xf32>
    %166 = arith.addf %165, %164 : vector<64x128xf32>
    %167 = arith.mulf %129, %166 : vector<64x128xf32>
    %168 = vector.shape_cast %167 : vector<64x128xf32> to vector<8x8x128xf32>
    %cst_126 = arith.constant 0.000000e+00 : f32
    %169 = vector.broadcast %cst_126 : f32 to vector<1x10x128xf32>
    %c0_127 = arith.constant 0 : index
    %c0_128 = arith.constant 0 : index
    %c0_129 = arith.constant 0 : index
    %170 = vector.load %arg7[%c0_127, %c0_128, %c0_129] : memref<18x18x128xf32, #tpu.memory_space<vmem>>, vector<1x10x128xf32>
    tpu.vector_store %arg7[%c0_127, %c0_128, %c0_129], %169 {strides = array<i32>} : memref<18x18x128xf32, #tpu.memory_space<vmem>>, vector<1x10x128xf32>,
    %c9 = arith.constant 9 : index
    %c0_130 = arith.constant 0 : index
    %c0_131 = arith.constant 0 : index
    %171 = vector.load %arg7[%c9, %c0_130, %c0_131] : memref<18x18x128xf32, #tpu.memory_space<vmem>>, vector<1x10x128xf32>
    tpu.vector_store %arg7[%c9, %c0_130, %c0_131], %169 {strides = array<i32>} : memref<18x18x128xf32, #tpu.memory_space<vmem>>, vector<1x10x128xf32>,
    %cst_132 = arith.constant 0.000000e+00 : f32
    %172 = vector.broadcast %cst_132 : f32 to vector<8x1x128xf32>
    %c1_133 = arith.constant 1 : index
    %c0_134 = arith.constant 0 : index
    %c0_135 = arith.constant 0 : index
    %173 = vector.load %arg7[%c1_133, %c0_134, %c0_135] : memref<18x18x128xf32, #tpu.memory_space<vmem>>, vector<8x1x128xf32>
    tpu.vector_store %arg7[%c1_133, %c0_134, %c0_135], %172 {strides = array<i32>} : memref<18x18x128xf32, #tpu.memory_space<vmem>>, vector<8x1x128xf32>,
    %c1_136 = arith.constant 1 : index
    %c9_137 = arith.constant 9 : index
    %c0_138 = arith.constant 0 : index
    %174 = vector.load %arg7[%c1_136, %c9_137, %c0_138] : memref<18x18x128xf32, #tpu.memory_space<vmem>>, vector<8x1x128xf32>
    tpu.vector_store %arg7[%c1_136, %c9_137, %c0_138], %172 {strides = array<i32>} : memref<18x18x128xf32, #tpu.memory_space<vmem>>, vector<8x1x128xf32>,
    %c1_139 = arith.constant 1 : index
    %c1_140 = arith.constant 1 : index
    %c0_141 = arith.constant 0 : index
    %175 = vector.load %arg7[%c1_139, %c1_140, %c0_141] : memref<18x18x128xf32, #tpu.memory_space<vmem>>, vector<8x8x128xf32>
    tpu.vector_store %arg7[%c1_139, %c1_140, %c0_141], %168 {strides = array<i32>} : memref<18x18x128xf32, #tpu.memory_space<vmem>>, vector<8x8x128xf32>,
    %c0_142 = arith.constant 0 : index
    %c0_143 = arith.constant 0 : index
    %c0_144 = arith.constant 0 : index
    %176 = tpu.strided_load %arg7[%c0_142, %c0_143, %c0_144] {strides = array<i32: 1, 2, 1>} : memref<18x18x128xf32, #tpu.memory_space<vmem>>, vector<8x8x128xf32>
    %177 = vector.shape_cast %176 : vector<8x8x128xf32> to vector<4x2x8x128xf32>
    %178 = vector.extract_strided_slice %177 {offsets = [0, 0, 0, 0], sizes = [4, 1, 8, 128], strides = [1, 1, 1, 1]} : vector<4x2x8x128xf32> to vector<4x1x8x128xf32>
    %179 = vector.shape_cast %178 : vector<4x1x8x128xf32> to vector<4x8x128xf32>
    %180 = vector.shape_cast %179 : vector<4x8x128xf32> to vector<32x128xf32>
    %181 = arith.truncf %180 : vector<32x128xf32> to vector<32x128xbf16>
    %c1_145 = arith.constant 1 : index
    %c0_146 = arith.constant 0 : index
    %c0_147 = arith.constant 0 : index
    %c0_148 = arith.constant 0 : index
    %c0_149 = arith.constant 0 : index
    %182 = vector.load %arg2[%c1_145, %c0_146, %c0_147, %c0_148, %c0_149] : memref<4x3x3x128x128xbf16, #tpu.memory_space<vmem>>, vector<1x1x1x128x128xbf16>
    %183 = vector.shape_cast %182 : vector<1x1x1x128x128xbf16> to vector<128x128xbf16>
    %cst_150 = arith.constant dense<0.000000e+00> : vector<32x128xf32>
    %184 = tpu.matmul %181, %183, %cst_150 {dimension_numbers = #tpu.dot_dimension_numbers<[1], [0], [0], [1], [0, 0, 1, 1], [], []>} : vector<32x128xbf16>, vector<128x128xbf16>, vector<32x128xf32> -> vector<32x128xf32>
    %c0_151 = arith.constant 0 : index
    %c1_152 = arith.constant 1 : index
    %c0_153 = arith.constant 0 : index
    %185 = tpu.strided_load %arg7[%c0_151, %c1_152, %c0_153] {strides = array<i32: 1, 2, 1>} : memref<18x18x128xf32, #tpu.memory_space<vmem>>, vector<8x8x128xf32>
    %186 = vector.shape_cast %185 : vector<8x8x128xf32> to vector<4x2x8x128xf32>
    %187 = vector.extract_strided_slice %186 {offsets = [0, 0, 0, 0], sizes = [4, 1, 8, 128], strides = [1, 1, 1, 1]} : vector<4x2x8x128xf32> to vector<4x1x8x128xf32>
    %188 = vector.shape_cast %187 : vector<4x1x8x128xf32> to vector<4x8x128xf32>
    %189 = vector.shape_cast %188 : vector<4x8x128xf32> to vector<32x128xf32>
    %190 = arith.truncf %189 : vector<32x128xf32> to vector<32x128xbf16>
    %c1_154 = arith.constant 1 : index
    %c0_155 = arith.constant 0 : index
    %c1_156 = arith.constant 1 : index
    %c0_157 = arith.constant 0 : index
    %c0_158 = arith.constant 0 : index
    %191 = vector.load %arg2[%c1_154, %c0_155, %c1_156, %c0_157, %c0_158] : memref<4x3x3x128x128xbf16, #tpu.memory_space<vmem>>, vector<1x1x1x128x128xbf16>
    %192 = vector.shape_cast %191 : vector<1x1x1x128x128xbf16> to vector<128x128xbf16>
    %cst_159 = arith.constant dense<0.000000e+00> : vector<32x128xf32>
    %193 = tpu.matmul %190, %192, %cst_159 {dimension_numbers = #tpu.dot_dimension_numbers<[1], [0], [0], [1], [0, 0, 1, 1], [], []>} : vector<32x128xbf16>, vector<128x128xbf16>, vector<32x128xf32> -> vector<32x128xf32>
    %194 = arith.addf %184, %193 : vector<32x128xf32>
    %c0_160 = arith.constant 0 : index
    %c2_161 = arith.constant 2 : index
    %c0_162 = arith.constant 0 : index
    %195 = tpu.strided_load %arg7[%c0_160, %c2_161, %c0_162] {strides = array<i32: 1, 2, 1>} : memref<18x18x128xf32, #tpu.memory_space<vmem>>, vector<8x8x128xf32>
    %196 = vector.shape_cast %195 : vector<8x8x128xf32> to vector<4x2x8x128xf32>
    %197 = vector.extract_strided_slice %196 {offsets = [0, 0, 0, 0], sizes = [4, 1, 8, 128], strides = [1, 1, 1, 1]} : vector<4x2x8x128xf32> to vector<4x1x8x128xf32>
    %198 = vector.shape_cast %197 : vector<4x1x8x128xf32> to vector<4x8x128xf32>
    %199 = vector.shape_cast %198 : vector<4x8x128xf32> to vector<32x128xf32>
    %200 = arith.truncf %199 : vector<32x128xf32> to vector<32x128xbf16>
    %c1_163 = arith.constant 1 : index
    %c0_164 = arith.constant 0 : index
    %c2_165 = arith.constant 2 : index
    %c0_166 = arith.constant 0 : index
    %c0_167 = arith.constant 0 : index
    %201 = vector.load %arg2[%c1_163, %c0_164, %c2_165, %c0_166, %c0_167] : memref<4x3x3x128x128xbf16, #tpu.memory_space<vmem>>, vector<1x1x1x128x128xbf16>
    %202 = vector.shape_cast %201 : vector<1x1x1x128x128xbf16> to vector<128x128xbf16>
    %cst_168 = arith.constant dense<0.000000e+00> : vector<32x128xf32>
    %203 = tpu.matmul %200, %202, %cst_168 {dimension_numbers = #tpu.dot_dimension_numbers<[1], [0], [0], [1], [0, 0, 1, 1], [], []>} : vector<32x128xbf16>, vector<128x128xbf16>, vector<32x128xf32> -> vector<32x128xf32>
    %204 = arith.addf %194, %203 : vector<32x128xf32>
    %c1_169 = arith.constant 1 : index
    %c0_170 = arith.constant 0 : index
    %c0_171 = arith.constant 0 : index
    %205 = tpu.strided_load %arg7[%c1_169, %c0_170, %c0_171] {strides = array<i32: 1, 2, 1>} : memref<18x18x128xf32, #tpu.memory_space<vmem>>, vector<8x8x128xf32>
    %206 = vector.shape_cast %205 : vector<8x8x128xf32> to vector<4x2x8x128xf32>
    %207 = vector.extract_strided_slice %206 {offsets = [0, 0, 0, 0], sizes = [4, 1, 8, 128], strides = [1, 1, 1, 1]} : vector<4x2x8x128xf32> to vector<4x1x8x128xf32>
    %208 = vector.shape_cast %207 : vector<4x1x8x128xf32> to vector<4x8x128xf32>
    %209 = vector.shape_cast %208 : vector<4x8x128xf32> to vector<32x128xf32>
    %210 = arith.truncf %209 : vector<32x128xf32> to vector<32x128xbf16>
    %c1_172 = arith.constant 1 : index
    %c1_173 = arith.constant 1 : index
    %c0_174 = arith.constant 0 : index
    %c0_175 = arith.constant 0 : index
    %c0_176 = arith.constant 0 : index
    %211 = vector.load %arg2[%c1_172, %c1_173, %c0_174, %c0_175, %c0_176] : memref<4x3x3x128x128xbf16, #tpu.memory_space<vmem>>, vector<1x1x1x128x128xbf16>
    %212 = vector.shape_cast %211 : vector<1x1x1x128x128xbf16> to vector<128x128xbf16>
    %cst_177 = arith.constant dense<0.000000e+00> : vector<32x128xf32>
    %213 = tpu.matmul %210, %212, %cst_177 {dimension_numbers = #tpu.dot_dimension_numbers<[1], [0], [0], [1], [0, 0, 1, 1], [], []>} : vector<32x128xbf16>, vector<128x128xbf16>, vector<32x128xf32> -> vector<32x128xf32>
    %214 = arith.addf %204, %213 : vector<32x128xf32>
    %c1_178 = arith.constant 1 : index
    %c1_179 = arith.constant 1 : index
    %c0_180 = arith.constant 0 : index
    %215 = tpu.strided_load %arg7[%c1_178, %c1_179, %c0_180] {strides = array<i32: 1, 2, 1>} : memref<18x18x128xf32, #tpu.memory_space<vmem>>, vector<8x8x128xf32>
    %216 = vector.shape_cast %215 : vector<8x8x128xf32> to vector<4x2x8x128xf32>
    %217 = vector.extract_strided_slice %216 {offsets = [0, 0, 0, 0], sizes = [4, 1, 8, 128], strides = [1, 1, 1, 1]} : vector<4x2x8x128xf32> to vector<4x1x8x128xf32>
    %218 = vector.shape_cast %217 : vector<4x1x8x128xf32> to vector<4x8x128xf32>
    %219 = vector.shape_cast %218 : vector<4x8x128xf32> to vector<32x128xf32>
    %220 = arith.truncf %219 : vector<32x128xf32> to vector<32x128xbf16>
    %c1_181 = arith.constant 1 : index
    %c1_182 = arith.constant 1 : index
    %c1_183 = arith.constant 1 : index
    %c0_184 = arith.constant 0 : index
    %c0_185 = arith.constant 0 : index
    %221 = vector.load %arg2[%c1_181, %c1_182, %c1_183, %c0_184, %c0_185] : memref<4x3x3x128x128xbf16, #tpu.memory_space<vmem>>, vector<1x1x1x128x128xbf16>
    %222 = vector.shape_cast %221 : vector<1x1x1x128x128xbf16> to vector<128x128xbf16>
    %cst_186 = arith.constant dense<0.000000e+00> : vector<32x128xf32>
    %223 = tpu.matmul %220, %222, %cst_186 {dimension_numbers = #tpu.dot_dimension_numbers<[1], [0], [0], [1], [0, 0, 1, 1], [], []>} : vector<32x128xbf16>, vector<128x128xbf16>, vector<32x128xf32> -> vector<32x128xf32>
    %224 = arith.addf %214, %223 : vector<32x128xf32>
    %c1_187 = arith.constant 1 : index
    %c2_188 = arith.constant 2 : index
    %c0_189 = arith.constant 0 : index
    %225 = tpu.strided_load %arg7[%c1_187, %c2_188, %c0_189] {strides = array<i32: 1, 2, 1>} : memref<18x18x128xf32, #tpu.memory_space<vmem>>, vector<8x8x128xf32>
    %226 = vector.shape_cast %225 : vector<8x8x128xf32> to vector<4x2x8x128xf32>
    %227 = vector.extract_strided_slice %226 {offsets = [0, 0, 0, 0], sizes = [4, 1, 8, 128], strides = [1, 1, 1, 1]} : vector<4x2x8x128xf32> to vector<4x1x8x128xf32>
    %228 = vector.shape_cast %227 : vector<4x1x8x128xf32> to vector<4x8x128xf32>
    %229 = vector.shape_cast %228 : vector<4x8x128xf32> to vector<32x128xf32>
    %230 = arith.truncf %229 : vector<32x128xf32> to vector<32x128xbf16>
    %c1_190 = arith.constant 1 : index
    %c1_191 = arith.constant 1 : index
    %c2_192 = arith.constant 2 : index
    %c0_193 = arith.constant 0 : index
    %c0_194 = arith.constant 0 : index
    %231 = vector.load %arg2[%c1_190, %c1_191, %c2_192, %c0_193, %c0_194] : memref<4x3x3x128x128xbf16, #tpu.memory_space<vmem>>, vector<1x1x1x128x128xbf16>
    %232 = vector.shape_cast %231 : vector<1x1x1x128x128xbf16> to vector<128x128xbf16>
    %cst_195 = arith.constant dense<0.000000e+00> : vector<32x128xf32>
    %233 = tpu.matmul %230, %232, %cst_195 {dimension_numbers = #tpu.dot_dimension_numbers<[1], [0], [0], [1], [0, 0, 1, 1], [], []>} : vector<32x128xbf16>, vector<128x128xbf16>, vector<32x128xf32> -> vector<32x128xf32>
    %234 = arith.addf %224, %233 : vector<32x128xf32>
    %c2_196 = arith.constant 2 : index
    %c0_197 = arith.constant 0 : index
    %c0_198 = arith.constant 0 : index
    %235 = tpu.strided_load %arg7[%c2_196, %c0_197, %c0_198] {strides = array<i32: 1, 2, 1>} : memref<18x18x128xf32, #tpu.memory_space<vmem>>, vector<8x8x128xf32>
    %236 = vector.shape_cast %235 : vector<8x8x128xf32> to vector<4x2x8x128xf32>
    %237 = vector.extract_strided_slice %236 {offsets = [0, 0, 0, 0], sizes = [4, 1, 8, 128], strides = [1, 1, 1, 1]} : vector<4x2x8x128xf32> to vector<4x1x8x128xf32>
    %238 = vector.shape_cast %237 : vector<4x1x8x128xf32> to vector<4x8x128xf32>
    %239 = vector.shape_cast %238 : vector<4x8x128xf32> to vector<32x128xf32>
    %240 = arith.truncf %239 : vector<32x128xf32> to vector<32x128xbf16>
    %c1_199 = arith.constant 1 : index
    %c2_200 = arith.constant 2 : index
    %c0_201 = arith.constant 0 : index
    %c0_202 = arith.constant 0 : index
    %c0_203 = arith.constant 0 : index
    %241 = vector.load %arg2[%c1_199, %c2_200, %c0_201, %c0_202, %c0_203] : memref<4x3x3x128x128xbf16, #tpu.memory_space<vmem>>, vector<1x1x1x128x128xbf16>
    %242 = vector.shape_cast %241 : vector<1x1x1x128x128xbf16> to vector<128x128xbf16>
    %cst_204 = arith.constant dense<0.000000e+00> : vector<32x128xf32>
    %243 = tpu.matmul %240, %242, %cst_204 {dimension_numbers = #tpu.dot_dimension_numbers<[1], [0], [0], [1], [0, 0, 1, 1], [], []>} : vector<32x128xbf16>, vector<128x128xbf16>, vector<32x128xf32> -> vector<32x128xf32>
    %244 = arith.addf %234, %243 : vector<32x128xf32>
    %c2_205 = arith.constant 2 : index
    %c1_206 = arith.constant 1 : index
    %c0_207 = arith.constant 0 : index
    %245 = tpu.strided_load %arg7[%c2_205, %c1_206, %c0_207] {strides = array<i32: 1, 2, 1>} : memref<18x18x128xf32, #tpu.memory_space<vmem>>, vector<8x8x128xf32>
    %246 = vector.shape_cast %245 : vector<8x8x128xf32> to vector<4x2x8x128xf32>
    %247 = vector.extract_strided_slice %246 {offsets = [0, 0, 0, 0], sizes = [4, 1, 8, 128], strides = [1, 1, 1, 1]} : vector<4x2x8x128xf32> to vector<4x1x8x128xf32>
    %248 = vector.shape_cast %247 : vector<4x1x8x128xf32> to vector<4x8x128xf32>
    %249 = vector.shape_cast %248 : vector<4x8x128xf32> to vector<32x128xf32>
    %250 = arith.truncf %249 : vector<32x128xf32> to vector<32x128xbf16>
    %c1_208 = arith.constant 1 : index
    %c2_209 = arith.constant 2 : index
    %c1_210 = arith.constant 1 : index
    %c0_211 = arith.constant 0 : index
    %c0_212 = arith.constant 0 : index
    %251 = vector.load %arg2[%c1_208, %c2_209, %c1_210, %c0_211, %c0_212] : memref<4x3x3x128x128xbf16, #tpu.memory_space<vmem>>, vector<1x1x1x128x128xbf16>
    %252 = vector.shape_cast %251 : vector<1x1x1x128x128xbf16> to vector<128x128xbf16>
    %cst_213 = arith.constant dense<0.000000e+00> : vector<32x128xf32>
    %253 = tpu.matmul %250, %252, %cst_213 {dimension_numbers = #tpu.dot_dimension_numbers<[1], [0], [0], [1], [0, 0, 1, 1], [], []>} : vector<32x128xbf16>, vector<128x128xbf16>, vector<32x128xf32> -> vector<32x128xf32>
    %254 = arith.addf %244, %253 : vector<32x128xf32>
    %c2_214 = arith.constant 2 : index
    %c2_215 = arith.constant 2 : index
    %c0_216 = arith.constant 0 : index
    %255 = tpu.strided_load %arg7[%c2_214, %c2_215, %c0_216] {strides = array<i32: 1, 2, 1>} : memref<18x18x128xf32, #tpu.memory_space<vmem>>, vector<8x8x128xf32>
    %256 = vector.shape_cast %255 : vector<8x8x128xf32> to vector<4x2x8x128xf32>
    %257 = vector.extract_strided_slice %256 {offsets = [0, 0, 0, 0], sizes = [4, 1, 8, 128], strides = [1, 1, 1, 1]} : vector<4x2x8x128xf32> to vector<4x1x8x128xf32>
    %258 = vector.shape_cast %257 : vector<4x1x8x128xf32> to vector<4x8x128xf32>
    %259 = vector.shape_cast %258 : vector<4x8x128xf32> to vector<32x128xf32>
    %260 = arith.truncf %259 : vector<32x128xf32> to vector<32x128xbf16>
    %c1_217 = arith.constant 1 : index
    %c2_218 = arith.constant 2 : index
    %c2_219 = arith.constant 2 : index
    %c0_220 = arith.constant 0 : index
    %c0_221 = arith.constant 0 : index
    %261 = vector.load %arg2[%c1_217, %c2_218, %c2_219, %c0_220, %c0_221] : memref<4x3x3x128x128xbf16, #tpu.memory_space<vmem>>, vector<1x1x1x128x128xbf16>
    %262 = vector.shape_cast %261 : vector<1x1x1x128x128xbf16> to vector<128x128xbf16>
    %cst_222 = arith.constant dense<0.000000e+00> : vector<32x128xf32>
    %263 = tpu.matmul %260, %262, %cst_222 {dimension_numbers = #tpu.dot_dimension_numbers<[1], [0], [0], [1], [0, 0, 1, 1], [], []>} : vector<32x128xbf16>, vector<128x128xbf16>, vector<32x128xf32> -> vector<32x128xf32>
    %264 = arith.addf %254, %263 : vector<32x128xf32>
    %c1_223 = arith.constant 1 : index
    %c0_224 = arith.constant 0 : index
    %c0_225 = arith.constant 0 : index
    %265 = vector.load %arg3[%c1_223, %c0_224, %c0_225] : memref<4x3x128xf32, #tpu.memory_space<vmem>>, vector<1x1x128xf32>
    %266 = vector.shape_cast %265 : vector<1x1x128xf32> to vector<1x128xf32>
    %267 = vector.broadcast %266 : vector<1x128xf32> to vector<32x128xf32>
    %268 = arith.addf %264, %267 : vector<32x128xf32>
    %cst_226 = arith.constant dense<0.000000e+00> : vector<32xf32>
    %269 = vector.multi_reduction <add>, %268, %cst_226 [1] : vector<32x128xf32> to vector<32xf32>
    %270 = vector.shape_cast %269 : vector<32xf32> to vector<32x1xf32>
    %cst_227 = arith.constant 1.250000e-01 : f32
    %271 = vector.broadcast %cst_227 : f32 to vector<32x1xf32>
    %272 = arith.mulf %270, %271 : vector<32x1xf32>
    %273 = arith.mulf %268, %268 : vector<32x128xf32>
    %cst_228 = arith.constant dense<0.000000e+00> : vector<32xf32>
    %274 = vector.multi_reduction <add>, %273, %cst_228 [1] : vector<32x128xf32> to vector<32xf32>
    %275 = vector.shape_cast %274 : vector<32xf32> to vector<32x1xf32>
    %cst_229 = arith.constant 1.250000e-01 : f32
    %276 = vector.broadcast %cst_229 : f32 to vector<32x1xf32>
    %277 = arith.mulf %275, %276 : vector<32x1xf32>
    %278 = vector.broadcast %272 : vector<32x1xf32> to vector<32x128xf32>
    %279 = arith.subf %268, %278 : vector<32x128xf32>
    %280 = arith.mulf %272, %272 : vector<32x1xf32>
    %281 = arith.subf %277, %280 : vector<32x1xf32>
    %cst_230 = arith.constant 9.99999997E-7 : f32
    %282 = vector.broadcast %cst_230 : f32 to vector<32x1xf32>
    %283 = arith.addf %281, %282 : vector<32x1xf32>
    %284 = math.rsqrt %283 : vector<32x1xf32>
    %285 = vector.broadcast %284 : vector<32x1xf32> to vector<32x128xf32>
    %286 = arith.mulf %279, %285 : vector<32x128xf32>
    %c1_231 = arith.constant 1 : index
    %c1_232 = arith.constant 1 : index
    %c0_233 = arith.constant 0 : index
    %287 = vector.load %arg3[%c1_231, %c1_232, %c0_233] : memref<4x3x128xf32, #tpu.memory_space<vmem>>, vector<1x1x128xf32>
    %288 = vector.shape_cast %287 : vector<1x1x128xf32> to vector<1x128xf32>
    %289 = vector.broadcast %288 : vector<1x128xf32> to vector<32x128xf32>
    %290 = arith.mulf %289, %286 : vector<32x128xf32>
    %c1_234 = arith.constant 1 : index
    %c2_235 = arith.constant 2 : index
    %c0_236 = arith.constant 0 : index
    %291 = vector.load %arg3[%c1_234, %c2_235, %c0_236] : memref<4x3x128xf32, #tpu.memory_space<vmem>>, vector<1x1x128xf32>
    %292 = vector.shape_cast %291 : vector<1x1x128xf32> to vector<1x128xf32>
    %293 = vector.broadcast %292 : vector<1x128xf32> to vector<32x128xf32>
    %294 = arith.addf %290, %293 : vector<32x128xf32>
    %cst_237 = arith.constant 5.000000e-01 : f32
    %295 = vector.broadcast %cst_237 : f32 to vector<32x128xf32>
    %296 = arith.mulf %295, %294 : vector<32x128xf32>
    %cst_238 = arith.constant 0.707106769 : f32
    %297 = vector.broadcast %cst_238 : f32 to vector<32x128xf32>
    %298 = arith.mulf %294, %297 : vector<32x128xf32>
    %299 = math.absf %298 : vector<32x128xf32>
    %cst_239 = arith.constant 0.327591091 : f32
    %300 = vector.broadcast %cst_239 : f32 to vector<32x128xf32>
    %301 = arith.mulf %300, %299 : vector<32x128xf32>
    %cst_240 = arith.constant 1.000000e+00 : f32
    %302 = vector.broadcast %cst_240 : f32 to vector<32x128xf32>
    %303 = arith.addf %302, %301 : vector<32x128xf32>
    %cst_241 = arith.constant 1.000000e+00 : f32
    %304 = vector.broadcast %cst_241 : f32 to vector<32x128xf32>
    %305 = arith.divf %304, %303 : vector<32x128xf32>
    %cst_242 = arith.constant 1.06140542 : f32
    %306 = vector.broadcast %cst_242 : f32 to vector<32x128xf32>
    %307 = arith.mulf %306, %305 : vector<32x128xf32>
    %cst_243 = arith.constant -1.45315206 : f32
    %308 = vector.broadcast %cst_243 : f32 to vector<32x128xf32>
    %309 = arith.addf %307, %308 : vector<32x128xf32>
    %310 = arith.mulf %309, %305 : vector<32x128xf32>
    %cst_244 = arith.constant 1.42141378 : f32
    %311 = vector.broadcast %cst_244 : f32 to vector<32x128xf32>
    %312 = arith.addf %310, %311 : vector<32x128xf32>
    %313 = arith.mulf %312, %305 : vector<32x128xf32>
    %cst_245 = arith.constant -0.284496725 : f32
    %314 = vector.broadcast %cst_245 : f32 to vector<32x128xf32>
    %315 = arith.addf %313, %314 : vector<32x128xf32>
    %316 = arith.mulf %315, %305 : vector<32x128xf32>
    %cst_246 = arith.constant 0.254829586 : f32
    %317 = vector.broadcast %cst_246 : f32 to vector<32x128xf32>
    %318 = arith.addf %316, %317 : vector<32x128xf32>
    %319 = arith.mulf %318, %305 : vector<32x128xf32>
    %cst_247 = arith.constant 0.000000e+00 : f32
    %320 = vector.broadcast %cst_247 : f32 to vector<32x128xf32>
    %321 = arith.subf %320, %299 : vector<32x128xf32>
    %322 = arith.mulf %321, %299 : vector<32x128xf32>
    %323 = math.exp %322 : vector<32x128xf32>
    %324 = arith.mulf %319, %323 : vector<32x128xf32>
    %cst_248 = arith.constant 1.000000e+00 : f32
    %325 = vector.broadcast %cst_248 : f32 to vector<32x128xf32>
    %326 = arith.subf %325, %324 : vector<32x128xf32>
    %cst_249 = arith.constant 0.000000e+00 : f32
    %327 = vector.broadcast %cst_249 : f32 to vector<32x128xf32>
    %328 = arith.cmpf oge, %298, %327 : vector<32x128xf32>
    %cst_250 = arith.constant 0.000000e+00 : f32
    %329 = vector.broadcast %cst_250 : f32 to vector<32x128xf32>
    %330 = arith.subf %329, %326 : vector<32x128xf32>
    %331 = arith.select %328, %326, %330 : vector<32x128xi1>, vector<32x128xf32>
    %cst_251 = arith.constant 1.000000e+00 : f32
    %332 = vector.broadcast %cst_251 : f32 to vector<32x128xf32>
    %333 = arith.addf %332, %331 : vector<32x128xf32>
    %334 = arith.mulf %296, %333 : vector<32x128xf32>
    %335 = vector.shape_cast %334 : vector<32x128xf32> to vector<4x8x128xf32>
    %336 = vector.extract_strided_slice %335 {offsets = [0, 0, 0], sizes = [4, 4, 128], strides = [1, 1, 1]} : vector<4x8x128xf32> to vector<4x4x128xf32>
    %cst_252 = arith.constant 0.000000e+00 : f32
    %337 = vector.broadcast %cst_252 : f32 to vector<1x6x128xf32>
    %c0_253 = arith.constant 0 : index
    %c0_254 = arith.constant 0 : index
    %c0_255 = arith.constant 0 : index
    %338 = vector.load %arg7[%c0_253, %c0_254, %c0_255] : memref<18x18x128xf32, #tpu.memory_space<vmem>>, vector<1x6x128xf32>
    tpu.vector_store %arg7[%c0_253, %c0_254, %c0_255], %337 {strides = array<i32>} : memref<18x18x128xf32, #tpu.memory_space<vmem>>, vector<1x6x128xf32>,
    %c5 = arith.constant 5 : index
    %c0_256 = arith.constant 0 : index
    %c0_257 = arith.constant 0 : index
    %339 = vector.load %arg7[%c5, %c0_256, %c0_257] : memref<18x18x128xf32, #tpu.memory_space<vmem>>, vector<1x6x128xf32>
    tpu.vector_store %arg7[%c5, %c0_256, %c0_257], %337 {strides = array<i32>} : memref<18x18x128xf32, #tpu.memory_space<vmem>>, vector<1x6x128xf32>,
    %cst_258 = arith.constant 0.000000e+00 : f32
    %340 = vector.broadcast %cst_258 : f32 to vector<4x1x128xf32>
    %c1_259 = arith.constant 1 : index
    %c0_260 = arith.constant 0 : index
    %c0_261 = arith.constant 0 : index
    %341 = vector.load %arg7[%c1_259, %c0_260, %c0_261] : memref<18x18x128xf32, #tpu.memory_space<vmem>>, vector<4x1x128xf32>
    tpu.vector_store %arg7[%c1_259, %c0_260, %c0_261], %340 {strides = array<i32>} : memref<18x18x128xf32, #tpu.memory_space<vmem>>, vector<4x1x128xf32>,
    %c1_262 = arith.constant 1 : index
    %c5_263 = arith.constant 5 : index
    %c0_264 = arith.constant 0 : index
    %342 = vector.load %arg7[%c1_262, %c5_263, %c0_264] : memref<18x18x128xf32, #tpu.memory_space<vmem>>, vector<4x1x128xf32>
    tpu.vector_store %arg7[%c1_262, %c5_263, %c0_264], %340 {strides = array<i32>} : memref<18x18x128xf32, #tpu.memory_space<vmem>>, vector<4x1x128xf32>,
    %c1_265 = arith.constant 1 : index
    %c1_266 = arith.constant 1 : index
    %c0_267 = arith.constant 0 : index
    %343 = vector.load %arg7[%c1_265, %c1_266, %c0_267] : memref<18x18x128xf32, #tpu.memory_space<vmem>>, vector<4x4x128xf32>
    tpu.vector_store %arg7[%c1_265, %c1_266, %c0_267], %336 {strides = array<i32>} : memref<18x18x128xf32, #tpu.memory_space<vmem>>, vector<4x4x128xf32>,
    %c0_268 = arith.constant 0 : index
    %c0_269 = arith.constant 0 : index
    %c0_270 = arith.constant 0 : index
    %344 = tpu.strided_load %arg7[%c0_268, %c0_269, %c0_270] {strides = array<i32: 1, 2, 1>} : memref<18x18x128xf32, #tpu.memory_space<vmem>>, vector<4x8x128xf32>
    %345 = vector.shape_cast %344 : vector<4x8x128xf32> to vector<2x2x8x128xf32>
    %346 = vector.extract_strided_slice %345 {offsets = [0, 0, 0, 0], sizes = [2, 1, 8, 128], strides = [1, 1, 1, 1]} : vector<2x2x8x128xf32> to vector<2x1x8x128xf32>
    %347 = vector.shape_cast %346 : vector<2x1x8x128xf32> to vector<2x8x128xf32>
    %348 = vector.shape_cast %347 : vector<2x8x128xf32> to vector<16x128xf32>
    %349 = arith.truncf %348 : vector<16x128xf32> to vector<16x128xbf16>
    %c2_271 = arith.constant 2 : index
    %c0_272 = arith.constant 0 : index
    %c0_273 = arith.constant 0 : index
    %c0_274 = arith.constant 0 : index
    %c0_275 = arith.constant 0 : index
    %350 = vector.load %arg2[%c2_271, %c0_272, %c0_273, %c0_274, %c0_275] : memref<4x3x3x128x128xbf16, #tpu.memory_space<vmem>>, vector<1x1x1x128x128xbf16>
    %351 = vector.shape_cast %350 : vector<1x1x1x128x128xbf16> to vector<128x128xbf16>
    %cst_276 = arith.constant dense<0.000000e+00> : vector<16x128xf32>
    %352 = tpu.matmul %349, %351, %cst_276 {dimension_numbers = #tpu.dot_dimension_numbers<[1], [0], [0], [1], [0, 0, 1, 1], [], []>} : vector<16x128xbf16>, vector<128x128xbf16>, vector<16x128xf32> -> vector<16x128xf32>
    %c0_277 = arith.constant 0 : index
    %c1_278 = arith.constant 1 : index
    %c0_279 = arith.constant 0 : index
    %353 = tpu.strided_load %arg7[%c0_277, %c1_278, %c0_279] {strides = array<i32: 1, 2, 1>} : memref<18x18x128xf32, #tpu.memory_space<vmem>>, vector<4x8x128xf32>
    %354 = vector.shape_cast %353 : vector<4x8x128xf32> to vector<2x2x8x128xf32>
    %355 = vector.extract_strided_slice %354 {offsets = [0, 0, 0, 0], sizes = [2, 1, 8, 128], strides = [1, 1, 1, 1]} : vector<2x2x8x128xf32> to vector<2x1x8x128xf32>
    %356 = vector.shape_cast %355 : vector<2x1x8x128xf32> to vector<2x8x128xf32>
    %357 = vector.shape_cast %356 : vector<2x8x128xf32> to vector<16x128xf32>
    %358 = arith.truncf %357 : vector<16x128xf32> to vector<16x128xbf16>
    %c2_280 = arith.constant 2 : index
    %c0_281 = arith.constant 0 : index
    %c1_282 = arith.constant 1 : index
    %c0_283 = arith.constant 0 : index
    %c0_284 = arith.constant 0 : index
    %359 = vector.load %arg2[%c2_280, %c0_281, %c1_282, %c0_283, %c0_284] : memref<4x3x3x128x128xbf16, #tpu.memory_space<vmem>>, vector<1x1x1x128x128xbf16>
    %360 = vector.shape_cast %359 : vector<1x1x1x128x128xbf16> to vector<128x128xbf16>
    %cst_285 = arith.constant dense<0.000000e+00> : vector<16x128xf32>
    %361 = tpu.matmul %358, %360, %cst_285 {dimension_numbers = #tpu.dot_dimension_numbers<[1], [0], [0], [1], [0, 0, 1, 1], [], []>} : vector<16x128xbf16>, vector<128x128xbf16>, vector<16x128xf32> -> vector<16x128xf32>
    %362 = arith.addf %352, %361 : vector<16x128xf32>
    %c0_286 = arith.constant 0 : index
    %c2_287 = arith.constant 2 : index
    %c0_288 = arith.constant 0 : index
    %363 = tpu.strided_load %arg7[%c0_286, %c2_287, %c0_288] {strides = array<i32: 1, 2, 1>} : memref<18x18x128xf32, #tpu.memory_space<vmem>>, vector<4x8x128xf32>
    %364 = vector.shape_cast %363 : vector<4x8x128xf32> to vector<2x2x8x128xf32>
    %365 = vector.extract_strided_slice %364 {offsets = [0, 0, 0, 0], sizes = [2, 1, 8, 128], strides = [1, 1, 1, 1]} : vector<2x2x8x128xf32> to vector<2x1x8x128xf32>
    %366 = vector.shape_cast %365 : vector<2x1x8x128xf32> to vector<2x8x128xf32>
    %367 = vector.shape_cast %366 : vector<2x8x128xf32> to vector<16x128xf32>
    %368 = arith.truncf %367 : vector<16x128xf32> to vector<16x128xbf16>
    %c2_289 = arith.constant 2 : index
    %c0_290 = arith.constant 0 : index
    %c2_291 = arith.constant 2 : index
    %c0_292 = arith.constant 0 : index
    %c0_293 = arith.constant 0 : index
    %369 = vector.load %arg2[%c2_289, %c0_290, %c2_291, %c0_292, %c0_293] : memref<4x3x3x128x128xbf16, #tpu.memory_space<vmem>>, vector<1x1x1x128x128xbf16>
    %370 = vector.shape_cast %369 : vector<1x1x1x128x128xbf16> to vector<128x128xbf16>
    %cst_294 = arith.constant dense<0.000000e+00> : vector<16x128xf32>
    %371 = tpu.matmul %368, %370, %cst_294 {dimension_numbers = #tpu.dot_dimension_numbers<[1], [0], [0], [1], [0, 0, 1, 1], [], []>} : vector<16x128xbf16>, vector<128x128xbf16>, vector<16x128xf32> -> vector<16x128xf32>
    %372 = arith.addf %362, %371 : vector<16x128xf32>
    %c1_295 = arith.constant 1 : index
    %c0_296 = arith.constant 0 : index
    %c0_297 = arith.constant 0 : index
    %373 = tpu.strided_load %arg7[%c1_295, %c0_296, %c0_297] {strides = array<i32: 1, 2, 1>} : memref<18x18x128xf32, #tpu.memory_space<vmem>>, vector<4x8x128xf32>
    %374 = vector.shape_cast %373 : vector<4x8x128xf32> to vector<2x2x8x128xf32>
    %375 = vector.extract_strided_slice %374 {offsets = [0, 0, 0, 0], sizes = [2, 1, 8, 128], strides = [1, 1, 1, 1]} : vector<2x2x8x128xf32> to vector<2x1x8x128xf32>
    %376 = vector.shape_cast %375 : vector<2x1x8x128xf32> to vector<2x8x128xf32>
    %377 = vector.shape_cast %376 : vector<2x8x128xf32> to vector<16x128xf32>
    %378 = arith.truncf %377 : vector<16x128xf32> to vector<16x128xbf16>
    %c2_298 = arith.constant 2 : index
    %c1_299 = arith.constant 1 : index
    %c0_300 = arith.constant 0 : index
    %c0_301 = arith.constant 0 : index
    %c0_302 = arith.constant 0 : index
    %379 = vector.load %arg2[%c2_298, %c1_299, %c0_300, %c0_301, %c0_302] : memref<4x3x3x128x128xbf16, #tpu.memory_space<vmem>>, vector<1x1x1x128x128xbf16>
    %380 = vector.shape_cast %379 : vector<1x1x1x128x128xbf16> to vector<128x128xbf16>
    %cst_303 = arith.constant dense<0.000000e+00> : vector<16x128xf32>
    %381 = tpu.matmul %378, %380, %cst_303 {dimension_numbers = #tpu.dot_dimension_numbers<[1], [0], [0], [1], [0, 0, 1, 1], [], []>} : vector<16x128xbf16>, vector<128x128xbf16>, vector<16x128xf32> -> vector<16x128xf32>
    %382 = arith.addf %372, %381 : vector<16x128xf32>
    %c1_304 = arith.constant 1 : index
    %c1_305 = arith.constant 1 : index
    %c0_306 = arith.constant 0 : index
    %383 = tpu.strided_load %arg7[%c1_304, %c1_305, %c0_306] {strides = array<i32: 1, 2, 1>} : memref<18x18x128xf32, #tpu.memory_space<vmem>>, vector<4x8x128xf32>
    %384 = vector.shape_cast %383 : vector<4x8x128xf32> to vector<2x2x8x128xf32>
    %385 = vector.extract_strided_slice %384 {offsets = [0, 0, 0, 0], sizes = [2, 1, 8, 128], strides = [1, 1, 1, 1]} : vector<2x2x8x128xf32> to vector<2x1x8x128xf32>
    %386 = vector.shape_cast %385 : vector<2x1x8x128xf32> to vector<2x8x128xf32>
    %387 = vector.shape_cast %386 : vector<2x8x128xf32> to vector<16x128xf32>
    %388 = arith.truncf %387 : vector<16x128xf32> to vector<16x128xbf16>
    %c2_307 = arith.constant 2 : index
    %c1_308 = arith.constant 1 : index
    %c1_309 = arith.constant 1 : index
    %c0_310 = arith.constant 0 : index
    %c0_311 = arith.constant 0 : index
    %389 = vector.load %arg2[%c2_307, %c1_308, %c1_309, %c0_310, %c0_311] : memref<4x3x3x128x128xbf16, #tpu.memory_space<vmem>>, vector<1x1x1x128x128xbf16>
    %390 = vector.shape_cast %389 : vector<1x1x1x128x128xbf16> to vector<128x128xbf16>
    %cst_312 = arith.constant dense<0.000000e+00> : vector<16x128xf32>
    %391 = tpu.matmul %388, %390, %cst_312 {dimension_numbers = #tpu.dot_dimension_numbers<[1], [0], [0], [1], [0, 0, 1, 1], [], []>} : vector<16x128xbf16>, vector<128x128xbf16>, vector<16x128xf32> -> vector<16x128xf32>
    %392 = arith.addf %382, %391 : vector<16x128xf32>
    %c1_313 = arith.constant 1 : index
    %c2_314 = arith.constant 2 : index
    %c0_315 = arith.constant 0 : index
    %393 = tpu.strided_load %arg7[%c1_313, %c2_314, %c0_315] {strides = array<i32: 1, 2, 1>} : memref<18x18x128xf32, #tpu.memory_space<vmem>>, vector<4x8x128xf32>
    %394 = vector.shape_cast %393 : vector<4x8x128xf32> to vector<2x2x8x128xf32>
    %395 = vector.extract_strided_slice %394 {offsets = [0, 0, 0, 0], sizes = [2, 1, 8, 128], strides = [1, 1, 1, 1]} : vector<2x2x8x128xf32> to vector<2x1x8x128xf32>
    %396 = vector.shape_cast %395 : vector<2x1x8x128xf32> to vector<2x8x128xf32>
    %397 = vector.shape_cast %396 : vector<2x8x128xf32> to vector<16x128xf32>
    %398 = arith.truncf %397 : vector<16x128xf32> to vector<16x128xbf16>
    %c2_316 = arith.constant 2 : index
    %c1_317 = arith.constant 1 : index
    %c2_318 = arith.constant 2 : index
    %c0_319 = arith.constant 0 : index
    %c0_320 = arith.constant 0 : index
    %399 = vector.load %arg2[%c2_316, %c1_317, %c2_318, %c0_319, %c0_320] : memref<4x3x3x128x128xbf16, #tpu.memory_space<vmem>>, vector<1x1x1x128x128xbf16>
    %400 = vector.shape_cast %399 : vector<1x1x1x128x128xbf16> to vector<128x128xbf16>
    %cst_321 = arith.constant dense<0.000000e+00> : vector<16x128xf32>
    %401 = tpu.matmul %398, %400, %cst_321 {dimension_numbers = #tpu.dot_dimension_numbers<[1], [0], [0], [1], [0, 0, 1, 1], [], []>} : vector<16x128xbf16>, vector<128x128xbf16>, vector<16x128xf32> -> vector<16x128xf32>
    %402 = arith.addf %392, %401 : vector<16x128xf32>
    %c2_322 = arith.constant 2 : index
    %c0_323 = arith.constant 0 : index
    %c0_324 = arith.constant 0 : index
    %403 = tpu.strided_load %arg7[%c2_322, %c0_323, %c0_324] {strides = array<i32: 1, 2, 1>} : memref<18x18x128xf32, #tpu.memory_space<vmem>>, vector<4x8x128xf32>
    %404 = vector.shape_cast %403 : vector<4x8x128xf32> to vector<2x2x8x128xf32>
    %405 = vector.extract_strided_slice %404 {offsets = [0, 0, 0, 0], sizes = [2, 1, 8, 128], strides = [1, 1, 1, 1]} : vector<2x2x8x128xf32> to vector<2x1x8x128xf32>
    %406 = vector.shape_cast %405 : vector<2x1x8x128xf32> to vector<2x8x128xf32>
    %407 = vector.shape_cast %406 : vector<2x8x128xf32> to vector<16x128xf32>
    %408 = arith.truncf %407 : vector<16x128xf32> to vector<16x128xbf16>
    %c2_325 = arith.constant 2 : index
    %c2_326 = arith.constant 2 : index
    %c0_327 = arith.constant 0 : index
    %c0_328 = arith.constant 0 : index
    %c0_329 = arith.constant 0 : index
    %409 = vector.load %arg2[%c2_325, %c2_326, %c0_327, %c0_328, %c0_329] : memref<4x3x3x128x128xbf16, #tpu.memory_space<vmem>>, vector<1x1x1x128x128xbf16>
    %410 = vector.shape_cast %409 : vector<1x1x1x128x128xbf16> to vector<128x128xbf16>
    %cst_330 = arith.constant dense<0.000000e+00> : vector<16x128xf32>
    %411 = tpu.matmul %408, %410, %cst_330 {dimension_numbers = #tpu.dot_dimension_numbers<[1], [0], [0], [1], [0, 0, 1, 1], [], []>} : vector<16x128xbf16>, vector<128x128xbf16>, vector<16x128xf32> -> vector<16x128xf32>
    %412 = arith.addf %402, %411 : vector<16x128xf32>
    %c2_331 = arith.constant 2 : index
    %c1_332 = arith.constant 1 : index
    %c0_333 = arith.constant 0 : index
    %413 = tpu.strided_load %arg7[%c2_331, %c1_332, %c0_333] {strides = array<i32: 1, 2, 1>} : memref<18x18x128xf32, #tpu.memory_space<vmem>>, vector<4x8x128xf32>
    %414 = vector.shape_cast %413 : vector<4x8x128xf32> to vector<2x2x8x128xf32>
    %415 = vector.extract_strided_slice %414 {offsets = [0, 0, 0, 0], sizes = [2, 1, 8, 128], strides = [1, 1, 1, 1]} : vector<2x2x8x128xf32> to vector<2x1x8x128xf32>
    %416 = vector.shape_cast %415 : vector<2x1x8x128xf32> to vector<2x8x128xf32>
    %417 = vector.shape_cast %416 : vector<2x8x128xf32> to vector<16x128xf32>
    %418 = arith.truncf %417 : vector<16x128xf32> to vector<16x128xbf16>
    %c2_334 = arith.constant 2 : index
    %c2_335 = arith.constant 2 : index
    %c1_336 = arith.constant 1 : index
    %c0_337 = arith.constant 0 : index
    %c0_338 = arith.constant 0 : index
    %419 = vector.load %arg2[%c2_334, %c2_335, %c1_336, %c0_337, %c0_338] : memref<4x3x3x128x128xbf16, #tpu.memory_space<vmem>>, vector<1x1x1x128x128xbf16>
    %420 = vector.shape_cast %419 : vector<1x1x1x128x128xbf16> to vector<128x128xbf16>
    %cst_339 = arith.constant dense<0.000000e+00> : vector<16x128xf32>
    %421 = tpu.matmul %418, %420, %cst_339 {dimension_numbers = #tpu.dot_dimension_numbers<[1], [0], [0], [1], [0, 0, 1, 1], [], []>} : vector<16x128xbf16>, vector<128x128xbf16>, vector<16x128xf32> -> vector<16x128xf32>
    %422 = arith.addf %412, %421 : vector<16x128xf32>
    %c2_340 = arith.constant 2 : index
    %c2_341 = arith.constant 2 : index
    %c0_342 = arith.constant 0 : index
    %423 = tpu.strided_load %arg7[%c2_340, %c2_341, %c0_342] {strides = array<i32: 1, 2, 1>} : memref<18x18x128xf32, #tpu.memory_space<vmem>>, vector<4x8x128xf32>
    %424 = vector.shape_cast %423 : vector<4x8x128xf32> to vector<2x2x8x128xf32>
    %425 = vector.extract_strided_slice %424 {offsets = [0, 0, 0, 0], sizes = [2, 1, 8, 128], strides = [1, 1, 1, 1]} : vector<2x2x8x128xf32> to vector<2x1x8x128xf32>
    %426 = vector.shape_cast %425 : vector<2x1x8x128xf32> to vector<2x8x128xf32>
    %427 = vector.shape_cast %426 : vector<2x8x128xf32> to vector<16x128xf32>
    %428 = arith.truncf %427 : vector<16x128xf32> to vector<16x128xbf16>
    %c2_343 = arith.constant 2 : index
    %c2_344 = arith.constant 2 : index
    %c2_345 = arith.constant 2 : index
    %c0_346 = arith.constant 0 : index
    %c0_347 = arith.constant 0 : index
    %429 = vector.load %arg2[%c2_343, %c2_344, %c2_345, %c0_346, %c0_347] : memref<4x3x3x128x128xbf16, #tpu.memory_space<vmem>>, vector<1x1x1x128x128xbf16>
    %430 = vector.shape_cast %429 : vector<1x1x1x128x128xbf16> to vector<128x128xbf16>
    %cst_348 = arith.constant dense<0.000000e+00> : vector<16x128xf32>
    %431 = tpu.matmul %428, %430, %cst_348 {dimension_numbers = #tpu.dot_dimension_numbers<[1], [0], [0], [1], [0, 0, 1, 1], [], []>} : vector<16x128xbf16>, vector<128x128xbf16>, vector<16x128xf32> -> vector<16x128xf32>
    %432 = arith.addf %422, %431 : vector<16x128xf32>
    %c2_349 = arith.constant 2 : index
    %c0_350 = arith.constant 0 : index
    %c0_351 = arith.constant 0 : index
    %433 = vector.load %arg3[%c2_349, %c0_350, %c0_351] : memref<4x3x128xf32, #tpu.memory_space<vmem>>, vector<1x1x128xf32>
    %434 = vector.shape_cast %433 : vector<1x1x128xf32> to vector<1x128xf32>
    %435 = vector.broadcast %434 : vector<1x128xf32> to vector<16x128xf32>
    %436 = arith.addf %432, %435 : vector<16x128xf32>
    %cst_352 = arith.constant dense<0.000000e+00> : vector<16xf32>
    %437 = vector.multi_reduction <add>, %436, %cst_352 [1] : vector<16x128xf32> to vector<16xf32>
    %438 = vector.shape_cast %437 : vector<16xf32> to vector<16x1xf32>
    %cst_353 = arith.constant 6.250000e-02 : f32
    %439 = vector.broadcast %cst_353 : f32 to vector<16x1xf32>
    %440 = arith.mulf %438, %439 : vector<16x1xf32>
    %441 = arith.mulf %436, %436 : vector<16x128xf32>
    %cst_354 = arith.constant dense<0.000000e+00> : vector<16xf32>
    %442 = vector.multi_reduction <add>, %441, %cst_354 [1] : vector<16x128xf32> to vector<16xf32>
    %443 = vector.shape_cast %442 : vector<16xf32> to vector<16x1xf32>
    %cst_355 = arith.constant 6.250000e-02 : f32
    %444 = vector.broadcast %cst_355 : f32 to vector<16x1xf32>
    %445 = arith.mulf %443, %444 : vector<16x1xf32>
    %446 = vector.broadcast %440 : vector<16x1xf32> to vector<16x128xf32>
    %447 = arith.subf %436, %446 : vector<16x128xf32>
    %448 = arith.mulf %440, %440 : vector<16x1xf32>
    %449 = arith.subf %445, %448 : vector<16x1xf32>
    %cst_356 = arith.constant 9.99999997E-7 : f32
    %450 = vector.broadcast %cst_356 : f32 to vector<16x1xf32>
    %451 = arith.addf %449, %450 : vector<16x1xf32>
    %452 = math.rsqrt %451 : vector<16x1xf32>
    %453 = vector.broadcast %452 : vector<16x1xf32> to vector<16x128xf32>
    %454 = arith.mulf %447, %453 : vector<16x128xf32>
    %c2_357 = arith.constant 2 : index
    %c1_358 = arith.constant 1 : index
    %c0_359 = arith.constant 0 : index
    %455 = vector.load %arg3[%c2_357, %c1_358, %c0_359] : memref<4x3x128xf32, #tpu.memory_space<vmem>>, vector<1x1x128xf32>
    %456 = vector.shape_cast %455 : vector<1x1x128xf32> to vector<1x128xf32>
    %457 = vector.broadcast %456 : vector<1x128xf32> to vector<16x128xf32>
    %458 = arith.mulf %457, %454 : vector<16x128xf32>
    %c2_360 = arith.constant 2 : index
    %c2_361 = arith.constant 2 : index
    %c0_362 = arith.constant 0 : index
    %459 = vector.load %arg3[%c2_360, %c2_361, %c0_362] : memref<4x3x128xf32, #tpu.memory_space<vmem>>, vector<1x1x128xf32>
    %460 = vector.shape_cast %459 : vector<1x1x128xf32> to vector<1x128xf32>
    %461 = vector.broadcast %460 : vector<1x128xf32> to vector<16x128xf32>
    %462 = arith.addf %458, %461 : vector<16x128xf32>
    %cst_363 = arith.constant 5.000000e-01 : f32
    %463 = vector.broadcast %cst_363 : f32 to vector<16x128xf32>
    %464 = arith.mulf %463, %462 : vector<16x128xf32>
    %cst_364 = arith.constant 0.707106769 : f32
    %465 = vector.broadcast %cst_364 : f32 to vector<16x128xf32>
    %466 = arith.mulf %462, %465 : vector<16x128xf32>
    %467 = math.absf %466 : vector<16x128xf32>
    %cst_365 = arith.constant 0.327591091 : f32
    %468 = vector.broadcast %cst_365 : f32 to vector<16x128xf32>
    %469 = arith.mulf %468, %467 : vector<16x128xf32>
    %cst_366 = arith.constant 1.000000e+00 : f32
    %470 = vector.broadcast %cst_366 : f32 to vector<16x128xf32>
    %471 = arith.addf %470, %469 : vector<16x128xf32>
    %cst_367 = arith.constant 1.000000e+00 : f32
    %472 = vector.broadcast %cst_367 : f32 to vector<16x128xf32>
    %473 = arith.divf %472, %471 : vector<16x128xf32>
    %cst_368 = arith.constant 1.06140542 : f32
    %474 = vector.broadcast %cst_368 : f32 to vector<16x128xf32>
    %475 = arith.mulf %474, %473 : vector<16x128xf32>
    %cst_369 = arith.constant -1.45315206 : f32
    %476 = vector.broadcast %cst_369 : f32 to vector<16x128xf32>
    %477 = arith.addf %475, %476 : vector<16x128xf32>
    %478 = arith.mulf %477, %473 : vector<16x128xf32>
    %cst_370 = arith.constant 1.42141378 : f32
    %479 = vector.broadcast %cst_370 : f32 to vector<16x128xf32>
    %480 = arith.addf %478, %479 : vector<16x128xf32>
    %481 = arith.mulf %480, %473 : vector<16x128xf32>
    %cst_371 = arith.constant -0.284496725 : f32
    %482 = vector.broadcast %cst_371 : f32 to vector<16x128xf32>
    %483 = arith.addf %481, %482 : vector<16x128xf32>
    %484 = arith.mulf %483, %473 : vector<16x128xf32>
    %cst_372 = arith.constant 0.254829586 : f32
    %485 = vector.broadcast %cst_372 : f32 to vector<16x128xf32>
    %486 = arith.addf %484, %485 : vector<16x128xf32>
    %487 = arith.mulf %486, %473 : vector<16x128xf32>
    %cst_373 = arith.constant 0.000000e+00 : f32
    %488 = vector.broadcast %cst_373 : f32 to vector<16x128xf32>
    %489 = arith.subf %488, %467 : vector<16x128xf32>
    %490 = arith.mulf %489, %467 : vector<16x128xf32>
    %491 = math.exp %490 : vector<16x128xf32>
    %492 = arith.mulf %487, %491 : vector<16x128xf32>
    %cst_374 = arith.constant 1.000000e+00 : f32
    %493 = vector.broadcast %cst_374 : f32 to vector<16x128xf32>
    %494 = arith.subf %493, %492 : vector<16x128xf32>
    %cst_375 = arith.constant 0.000000e+00 : f32
    %495 = vector.broadcast %cst_375 : f32 to vector<16x128xf32>
    %496 = arith.cmpf oge, %466, %495 : vector<16x128xf32>
    %cst_376 = arith.constant 0.000000e+00 : f32
    %497 = vector.broadcast %cst_376 : f32 to vector<16x128xf32>
    %498 = arith.subf %497, %494 : vector<16x128xf32>
    %499 = arith.select %496, %494, %498 : vector<16x128xi1>, vector<16x128xf32>
    %cst_377 = arith.constant 1.000000e+00 : f32
    %500 = vector.broadcast %cst_377 : f32 to vector<16x128xf32>
    %501 = arith.addf %500, %499 : vector<16x128xf32>
    %502 = arith.mulf %464, %501 : vector<16x128xf32>
    %503 = vector.shape_cast %502 : vector<16x128xf32> to vector<2x8x128xf32>
    %504 = vector.extract_strided_slice %503 {offsets = [0, 0, 0], sizes = [2, 2, 128], strides = [1, 1, 1]} : vector<2x8x128xf32> to vector<2x2x128xf32>
    %cst_378 = arith.constant 0.000000e+00 : f32
    %505 = vector.broadcast %cst_378 : f32 to vector<1x4x128xf32>
    %c0_379 = arith.constant 0 : index
    %c0_380 = arith.constant 0 : index
    %c0_381 = arith.constant 0 : index
    %506 = vector.load %arg7[%c0_379, %c0_380, %c0_381] : memref<18x18x128xf32, #tpu.memory_space<vmem>>, vector<1x4x128xf32>
    tpu.vector_store %arg7[%c0_379, %c0_380, %c0_381], %505 {strides = array<i32>} : memref<18x18x128xf32, #tpu.memory_space<vmem>>, vector<1x4x128xf32>,
    %c3 = arith.constant 3 : index
    %c0_382 = arith.constant 0 : index
    %c0_383 = arith.constant 0 : index
    %507 = vector.load %arg7[%c3, %c0_382, %c0_383] : memref<18x18x128xf32, #tpu.memory_space<vmem>>, vector<1x4x128xf32>
    tpu.vector_store %arg7[%c3, %c0_382, %c0_383], %505 {strides = array<i32>} : memref<18x18x128xf32, #tpu.memory_space<vmem>>, vector<1x4x128xf32>,
    %cst_384 = arith.constant 0.000000e+00 : f32
    %508 = vector.broadcast %cst_384 : f32 to vector<2x1x128xf32>
    %c1_385 = arith.constant 1 : index
    %c0_386 = arith.constant 0 : index
    %c0_387 = arith.constant 0 : index
    %509 = vector.load %arg7[%c1_385, %c0_386, %c0_387] : memref<18x18x128xf32, #tpu.memory_space<vmem>>, vector<2x1x128xf32>
    tpu.vector_store %arg7[%c1_385, %c0_386, %c0_387], %508 {strides = array<i32>} : memref<18x18x128xf32, #tpu.memory_space<vmem>>, vector<2x1x128xf32>,
    %c1_388 = arith.constant 1 : index
    %c3_389 = arith.constant 3 : index
    %c0_390 = arith.constant 0 : index
    %510 = vector.load %arg7[%c1_388, %c3_389, %c0_390] : memref<18x18x128xf32, #tpu.memory_space<vmem>>, vector<2x1x128xf32>
    tpu.vector_store %arg7[%c1_388, %c3_389, %c0_390], %508 {strides = array<i32>} : memref<18x18x128xf32, #tpu.memory_space<vmem>>, vector<2x1x128xf32>,
    %c1_391 = arith.constant 1 : index
    %c1_392 = arith.constant 1 : index
    %c0_393 = arith.constant 0 : index
    %511 = vector.load %arg7[%c1_391, %c1_392, %c0_393] : memref<18x18x128xf32, #tpu.memory_space<vmem>>, vector<2x2x128xf32>
    tpu.vector_store %arg7[%c1_391, %c1_392, %c0_393], %504 {strides = array<i32>} : memref<18x18x128xf32, #tpu.memory_space<vmem>>, vector<2x2x128xf32>,
    %c0_394 = arith.constant 0 : index
    %c0_395 = arith.constant 0 : index
    %c0_396 = arith.constant 0 : index
    %512 = tpu.strided_load %arg7[%c0_394, %c0_395, %c0_396] {strides = array<i32: 1, 2, 1>} : memref<18x18x128xf32, #tpu.memory_space<vmem>>, vector<2x8x128xf32>
    %513 = vector.shape_cast %512 : vector<2x8x128xf32> to vector<1x2x8x128xf32>
    %514 = vector.extract_strided_slice %513 {offsets = [0, 0, 0, 0], sizes = [1, 1, 8, 128], strides = [1, 1, 1, 1]} : vector<1x2x8x128xf32> to vector<1x1x8x128xf32>
    %515 = vector.shape_cast %514 : vector<1x1x8x128xf32> to vector<1x8x128xf32>
    %516 = vector.shape_cast %515 : vector<1x8x128xf32> to vector<8x128xf32>
    %517 = arith.truncf %516 : vector<8x128xf32> to vector<8x128xbf16>
    %c3_397 = arith.constant 3 : index
    %c0_398 = arith.constant 0 : index
    %c0_399 = arith.constant 0 : index
    %c0_400 = arith.constant 0 : index
    %c0_401 = arith.constant 0 : index
    %518 = vector.load %arg2[%c3_397, %c0_398, %c0_399, %c0_400, %c0_401] : memref<4x3x3x128x128xbf16, #tpu.memory_space<vmem>>, vector<1x1x1x128x128xbf16>
    %519 = vector.shape_cast %518 : vector<1x1x1x128x128xbf16> to vector<128x128xbf16>
    %cst_402 = arith.constant dense<0.000000e+00> : vector<8x128xf32>
    %520 = tpu.matmul %517, %519, %cst_402 {dimension_numbers = #tpu.dot_dimension_numbers<[1], [0], [0], [1], [0, 0, 1, 1], [], []>} : vector<8x128xbf16>, vector<128x128xbf16>, vector<8x128xf32> -> vector<8x128xf32>
    %c0_403 = arith.constant 0 : index
    %c1_404 = arith.constant 1 : index
    %c0_405 = arith.constant 0 : index
    %521 = tpu.strided_load %arg7[%c0_403, %c1_404, %c0_405] {strides = array<i32: 1, 2, 1>} : memref<18x18x128xf32, #tpu.memory_space<vmem>>, vector<2x8x128xf32>
    %522 = vector.shape_cast %521 : vector<2x8x128xf32> to vector<1x2x8x128xf32>
    %523 = vector.extract_strided_slice %522 {offsets = [0, 0, 0, 0], sizes = [1, 1, 8, 128], strides = [1, 1, 1, 1]} : vector<1x2x8x128xf32> to vector<1x1x8x128xf32>
    %524 = vector.shape_cast %523 : vector<1x1x8x128xf32> to vector<1x8x128xf32>
    %525 = vector.shape_cast %524 : vector<1x8x128xf32> to vector<8x128xf32>
    %526 = arith.truncf %525 : vector<8x128xf32> to vector<8x128xbf16>
    %c3_406 = arith.constant 3 : index
    %c0_407 = arith.constant 0 : index
    %c1_408 = arith.constant 1 : index
    %c0_409 = arith.constant 0 : index
    %c0_410 = arith.constant 0 : index
    %527 = vector.load %arg2[%c3_406, %c0_407, %c1_408, %c0_409, %c0_410] : memref<4x3x3x128x128xbf16, #tpu.memory_space<vmem>>, vector<1x1x1x128x128xbf16>
    %528 = vector.shape_cast %527 : vector<1x1x1x128x128xbf16> to vector<128x128xbf16>
    %cst_411 = arith.constant dense<0.000000e+00> : vector<8x128xf32>
    %529 = tpu.matmul %526, %528, %cst_411 {dimension_numbers = #tpu.dot_dimension_numbers<[1], [0], [0], [1], [0, 0, 1, 1], [], []>} : vector<8x128xbf16>, vector<128x128xbf16>, vector<8x128xf32> -> vector<8x128xf32>
    %530 = arith.addf %520, %529 : vector<8x128xf32>
    %c0_412 = arith.constant 0 : index
    %c2_413 = arith.constant 2 : index
    %c0_414 = arith.constant 0 : index
    %531 = tpu.strided_load %arg7[%c0_412, %c2_413, %c0_414] {strides = array<i32: 1, 2, 1>} : memref<18x18x128xf32, #tpu.memory_space<vmem>>, vector<2x8x128xf32>
    %532 = vector.shape_cast %531 : vector<2x8x128xf32> to vector<1x2x8x128xf32>
    %533 = vector.extract_strided_slice %532 {offsets = [0, 0, 0, 0], sizes = [1, 1, 8, 128], strides = [1, 1, 1, 1]} : vector<1x2x8x128xf32> to vector<1x1x8x128xf32>
    %534 = vector.shape_cast %533 : vector<1x1x8x128xf32> to vector<1x8x128xf32>
    %535 = vector.shape_cast %534 : vector<1x8x128xf32> to vector<8x128xf32>
    %536 = arith.truncf %535 : vector<8x128xf32> to vector<8x128xbf16>
    %c3_415 = arith.constant 3 : index
    %c0_416 = arith.constant 0 : index
    %c2_417 = arith.constant 2 : index
    %c0_418 = arith.constant 0 : index
    %c0_419 = arith.constant 0 : index
    %537 = vector.load %arg2[%c3_415, %c0_416, %c2_417, %c0_418, %c0_419] : memref<4x3x3x128x128xbf16, #tpu.memory_space<vmem>>, vector<1x1x1x128x128xbf16>
    %538 = vector.shape_cast %537 : vector<1x1x1x128x128xbf16> to vector<128x128xbf16>
    %cst_420 = arith.constant dense<0.000000e+00> : vector<8x128xf32>
    %539 = tpu.matmul %536, %538, %cst_420 {dimension_numbers = #tpu.dot_dimension_numbers<[1], [0], [0], [1], [0, 0, 1, 1], [], []>} : vector<8x128xbf16>, vector<128x128xbf16>, vector<8x128xf32> -> vector<8x128xf32>
    %540 = arith.addf %530, %539 : vector<8x128xf32>
    %c1_421 = arith.constant 1 : index
    %c0_422 = arith.constant 0 : index
    %c0_423 = arith.constant 0 : index
    %541 = tpu.strided_load %arg7[%c1_421, %c0_422, %c0_423] {strides = array<i32: 1, 2, 1>} : memref<18x18x128xf32, #tpu.memory_space<vmem>>, vector<2x8x128xf32>
    %542 = vector.shape_cast %541 : vector<2x8x128xf32> to vector<1x2x8x128xf32>
    %543 = vector.extract_strided_slice %542 {offsets = [0, 0, 0, 0], sizes = [1, 1, 8, 128], strides = [1, 1, 1, 1]} : vector<1x2x8x128xf32> to vector<1x1x8x128xf32>
    %544 = vector.shape_cast %543 : vector<1x1x8x128xf32> to vector<1x8x128xf32>
    %545 = vector.shape_cast %544 : vector<1x8x128xf32> to vector<8x128xf32>
    %546 = arith.truncf %545 : vector<8x128xf32> to vector<8x128xbf16>
    %c3_424 = arith.constant 3 : index
    %c1_425 = arith.constant 1 : index
    %c0_426 = arith.constant 0 : index
    %c0_427 = arith.constant 0 : index
    %c0_428 = arith.constant 0 : index
    %547 = vector.load %arg2[%c3_424, %c1_425, %c0_426, %c0_427, %c0_428] : memref<4x3x3x128x128xbf16, #tpu.memory_space<vmem>>, vector<1x1x1x128x128xbf16>
    %548 = vector.shape_cast %547 : vector<1x1x1x128x128xbf16> to vector<128x128xbf16>
    %cst_429 = arith.constant dense<0.000000e+00> : vector<8x128xf32>
    %549 = tpu.matmul %546, %548, %cst_429 {dimension_numbers = #tpu.dot_dimension_numbers<[1], [0], [0], [1], [0, 0, 1, 1], [], []>} : vector<8x128xbf16>, vector<128x128xbf16>, vector<8x128xf32> -> vector<8x128xf32>
    %550 = arith.addf %540, %549 : vector<8x128xf32>
    %c1_430 = arith.constant 1 : index
    %c1_431 = arith.constant 1 : index
    %c0_432 = arith.constant 0 : index
    %551 = tpu.strided_load %arg7[%c1_430, %c1_431, %c0_432] {strides = array<i32: 1, 2, 1>} : memref<18x18x128xf32, #tpu.memory_space<vmem>>, vector<2x8x128xf32>
    %552 = vector.shape_cast %551 : vector<2x8x128xf32> to vector<1x2x8x128xf32>
    %553 = vector.extract_strided_slice %552 {offsets = [0, 0, 0, 0], sizes = [1, 1, 8, 128], strides = [1, 1, 1, 1]} : vector<1x2x8x128xf32> to vector<1x1x8x128xf32>
    %554 = vector.shape_cast %553 : vector<1x1x8x128xf32> to vector<1x8x128xf32>
    %555 = vector.shape_cast %554 : vector<1x8x128xf32> to vector<8x128xf32>
    %556 = arith.truncf %555 : vector<8x128xf32> to vector<8x128xbf16>
    %c3_433 = arith.constant 3 : index
    %c1_434 = arith.constant 1 : index
    %c1_435 = arith.constant 1 : index
    %c0_436 = arith.constant 0 : index
    %c0_437 = arith.constant 0 : index
    %557 = vector.load %arg2[%c3_433, %c1_434, %c1_435, %c0_436, %c0_437] : memref<4x3x3x128x128xbf16, #tpu.memory_space<vmem>>, vector<1x1x1x128x128xbf16>
    %558 = vector.shape_cast %557 : vector<1x1x1x128x128xbf16> to vector<128x128xbf16>
    %cst_438 = arith.constant dense<0.000000e+00> : vector<8x128xf32>
    %559 = tpu.matmul %556, %558, %cst_438 {dimension_numbers = #tpu.dot_dimension_numbers<[1], [0], [0], [1], [0, 0, 1, 1], [], []>} : vector<8x128xbf16>, vector<128x128xbf16>, vector<8x128xf32> -> vector<8x128xf32>
    %560 = arith.addf %550, %559 : vector<8x128xf32>
    %c1_439 = arith.constant 1 : index
    %c2_440 = arith.constant 2 : index
    %c0_441 = arith.constant 0 : index
    %561 = tpu.strided_load %arg7[%c1_439, %c2_440, %c0_441] {strides = array<i32: 1, 2, 1>} : memref<18x18x128xf32, #tpu.memory_space<vmem>>, vector<2x8x128xf32>
    %562 = vector.shape_cast %561 : vector<2x8x128xf32> to vector<1x2x8x128xf32>
    %563 = vector.extract_strided_slice %562 {offsets = [0, 0, 0, 0], sizes = [1, 1, 8, 128], strides = [1, 1, 1, 1]} : vector<1x2x8x128xf32> to vector<1x1x8x128xf32>
    %564 = vector.shape_cast %563 : vector<1x1x8x128xf32> to vector<1x8x128xf32>
    %565 = vector.shape_cast %564 : vector<1x8x128xf32> to vector<8x128xf32>
    %566 = arith.truncf %565 : vector<8x128xf32> to vector<8x128xbf16>
    %c3_442 = arith.constant 3 : index
    %c1_443 = arith.constant 1 : index
    %c2_444 = arith.constant 2 : index
    %c0_445 = arith.constant 0 : index
    %c0_446 = arith.constant 0 : index
    %567 = vector.load %arg2[%c3_442, %c1_443, %c2_444, %c0_445, %c0_446] : memref<4x3x3x128x128xbf16, #tpu.memory_space<vmem>>, vector<1x1x1x128x128xbf16>
    %568 = vector.shape_cast %567 : vector<1x1x1x128x128xbf16> to vector<128x128xbf16>
    %cst_447 = arith.constant dense<0.000000e+00> : vector<8x128xf32>
    %569 = tpu.matmul %566, %568, %cst_447 {dimension_numbers = #tpu.dot_dimension_numbers<[1], [0], [0], [1], [0, 0, 1, 1], [], []>} : vector<8x128xbf16>, vector<128x128xbf16>, vector<8x128xf32> -> vector<8x128xf32>
    %570 = arith.addf %560, %569 : vector<8x128xf32>
    %c2_448 = arith.constant 2 : index
    %c0_449 = arith.constant 0 : index
    %c0_450 = arith.constant 0 : index
    %571 = tpu.strided_load %arg7[%c2_448, %c0_449, %c0_450] {strides = array<i32: 1, 2, 1>} : memref<18x18x128xf32, #tpu.memory_space<vmem>>, vector<2x8x128xf32>
    %572 = vector.shape_cast %571 : vector<2x8x128xf32> to vector<1x2x8x128xf32>
    %573 = vector.extract_strided_slice %572 {offsets = [0, 0, 0, 0], sizes = [1, 1, 8, 128], strides = [1, 1, 1, 1]} : vector<1x2x8x128xf32> to vector<1x1x8x128xf32>
    %574 = vector.shape_cast %573 : vector<1x1x8x128xf32> to vector<1x8x128xf32>
    %575 = vector.shape_cast %574 : vector<1x8x128xf32> to vector<8x128xf32>
    %576 = arith.truncf %575 : vector<8x128xf32> to vector<8x128xbf16>
    %c3_451 = arith.constant 3 : index
    %c2_452 = arith.constant 2 : index
    %c0_453 = arith.constant 0 : index
    %c0_454 = arith.constant 0 : index
    %c0_455 = arith.constant 0 : index
    %577 = vector.load %arg2[%c3_451, %c2_452, %c0_453, %c0_454, %c0_455] : memref<4x3x3x128x128xbf16, #tpu.memory_space<vmem>>, vector<1x1x1x128x128xbf16>
    %578 = vector.shape_cast %577 : vector<1x1x1x128x128xbf16> to vector<128x128xbf16>
    %cst_456 = arith.constant dense<0.000000e+00> : vector<8x128xf32>
    %579 = tpu.matmul %576, %578, %cst_456 {dimension_numbers = #tpu.dot_dimension_numbers<[1], [0], [0], [1], [0, 0, 1, 1], [], []>} : vector<8x128xbf16>, vector<128x128xbf16>, vector<8x128xf32> -> vector<8x128xf32>
    %580 = arith.addf %570, %579 : vector<8x128xf32>
    %c2_457 = arith.constant 2 : index
    %c1_458 = arith.constant 1 : index
    %c0_459 = arith.constant 0 : index
    %581 = tpu.strided_load %arg7[%c2_457, %c1_458, %c0_459] {strides = array<i32: 1, 2, 1>} : memref<18x18x128xf32, #tpu.memory_space<vmem>>, vector<2x8x128xf32>
    %582 = vector.shape_cast %581 : vector<2x8x128xf32> to vector<1x2x8x128xf32>
    %583 = vector.extract_strided_slice %582 {offsets = [0, 0, 0, 0], sizes = [1, 1, 8, 128], strides = [1, 1, 1, 1]} : vector<1x2x8x128xf32> to vector<1x1x8x128xf32>
    %584 = vector.shape_cast %583 : vector<1x1x8x128xf32> to vector<1x8x128xf32>
    %585 = vector.shape_cast %584 : vector<1x8x128xf32> to vector<8x128xf32>
    %586 = arith.truncf %585 : vector<8x128xf32> to vector<8x128xbf16>
    %c3_460 = arith.constant 3 : index
    %c2_461 = arith.constant 2 : index
    %c1_462 = arith.constant 1 : index
    %c0_463 = arith.constant 0 : index
    %c0_464 = arith.constant 0 : index
    %587 = vector.load %arg2[%c3_460, %c2_461, %c1_462, %c0_463, %c0_464] : memref<4x3x3x128x128xbf16, #tpu.memory_space<vmem>>, vector<1x1x1x128x128xbf16>
    %588 = vector.shape_cast %587 : vector<1x1x1x128x128xbf16> to vector<128x128xbf16>
    %cst_465 = arith.constant dense<0.000000e+00> : vector<8x128xf32>
    %589 = tpu.matmul %586, %588, %cst_465 {dimension_numbers = #tpu.dot_dimension_numbers<[1], [0], [0], [1], [0, 0, 1, 1], [], []>} : vector<8x128xbf16>, vector<128x128xbf16>, vector<8x128xf32> -> vector<8x128xf32>
    %590 = arith.addf %580, %589 : vector<8x128xf32>
    %c2_466 = arith.constant 2 : index
    %c2_467 = arith.constant 2 : index
    %c0_468 = arith.constant 0 : index
    %591 = tpu.strided_load %arg7[%c2_466, %c2_467, %c0_468] {strides = array<i32: 1, 2, 1>} : memref<18x18x128xf32, #tpu.memory_space<vmem>>, vector<2x8x128xf32>
    %592 = vector.shape_cast %591 : vector<2x8x128xf32> to vector<1x2x8x128xf32>
    %593 = vector.extract_strided_slice %592 {offsets = [0, 0, 0, 0], sizes = [1, 1, 8, 128], strides = [1, 1, 1, 1]} : vector<1x2x8x128xf32> to vector<1x1x8x128xf32>
    %594 = vector.shape_cast %593 : vector<1x1x8x128xf32> to vector<1x8x128xf32>
    %595 = vector.shape_cast %594 : vector<1x8x128xf32> to vector<8x128xf32>
    %596 = arith.truncf %595 : vector<8x128xf32> to vector<8x128xbf16>
    %c3_469 = arith.constant 3 : index
    %c2_470 = arith.constant 2 : index
    %c2_471 = arith.constant 2 : index
    %c0_472 = arith.constant 0 : index
    %c0_473 = arith.constant 0 : index
    %597 = vector.load %arg2[%c3_469, %c2_470, %c2_471, %c0_472, %c0_473] : memref<4x3x3x128x128xbf16, #tpu.memory_space<vmem>>, vector<1x1x1x128x128xbf16>
    %598 = vector.shape_cast %597 : vector<1x1x1x128x128xbf16> to vector<128x128xbf16>
    %cst_474 = arith.constant dense<0.000000e+00> : vector<8x128xf32>
    %599 = tpu.matmul %596, %598, %cst_474 {dimension_numbers = #tpu.dot_dimension_numbers<[1], [0], [0], [1], [0, 0, 1, 1], [], []>} : vector<8x128xbf16>, vector<128x128xbf16>, vector<8x128xf32> -> vector<8x128xf32>
    %600 = arith.addf %590, %599 : vector<8x128xf32>
    %c3_475 = arith.constant 3 : index
    %c0_476 = arith.constant 0 : index
    %c0_477 = arith.constant 0 : index
    %601 = vector.load %arg3[%c3_475, %c0_476, %c0_477] : memref<4x3x128xf32, #tpu.memory_space<vmem>>, vector<1x1x128xf32>
    %602 = vector.shape_cast %601 : vector<1x1x128xf32> to vector<1x128xf32>
    %603 = vector.broadcast %602 : vector<1x128xf32> to vector<8x128xf32>
    %604 = arith.addf %600, %603 : vector<8x128xf32>
    %cst_478 = arith.constant dense<0.000000e+00> : vector<8xf32>
    %605 = vector.multi_reduction <add>, %604, %cst_478 [1] : vector<8x128xf32> to vector<8xf32>
    %606 = vector.shape_cast %605 : vector<8xf32> to vector<8x1xf32>
    %cst_479 = arith.constant 3.125000e-02 : f32
    %607 = vector.broadcast %cst_479 : f32 to vector<8x1xf32>
    %608 = arith.mulf %606, %607 : vector<8x1xf32>
    %609 = arith.mulf %604, %604 : vector<8x128xf32>
    %cst_480 = arith.constant dense<0.000000e+00> : vector<8xf32>
    %610 = vector.multi_reduction <add>, %609, %cst_480 [1] : vector<8x128xf32> to vector<8xf32>
    %611 = vector.shape_cast %610 : vector<8xf32> to vector<8x1xf32>
    %cst_481 = arith.constant 3.125000e-02 : f32
    %612 = vector.broadcast %cst_481 : f32 to vector<8x1xf32>
    %613 = arith.mulf %611, %612 : vector<8x1xf32>
    %614 = vector.broadcast %608 : vector<8x1xf32> to vector<8x128xf32>
    %615 = arith.subf %604, %614 : vector<8x128xf32>
    %616 = arith.mulf %608, %608 : vector<8x1xf32>
    %617 = arith.subf %613, %616 : vector<8x1xf32>
    %cst_482 = arith.constant 9.99999997E-7 : f32
    %618 = vector.broadcast %cst_482 : f32 to vector<8x1xf32>
    %619 = arith.addf %617, %618 : vector<8x1xf32>
    %620 = math.rsqrt %619 : vector<8x1xf32>
    %621 = vector.broadcast %620 : vector<8x1xf32> to vector<8x128xf32>
    %622 = arith.mulf %615, %621 : vector<8x128xf32>
    %c3_483 = arith.constant 3 : index
    %c1_484 = arith.constant 1 : index
    %c0_485 = arith.constant 0 : index
    %623 = vector.load %arg3[%c3_483, %c1_484, %c0_485] : memref<4x3x128xf32, #tpu.memory_space<vmem>>, vector<1x1x128xf32>
    %624 = vector.shape_cast %623 : vector<1x1x128xf32> to vector<1x128xf32>
    %625 = vector.broadcast %624 : vector<1x128xf32> to vector<8x128xf32>
    %626 = arith.mulf %625, %622 : vector<8x128xf32>
    %c3_486 = arith.constant 3 : index
    %c2_487 = arith.constant 2 : index
    %c0_488 = arith.constant 0 : index
    %627 = vector.load %arg3[%c3_486, %c2_487, %c0_488] : memref<4x3x128xf32, #tpu.memory_space<vmem>>, vector<1x1x128xf32>
    %628 = vector.shape_cast %627 : vector<1x1x128xf32> to vector<1x128xf32>
    %629 = vector.broadcast %628 : vector<1x128xf32> to vector<8x128xf32>
    %630 = arith.addf %626, %629 : vector<8x128xf32>
    %cst_489 = arith.constant 5.000000e-01 : f32
    %631 = vector.broadcast %cst_489 : f32 to vector<8x128xf32>
    %632 = arith.mulf %631, %630 : vector<8x128xf32>
    %cst_490 = arith.constant 0.707106769 : f32
    %633 = vector.broadcast %cst_490 : f32 to vector<8x128xf32>
    %634 = arith.mulf %630, %633 : vector<8x128xf32>
    %635 = math.absf %634 : vector<8x128xf32>
    %cst_491 = arith.constant 0.327591091 : f32
    %636 = vector.broadcast %cst_491 : f32 to vector<8x128xf32>
    %637 = arith.mulf %636, %635 : vector<8x128xf32>
    %cst_492 = arith.constant 1.000000e+00 : f32
    %638 = vector.broadcast %cst_492 : f32 to vector<8x128xf32>
    %639 = arith.addf %638, %637 : vector<8x128xf32>
    %cst_493 = arith.constant 1.000000e+00 : f32
    %640 = vector.broadcast %cst_493 : f32 to vector<8x128xf32>
    %641 = arith.divf %640, %639 : vector<8x128xf32>
    %cst_494 = arith.constant 1.06140542 : f32
    %642 = vector.broadcast %cst_494 : f32 to vector<8x128xf32>
    %643 = arith.mulf %642, %641 : vector<8x128xf32>
    %cst_495 = arith.constant -1.45315206 : f32
    %644 = vector.broadcast %cst_495 : f32 to vector<8x128xf32>
    %645 = arith.addf %643, %644 : vector<8x128xf32>
    %646 = arith.mulf %645, %641 : vector<8x128xf32>
    %cst_496 = arith.constant 1.42141378 : f32
    %647 = vector.broadcast %cst_496 : f32 to vector<8x128xf32>
    %648 = arith.addf %646, %647 : vector<8x128xf32>
    %649 = arith.mulf %648, %641 : vector<8x128xf32>
    %cst_497 = arith.constant -0.284496725 : f32
    %650 = vector.broadcast %cst_497 : f32 to vector<8x128xf32>
    %651 = arith.addf %649, %650 : vector<8x128xf32>
    %652 = arith.mulf %651, %641 : vector<8x128xf32>
    %cst_498 = arith.constant 0.254829586 : f32
    %653 = vector.broadcast %cst_498 : f32 to vector<8x128xf32>
    %654 = arith.addf %652, %653 : vector<8x128xf32>
    %655 = arith.mulf %654, %641 : vector<8x128xf32>
    %cst_499 = arith.constant 0.000000e+00 : f32
    %656 = vector.broadcast %cst_499 : f32 to vector<8x128xf32>
    %657 = arith.subf %656, %635 : vector<8x128xf32>
    %658 = arith.mulf %657, %635 : vector<8x128xf32>
    %659 = math.exp %658 : vector<8x128xf32>
    %660 = arith.mulf %655, %659 : vector<8x128xf32>
    %cst_500 = arith.constant 1.000000e+00 : f32
    %661 = vector.broadcast %cst_500 : f32 to vector<8x128xf32>
    %662 = arith.subf %661, %660 : vector<8x128xf32>
    %cst_501 = arith.constant 0.000000e+00 : f32
    %663 = vector.broadcast %cst_501 : f32 to vector<8x128xf32>
    %664 = arith.cmpf oge, %634, %663 : vector<8x128xf32>
    %cst_502 = arith.constant 0.000000e+00 : f32
    %665 = vector.broadcast %cst_502 : f32 to vector<8x128xf32>
    %666 = arith.subf %665, %662 : vector<8x128xf32>
    %667 = arith.select %664, %662, %666 : vector<8x128xi1>, vector<8x128xf32>
    %cst_503 = arith.constant 1.000000e+00 : f32
    %668 = vector.broadcast %cst_503 : f32 to vector<8x128xf32>
    %669 = arith.addf %668, %667 : vector<8x128xf32>
    %670 = arith.mulf %632, %669 : vector<8x128xf32>
    %671 = arith.truncf %670 : vector<8x128xf32> to vector<8x128xbf16>
    %c0_504 = arith.constant 0 : index
    %c0_505 = arith.constant 0 : index
    %672 = vector.load %arg4[%c0_504, %c0_505] : memref<128x128xbf16, #tpu.memory_space<vmem>>, vector<128x128xbf16>
    %cst_506 = arith.constant dense<0.000000e+00> : vector<8x128xf32>
    %673 = tpu.matmul %671, %672, %cst_506 {dimension_numbers = #tpu.dot_dimension_numbers<[1], [0], [0], [1], [0, 0, 1, 1], [], []>} : vector<8x128xbf16>, vector<128x128xbf16>, vector<8x128xf32> -> vector<8x128xf32>
    %674 = vector.extract_strided_slice %673 {offsets = [0, 0], sizes = [1, 128], strides = [1, 1]} : vector<8x128xf32> to vector<1x128xf32>
    %c0_507 = arith.constant 0 : index
    %c0_508 = arith.constant 0 : index
    %675 = vector.load %arg5[%c0_507, %c0_508] : memref<1x128xf32, #tpu.memory_space<vmem>>, vector<1x128xf32>
    %676 = arith.addf %674, %675 : vector<1x128xf32>
    %677 = vector.shape_cast %676 : vector<1x128xf32> to vector<1x1x128xf32>
    %c0_509 = arith.constant 0 : index
    %c0_510 = arith.constant 0 : index
    %c0_511 = arith.constant 0 : index
    %678 = vector.load %arg6[%c0_509, %c0_510, %c0_511] : memref<1x1x128xf32, #tpu.memory_space<vmem>>, vector<1x1x128xf32>
    tpu.vector_store %arg6[%c0_509, %c0_510, %c0_511], %677 {strides = array<i32>} : memref<1x1x128xf32, #tpu.memory_space<vmem>>, vector<1x1x128xf32>,
    return
  }
  func.func @transform_0(%arg0: i32) -> (i32, i32, i32, i32) {
    %c0_i32 = arith.constant 0 : i32
    %c0_i32_0 = arith.constant 0 : i32
    %c0_i32_1 = arith.constant 0 : i32
    %c0_i32_2 = arith.constant 0 : i32
    return %arg0, %c0_i32, %c0_i32_0, %c0_i32_1 : i32, i32, i32, i32
  }
  func.func @transform_1(%arg0: i32) -> (i32, i32, i32, i32, i32) {
    %c0_i32 = arith.constant 0 : i32
    %c0_i32_0 = arith.constant 0 : i32
    %c0_i32_1 = arith.constant 0 : i32
    %c0_i32_2 = arith.constant 0 : i32
    %c0_i32_3 = arith.constant 0 : i32
    %c0_i32_4 = arith.constant 0 : i32
    return %c0_i32, %c0_i32_0, %c0_i32_1, %c0_i32_2, %c0_i32_3 : i32, i32, i32, i32, i32
  }
  func.func @transform_2(%arg0: i32) -> (i32, i32, i32) {
    %c0_i32 = arith.constant 0 : i32
    %c0_i32_0 = arith.constant 0 : i32
    %c0_i32_1 = arith.constant 0 : i32
    %c0_i32_2 = arith.constant 0 : i32
    return %c0_i32, %c0_i32_0, %c0_i32_1 : i32, i32, i32
  }
  func.func @transform_3(%arg0: i32) -> (i32, i32) {
    %c0_i32 = arith.constant 0 : i32
    %c0_i32_0 = arith.constant 0 : i32
    %c0_i32_1 = arith.constant 0 : i32
    return %c0_i32, %c0_i32_0 : i32, i32
  }
  func.func @transform_4(%arg0: i32) -> (i32, i32) {
    %c0_i32 = arith.constant 0 : i32
    %c0_i32_0 = arith.constant 0 : i32
    %c0_i32_1 = arith.constant 0 : i32
    return %c0_i32, %c0_i32_0 : i32, i32
  }
  func.func @transform_5(%arg0: i32) -> (i32, i32, i32) {
    %c0_i32 = arith.constant 0 : i32
    %c0_i32_0 = arith.constant 0 : i32
    %c0_i32_1 = arith.constant 0 : i32
    return %arg0, %c0_i32, %c0_i32_0 : i32, i32, i32
  }
}

</mosaic_0001>

<llo_original>
// kernel: conv_block_forward.1
$region0: #{conv_block_forward.1}
  #allocation0 [shape = 'u32[]', space=smem, size = 0x4, offset = 0x4, fixed_abs, tag = 'smem constant byte address 0x4 - core index']
  #allocation1 [shape = 'u32[72,128]{1,0:T(1,128)}', space=vmem, size = 0x9000, scoped, tag = 'internal scratch']
  #allocation2 [shape = 'f32[18,18,128]{2,1,0:T(8,128)}', space=vmem, size = 0x36000, scoped, tag = 'scratch operand']
  %s0 = inlined_call_operand.vmem [shape: f32[2,16,16,128], index: 0, kind: input, shape index: {}]
  %s1 = inlined_call_operand.vmem [shape: bf16[4,3,3,128,128], index: 1, kind: input, shape index: {}]
  %s2 = inlined_call_operand.vmem [shape: f32[4,3,128], index: 2, kind: input, shape index: {}]
  %s3 = inlined_call_operand.vmem [shape: bf16[128,128], index: 3, kind: input, shape index: {}]
  %s4 = inlined_call_operand.vmem [shape: f32[1,128], index: 4, kind: input, shape index: {}]
  %s5 = inlined_call_operand.hbm [shape: f32[2,1,128], index: 5, kind: output, shape index: {}]
  %s6 = sld [smem:[#allocation0]]
  $region53: #{conv_block_forward.1} parent=0
    _
  %s8 = ssub.s32 1, %s6
  %s9 = scalar_select 0, %s8, %s6
  $region1: #{conv_block_forward.1} parent=0
    #allocation3 [shape = 'u8[1024]{0}', space=vmem, size = 0x400, scoped, tag = 'output window, operand 0']
    #allocation4 [shape = 's32[2]{0}', space=sflag, size = 0x8, scoped, tag = 'scoped memory for conv_block_forward.1']
    %10 = vsyncpa [#allocation4], 0
    %s11 = scalar_lea.sflag [#allocation4], 1
    %12 = vsyncpa %s11, 0
    loop: start=0, step=1, limit=4
    $region2: #{conv_block_forward.1} parent=1 // loop_pre_header
      _
    $region3: #{conv_block_forward.1} parent=1 // loop_header
      %s14 = sphi 0, %s18
      %p15 = scmp.ge.s32.totalorder %s14, 4
      %s24 = sphi 0, %s26
      %s27 = sphi 0, %s24
      %s28 = sphi 0, %s27
      %s44 = sphi 0, %s28
      %s48 = sphi 0, %s48
      %s50 = sphi 0, %s48
      %s51 = sphi 0, %s50
      %s65 = sphi 0, %s51
      %s69 = sphi 0, %s69
      %s71 = sphi 0, %s69
      %s72 = sphi 0, %s71
      %s86 = sphi 0, %s72
      %s90 = sphi 0, %s90
      %s92 = sphi 0, %s90
      %s93 = sphi 0, %s92
      %s107 = sphi 0, %s93
      %s111 = sphi 0, %s111
      %s113 = sphi 0, %s111
      %s114 = sphi 0, %s113
      %s128 = sphi 0, %s114
      %s134 = sphi 0, %s136
      %s137 = sphi 0, %s134
      %s138 = sphi 0, %s137
      %s154 = sphi 0, %s138
    $region4: #{conv_block_forward.1} parent=1 // loop_header_branch
      %17 = sbr.rel (%p15) target = $region8
    $region5: #{conv_block_forward.1} parent=1 // loop_body
      %s19 = ssub.s32 %s14, 1
      %s20 = ssub.s32 %s14, 2
      %s21 = sadd.s32 %s14, 1
      %s22 = ssub.s32 %s14, %s21
      %p23 = scmp.eq.s32.totalorder %s22, 0
      %s25 = sadd.s32 %s24, 1
      %s26 = scalar_select %p23, %s24, %s25
      %p29 = pneg %p23
      %p30 = scmp.eq.s32.totalorder %s14, 1
      %p31 = por %p29, %p30
      %p32 = scmp.ne.s32.totalorder %s24, %s27
      %p33 = scmp.eq.s32.totalorder %s14, 0
      %p34 = por %p32, %p33
      %p35 = scmp.ne.s32.totalorder %s24, %s27
      %p36 = scmp.eq.s32.totalorder %s19, 1
      %p37 = por %p35, %p36
      %p38 = scmp.ne.s32.totalorder %s27, %s28
      %p39 = scmp.eq.s32.totalorder %s19, 0
      %p40 = por %p38, %p39
      %p41 = scmp.ne.s32.totalorder %s27, %s28
      %p42 = scmp.eq.s32.totalorder %s20, 1
      %p43 = por %p41, %p42
      %p45 = scmp.ne.s32.totalorder %s28, %s44
      %p46 = scmp.eq.s32.totalorder %s20, 0
      %p47 = por %p45, %p46
      %s49 = sadd.s32 %s48, 1
      %p52 = scmp.eq.s32.totalorder %s14, 1
      %p53 = scmp.ne.s32.totalorder %s48, %s50
      %p54 = scmp.eq.s32.totalorder %s14, 0
      %p55 = por %p53, %p54
      %p56 = scmp.ne.s32.totalorder %s48, %s50
      %p57 = scmp.eq.s32.totalorder %s19, 1
      %p58 = por %p56, %p57
      %p59 = scmp.ne.s32.totalorder %s50, %s51
      %p60 = scmp.eq.s32.totalorder %s19, 0
      %p61 = por %p59, %p60
      %p62 = scmp.ne.s32.totalorder %s50, %s51
      %p63 = scmp.eq.s32.totalorder %s20, 1
      %p64 = por %p62, %p63
      %p66 = scmp.ne.s32.totalorder %s51, %s65
      %p67 = scmp.eq.s32.totalorder %s20, 0
      %p68 = por %p66, %p67
      %s70 = sadd.s32 %s69, 1
      %p73 = scmp.eq.s32.totalorder %s14, 1
      %p74 = scmp.ne.s32.totalorder %s69, %s71
      %p75 = scmp.eq.s32.totalorder %s14, 0
      %p76 = por %p74, %p75
      %p77 = scmp.ne.s32.totalorder %s69, %s71
      %p78 = scmp.eq.s32.totalorder %s19, 1
      %p79 = por %p77, %p78
      %p80 = scmp.ne.s32.totalorder %s71, %s72
      %p81 = scmp.eq.s32.totalorder %s19, 0
      %p82 = por %p80, %p81
      %p83 = scmp.ne.s32.totalorder %s71, %s72
      %p84 = scmp.eq.s32.totalorder %s20, 1
      %p85 = por %p83, %p84
      %p87 = scmp.ne.s32.totalorder %s72, %s86
      %p88 = scmp.eq.s32.totalorder %s20, 0
      %p89 = por %p87, %p88
      %s91 = sadd.s32 %s90, 1
      %p94 = scmp.eq.s32.totalorder %s14, 1
      %p95 = scmp.ne.s32.totalorder %s90, %s92
      %p96 = scmp.eq.s32.totalorder %s14, 0
      %p97 = por %p95, %p96
      %p98 = scmp.ne.s32.totalorder %s90, %s92
      %p99 = scmp.eq.s32.totalorder %s19, 1
      %p100 = por %p98, %p99
      %p101 = scmp.ne.s32.totalorder %s92, %s93
      %p102 = scmp.eq.s32.totalorder %s19, 0
      %p103 = por %p101, %p102
      %p104 = scmp.ne.s32.totalorder %s92, %s93
      %p105 = scmp.eq.s32.totalorder %s20, 1
      %p106 = por %p104, %p105
      %p108 = scmp.ne.s32.totalorder %s93, %s107
      %p109 = scmp.eq.s32.totalorder %s20, 0
      %p110 = por %p108, %p109
      %s112 = sadd.s32 %s111, 1
      %p115 = scmp.eq.s32.totalorder %s14, 1
      %p116 = scmp.ne.s32.totalorder %s111, %s113
      %p117 = scmp.eq.s32.totalorder %s14, 0
      %p118 = por %p116, %p117
      %p119 = scmp.ne.s32.totalorder %s111, %s113
      %p120 = scmp.eq.s32.totalorder %s19, 1
      %p121 = por %p119, %p120
      %p122 = scmp.ne.s32.totalorder %s113, %s114
      %p123 = scmp.eq.s32.totalorder %s19, 0
      %p124 = por %p122, %p123
      %p125 = scmp.ne.s32.totalorder %s113, %s114
      %p126 = scmp.eq.s32.totalorder %s20, 1
      %p127 = por %p125, %p126
      %p129 = scmp.ne.s32.totalorder %s114, %s128
      %p130 = scmp.eq.s32.totalorder %s20, 0
      %p131 = por %p129, %p130
      %s132 = ssub.s32 %s14, %s21
      %p133 = scmp.eq.s32.totalorder %s132, 0
      %s135 = sadd.s32 %s134, 1
      %s136 = scalar_select %p133, %s134, %s135
      %p139 = pneg %p133
      %p140 = scmp.eq.s32.totalorder %s14, 1
      %p141 = por %p139, %p140
      %p142 = scmp.ne.s32.totalorder %s134, %s137
      %p143 = scmp.eq.s32.totalorder %s14, 0
      %p144 = por %p142, %p143
      %p145 = scmp.ne.s32.totalorder %s134, %s137
      %p146 = scmp.eq.s32.totalorder %s19, 1
      %p147 = por %p145, %p146
      %p148 = scmp.ne.s32.totalorder %s137, %s138
      %p149 = scmp.eq.s32.totalorder %s19, 0
      %p150 = por %p148, %p149
      %p151 = scmp.ne.s32.totalorder %s137, %s138
      %p152 = scmp.eq.s32.totalorder %s20, 1
      %p153 = por %p151, %p152
      %p155 = scmp.ne.s32.totalorder %s138, %s154
      %p156 = scmp.eq.s32.totalorder %s20, 0
      %p157 = por %p155, %p156
      %p158 = scmp.le.s32.totalorder 1, %s14
      %p159 = scmp.lt.s32.totalorder %s14, 3
      %p160 = pnand %p158, %p159
      %p161 = pneg %p160
      // Predicated region
      $region9: #{conv_block_forward.1} parent=5 // pred_check
        _
      $region10: #{conv_block_forward.1} parent=5 // pred_check_branch
        %163 = sbr.rel (%p160) target = $region12
      $region11: #{conv_block_forward.1} parent=5 // pred_region
        %s164 = ssub.s32 %s14, 1
        // Predicated region
        $region13: #{conv_block_forward.1} parent=11 // pred_check
          %p165 = pneg %p61
        $region14: #{conv_block_forward.1} parent=11 // pred_check_branch
          %167 = sbr.rel (%p165) target = $region16
        $region15: #{conv_block_forward.1} parent=11 // pred_region
          _
        $region16: #{conv_block_forward.1} parent=11 // pred_fallthru
          _
        // Predicated region
        $region17: #{conv_block_forward.1} parent=11 // pred_check
          %p168 = pneg %p82
        $region18: #{conv_block_forward.1} parent=11 // pred_check_branch
          %170 = sbr.rel (%p168) target = $region20
        $region19: #{conv_block_forward.1} parent=11 // pred_region
          _
        $region20: #{conv_block_forward.1} parent=11 // pred_fallthru
          _
        // Predicated region
        $region21: #{conv_block_forward.1} parent=11 // pred_check
          %p171 = pneg %p103
        $region22: #{conv_block_forward.1} parent=11 // pred_check_branch
          %173 = sbr.rel (%p171) target = $region24
        $region23: #{conv_block_forward.1} parent=11 // pred_region
          _
        $region24: #{conv_block_forward.1} parent=11 // pred_fallthru
          _
        // Predicated region
        $region25: #{conv_block_forward.1} parent=11 // pred_check
          %p174 = pneg %p124
        $region26: #{conv_block_forward.1} parent=11 // pred_check_branch
          %176 = sbr.rel (%p174) target = $region28
        $region27: #{conv_block_forward.1} parent=11 // pred_region
          _
        $region28: #{conv_block_forward.1} parent=11 // pred_fallthru
          _
      $region12: #{conv_block_forward.1} parent=5 // pred_fallthru
        _
      %p177 = scmp.lt.s32.totalorder %s14, 2
      // Predicated region
      $region29: #{conv_block_forward.1} parent=5 // pred_check
        %p178 = pneg %p177
      $region30: #{conv_block_forward.1} parent=5 // pred_check_branch
        %180 = sbr.rel (%p178) target = $region32
      $region31: #{conv_block_forward.1} parent=5 // pred_region
        // Predicated region
        $region33: #{conv_block_forward.1} parent=31 // pred_check
          %p181 = pneg %p34
        $region34: #{conv_block_forward.1} parent=31 // pred_check_branch
          %183 = sbr.rel (%p181) target = $region36
        $region35: #{conv_block_forward.1} parent=31 // pred_region
          %p184 = scmp.lt.s32.totalorder %s14, 1
          %s185 = scalar_select %p184, %s14, 1
          %s186 = smul.addr %s185, 32
          %s187 = smul.addr %s186, 8
          %s188 = scalar_lea.vmem %s0, %s187
        $region36: #{conv_block_forward.1} parent=31 // pred_fallthru
          _
      $region32: #{conv_block_forward.1} parent=5 // pred_fallthru
        _
      %p189 = scmp.le.s32.totalorder 1, %s14
      %p190 = scmp.lt.s32.totalorder %s14, 3
      %p191 = pnand %p189, %p190
      %p192 = pneg %p191
      // Predicated region
      $region37: #{conv_block_forward.1} parent=5 // pred_check
        _
      $region38: #{conv_block_forward.1} parent=5 // pred_check_branch
        %194 = sbr.rel (%p191) target = $region40
      $region39: #{conv_block_forward.1} parent=5 // pred_region
        %s195 = ssub.s32 %s14, 1
        %p196 = scmp.lt.s32.totalorder %s19, 1
        %s197 = scalar_select %p196, %s19, 1
        %s198 = smul.addr %s197, 32
        %s199 = smul.addr %s198, 8
        %s200 = scalar_lea.vmem %s0, %s199
        %p201 = pneg %p40
        %p202 = pneg %p37
        %p203 = pneg %p61
        %p204 = pneg %p58
        %p205 = pneg %p82
        %p206 = pneg %p79
        %p207 = pneg %p103
        %p208 = pneg %p100
        %p209 = pneg %p124
        %p210 = pneg %p121
        %p211 = pneg %p150
        %p212 = pneg %p147
        %s213 = sand.u32 %s137, 1
        %s214 = scalar_lea.sflag [#allocation4], %s213
        %s215 = sand.u32 %s137, 1
        %s216 = scalar_lea.vmem [#allocation3], %s215
        %p217 = scmp.lt.s32.totalorder %s19, 1
        %s218 = scalar_select %p217, %s19, 1
        %s219 = smul.addr %s218, 32
        %s220 = smul.addr %s219, 8
        %s221 = scalar_lea.vmem %s0, %s220
        %v222 = vld [vmem:[%s221] sm:$0xff]
        %v223 = vld [vmem:[%s221 + $0x8] sm:$0xff]
        %v224 = vld [vmem:[%s221 + $0x10] sm:$0xff]
        %v225 = vld [vmem:[%s221 + $0x18] sm:$0xff]
        %v226 = vld [vmem:[%s221 + $0x20] sm:$0xff]
        %v227 = vld [vmem:[%s221 + $0x28] sm:$0xff]
        %v228 = vld [vmem:[%s221 + $0x30] sm:$0xff]
        %v229 = vld [vmem:[%s221 + $0x38] sm:$0xff]
        %v230 = vld [vmem:[%s221 + $0x40] sm:$0xff]
        %v231 = vld [vmem:[%s221 + $0x48] sm:$0xff]
        %v232 = vld [vmem:[%s221 + $0x50] sm:$0xff]
        %v233 = vld [vmem:[%s221 + $0x58] sm:$0xff]
        %v234 = vld [vmem:[%s221 + $0x60] sm:$0xff]
        %v235 = vld [vmem:[%s221 + $0x68] sm:$0xff]
        %v236 = vld [vmem:[%s221 + $0x70] sm:$0xff]
        %v237 = vld [vmem:[%s221 + $0x78] sm:$0xff]
        %v238 = vld [vmem:[%s221 + $0x80] sm:$0xff]
        %v239 = vld [vmem:[%s221 + $0x88] sm:$0xff]
        %v240 = vld [vmem:[%s221 + $0x90] sm:$0xff]
        %v241 = vld [vmem:[%s221 + $0x98] sm:$0xff]
        %v242 = vld [vmem:[%s221 + $0xa0] sm:$0xff]
        %v243 = vld [vmem:[%s221 + $0xa8] sm:$0xff]
        %v244 = vld [vmem:[%s221 + $0xb0] sm:$0xff]
        %v245 = vld [vmem:[%s221 + $0xb8] sm:$0xff]
        %v246 = vld [vmem:[%s221 + $0xc0] sm:$0xff]
        %v247 = vld [vmem:[%s221 + $0xc8] sm:$0xff]
        %v248 = vld [vmem:[%s221 + $0xd0] sm:$0xff]
        %v249 = vld [vmem:[%s221 + $0xd8] sm:$0xff]
        %v250 = vld [vmem:[%s221 + $0xe0] sm:$0xff]
        %v251 = vld [vmem:[%s221 + $0xe8] sm:$0xff]
        %v252 = vld [vmem:[%s221 + $0xf0] sm:$0xff]
        %v253 = vld [vmem:[%s221 + $0xf8] sm:$0xff]
        %254 = vst [vmem:[#allocation2] sm:$0xff] 0.0
        %255 = vst [vmem:[#allocation2 + $0x8] sm:$0xff] 0.0
        %256 = vst [vmem:[#allocation2 + $0x10] sm:$0x3] 0.0
        %s257 = scalar_lea.vmem [#allocation2], 408
        %258 = vst [vmem:[%s257] sm:$0xff] 0.0
        %259 = vst [vmem:[%s257 + $0x8] sm:$0xff] 0.0
        %260 = vst [vmem:[%s257 + $0x10] sm:$0x3] 0.0
        %s261 = scalar_lea.vmem [#allocation2], 24
        %262 = vst [vmem:[%s261] sm:$0x1] 0.0
        %263 = vst [vmem:[%s261 + $0x18] sm:$0x1] 0.0
        %264 = vst [vmem:[%s261 + $0x30] sm:$0x1] 0.0
        %265 = vst [vmem:[%s261 + $0x48] sm:$0x1] 0.0
        %266 = vst [vmem:[%s261 + $0x60] sm:$0x1] 0.0
        %267 = vst [vmem:[%s261 + $0x78] sm:$0x1] 0.0
        %268 = vst [vmem:[%s261 + $0x90] sm:$0x1] 0.0
        %269 = vst [vmem:[%s261 + $0xa8] sm:$0x1] 0.0
        %270 = vst [vmem:[%s261 + $0xc0] sm:$0x1] 0.0
        %271 = vst [vmem:[%s261 + $0xd8] sm:$0x1] 0.0
        %272 = vst [vmem:[%s261 + $0xf0] sm:$0x1] 0.0
        %273 = vst [vmem:[%s261 + $0x108] sm:$0x1] 0.0
        %274 = vst [vmem:[%s261 + $0x120] sm:$0x1] 0.0
        %275 = vst [vmem:[%s261 + $0x138] sm:$0x1] 0.0
        %276 = vst [vmem:[%s261 + $0x150] sm:$0x1] 0.0
        %277 = vst [vmem:[%s261 + $0x168] sm:$0x1] 0.0
        %278 = vst [vmem:[%s261 + $0x11] sm:$0x1] 0.0
        %279 = vst [vmem:[%s261 + $0x29] sm:$0x1] 0.0
        %280 = vst [vmem:[%s261 + $0x41] sm:$0x1] 0.0
        %281 = vst [vmem:[%s261 + $0x59] sm:$0x1] 0.0
        %282 = vst [vmem:[%s261 + $0x71] sm:$0x1] 0.0
        %283 = vst [vmem:[%s261 + $0x89] sm:$0x1] 0.0
        %284 = vst [vmem:[%s261 + $0xa1] sm:$0x1] 0.0
        %285 = vst [vmem:[%s261 + $0xb9] sm:$0x1] 0.0
        %286 = vst [vmem:[%s261 + $0xd1] sm:$0x1] 0.0
        %287 = vst [vmem:[%s261 + $0xe9] sm:$0x1] 0.0
        %288 = vst [vmem:[%s261 + $0x101] sm:$0x1] 0.0
        %289 = vst [vmem:[%s261 + $0x119] sm:$0x1] 0.0
        %290 = vst [vmem:[%s261 + $0x131] sm:$0x1] 0.0
        %291 = vst [vmem:[%s261 + $0x149] sm:$0x1] 0.0
        %292 = vst [vmem:[%s261 + $0x161] sm:$0x1] 0.0
        %293 = vst [vmem:[%s261 + $0x179] sm:$0x1] 0.0
        %294 = vst [vmem:[%s261 + $0x1] sm:$0xff] %v222
        %295 = vst [vmem:[%s261 + $0x9] sm:$0xff] %v223
        %296 = vst [vmem:[%s261 + $0x19] sm:$0xff] %v224
        %297 = vst [vmem:[%s261 + $0x21] sm:$0xff] %v225
        %298 = vst [vmem:[%s261 + $0x31] sm:$0xff] %v226
        %299 = vst [vmem:[%s261 + $0x39] sm:$0xff] %v227
        %300 = vst [vmem:[%s261 + $0x49] sm:$0xff] %v228
        %301 = vst [vmem:[%s261 + $0x51] sm:$0xff] %v229
        %302 = vst [vmem:[%s261 + $0x61] sm:$0xff] %v230
        %303 = vst [vmem:[%s261 + $0x69] sm:$0xff] %v231
        %304 = vst [vmem:[%s261 + $0x79] sm:$0xff] %v232
        %305 = vst [vmem:[%s261 + $0x81] sm:$0xff] %v233
        %306 = vst [vmem:[%s261 + $0x91] sm:$0xff] %v234
        %307 = vst [vmem:[%s261 + $0x99] sm:$0xff] %v235
        %308 = vst [vmem:[%s261 + $0xa9] sm:$0xff] %v236
        %309 = vst [vmem:[%s261 + $0xb1] sm:$0xff] %v237
        %310 = vst [vmem:[%s261 + $0xc1] sm:$0xff] %v238
        %311 = vst [vmem:[%s261 + $0xc9] sm:$0xff] %v239
        %312 = vst [vmem:[%s261 + $0xd9] sm:$0xff] %v240
        %313 = vst [vmem:[%s261 + $0xe1] sm:$0xff] %v241
        %314 = vst [vmem:[%s261 + $0xf1] sm:$0xff] %v242
        %315 = vst [vmem:[%s261 + $0xf9] sm:$0xff] %v243
        %316 = vst [vmem:[%s261 + $0x109] sm:$0xff] %v244
        %317 = vst [vmem:[%s261 + $0x111] sm:$0xff] %v245
        %318 = vst [vmem:[%s261 + $0x121] sm:$0xff] %v246
        %319 = vst [vmem:[%s261 + $0x129] sm:$0xff] %v247
        %320 = vst [vmem:[%s261 + $0x139] sm:$0xff] %v248
        %321 = vst [vmem:[%s261 + $0x141] sm:$0xff] %v249
        %322 = vst [vmem:[%s261 + $0x151] sm:$0xff] %v250
        %323 = vst [vmem:[%s261 + $0x159] sm:$0xff] %v251
        %324 = vst [vmem:[%s261 + $0x169] sm:$0xff] %v252
        %325 = vst [vmem:[%s261 + $0x171] sm:$0xff] %v253
        %v326 = vld [vmem:[#allocation2] ss:$2 sm:$0xff]
        %s327 = scalar_lea.vmem [#allocation2], 48
        %v328 = vld [vmem:[%s327] ss:$2 sm:$0xff]
        %s329 = scalar_lea.vmem [#allocation2], 96
        %v330 = vld [vmem:[%s329] ss:$2 sm:$0xff]
        %s331 = scalar_lea.vmem [#allocation2], 144
        %v332 = vld [vmem:[%s331] ss:$2 sm:$0xff]
        %s333 = scalar_lea.vmem [#allocation2], 192
        %v334 = vld [vmem:[%s333] ss:$2 sm:$0xff]
        %s335 = scalar_lea.vmem [#allocation2], 240
        %v336 = vld [vmem:[%s335] ss:$2 sm:$0xff]
        %s337 = scalar_lea.vmem [#allocation2], 288
        %v338 = vld [vmem:[%s337] ss:$2 sm:$0xff]
        %s339 = scalar_lea.vmem [#allocation2], 336
        %v340 = vld [vmem:[%s339] ss:$2 sm:$0xff]
        %v341 = vpack.c.bf16 %v328, %v326
        %v342 = vpack.c.bf16 %v332, %v330
        %v343 = vpack.c.bf16 %v336, %v334
        %v344 = vpack.c.bf16 %v340, %v338
        %v345 = vld [vmem:[%s1] sm:$0xf]
        %v346 = vld [vmem:[%s1 + $0x4] sm:$0xf]
        %v347 = vld [vmem:[%s1 + $0x8] sm:$0xf]
        %v348 = vld [vmem:[%s1 + $0xc] sm:$0xf]
        %v349 = vld [vmem:[%s1 + $0x10] sm:$0xf]
        %v350 = vld [vmem:[%s1 + $0x14] sm:$0xf]
        %v351 = vld [vmem:[%s1 + $0x18] sm:$0xf]
        %v352 = vld [vmem:[%s1 + $0x1c] sm:$0xf]
        %v353 = vld [vmem:[%s1 + $0x20] sm:$0xf]
        %v354 = vld [vmem:[%s1 + $0x24] sm:$0xf]
        %v355 = vld [vmem:[%s1 + $0x28] sm:$0xf]
        %v356 = vld [vmem:[%s1 + $0x2c] sm:$0xf]
        %v357 = vld [vmem:[%s1 + $0x30] sm:$0xf]
        %v358 = vld [vmem:[%s1 + $0x34] sm:$0xf]
        %v359 = vld [vmem:[%s1 + $0x38] sm:$0xf]
        %v360 = vld [vmem:[%s1 + $0x3c] sm:$0xf]
        %s361 = scalar_lea.vmem [#allocation2], 1
        %v362 = vld [vmem:[%s361] ss:$2 sm:$0xff]
        %s363 = scalar_lea.vmem [#allocation2], 49
        %v364 = vld [vmem:[%s363] ss:$2 sm:$0xff]
        %s365 = scalar_lea.vmem [#allocation2], 97
        %v366 = vld [vmem:[%s365] ss:$2 sm:$0xff]
        %s367 = scalar_lea.vmem [#allocation2], 145
        %v368 = vld [vmem:[%s367] ss:$2 sm:$0xff]
        %s369 = scalar_lea.vmem [#allocation2], 193
        %v370 = vld [vmem:[%s369] ss:$2 sm:$0xff]
        %s371 = scalar_lea.vmem [#allocation2], 241
        %v372 = vld [vmem:[%s371] ss:$2 sm:$0xff]
        %s373 = scalar_lea.vmem [#allocation2], 289
        %v374 = vld [vmem:[%s373] ss:$2 sm:$0xff]
        %s375 = scalar_lea.vmem [#allocation2], 337
        %v376 = vld [vmem:[%s375] ss:$2 sm:$0xff]
        %v377 = vpack.c.bf16 %v364, %v362
        %v378 = vpack.c.bf16 %v368, %v366
        %v379 = vpack.c.bf16 %v372, %v370
        %v380 = vpack.c.bf16 %v376, %v374
        %s381 = scalar_lea.vmem %s1, 64
        %v382 = vld [vmem:[%s381] sm:$0xf]
        %v383 = vld [vmem:[%s381 + $0x4] sm:$0xf]
        %v384 = vld [vmem:[%s381 + $0x8] sm:$0xf]
        %v385 = vld [vmem:[%s381 + $0xc] sm:$0xf]
        %v386 = vld [vmem:[%s381 + $0x10] sm:$0xf]
        %v387 = vld [vmem:[%s381 + $0x14] sm:$0xf]
        %v388 = vld [vmem:[%s381 + $0x18] sm:$0xf]
        %v389 = vld [vmem:[%s381 + $0x1c] sm:$0xf]
        %v390 = vld [vmem:[%s381 + $0x20] sm:$0xf]
        %v391 = vld [vmem:[%s381 + $0x24] sm:$0xf]
        %v392 = vld [vmem:[%s381 + $0x28] sm:$0xf]
        %v393 = vld [vmem:[%s381 + $0x2c] sm:$0xf]
        %v394 = vld [vmem:[%s381 + $0x30] sm:$0xf]
        %v395 = vld [vmem:[%s381 + $0x34] sm:$0xf]
        %v396 = vld [vmem:[%s381 + $0x38] sm:$0xf]
        %v397 = vld [vmem:[%s381 + $0x3c] sm:$0xf]
        %v414 = vunpack.c.l.b16 %v382
        %v415 = vunpack.c.l.b16 %v383
        %v416 = vunpack.c.l.b16 %v384
        %v417 = vunpack.c.l.b16 %v385
        %v418 = vunpack.c.l.b16 %v386
        %v419 = vunpack.c.l.b16 %v387
        %v420 = vunpack.c.l.b16 %v388
        %v421 = vunpack.c.l.b16 %v389
        %v422 = vunpack.c.l.b16 %v390
        %v423 = vunpack.c.l.b16 %v391
        %v424 = vunpack.c.l.b16 %v392
        %v425 = vunpack.c.l.b16 %v393
        %v426 = vunpack.c.l.b16 %v394
        %v427 = vunpack.c.l.b16 %v395
        %v428 = vunpack.c.l.b16 %v396
        %v429 = vunpack.c.l.b16 %v397
        %v430 = vpack.c.b16 %v415, %v414
        %v431 = vpack.c.b16 %v417, %v416
        %v432 = vpack.c.b16 %v419, %v418
        %v433 = vpack.c.b16 %v421, %v420
        %v434 = vpack.c.b16 %v423, %v422
        %v435 = vpack.c.b16 %v425, %v424
        %v436 = vpack.c.b16 %v427, %v426
        %v437 = vpack.c.b16 %v429, %v428
        %446 = vmatpush.bf16.msra.mxu0 %v437
        %447 = vmatpush.bf16.msra.mxu0 %v436
        %448 = vmatpush.bf16.msra.mxu0 %v435
        %449 = vmatpush.bf16.msra.mxu0 %v434
        %450 = vmatpush.bf16.msra.mxu0 %v433
        %451 = vmatpush.bf16.msra.mxu0 %v432
        %452 = vmatpush.bf16.msra.mxu0 %v431
        %453 = vmatpush.bf16.msra.mxu0 %v430
        %454 = vmatmul.bf16.gmra.mxu0 %v377
        %v455 = vpop.f32.mrf.mxu0
        %v456 = vadd.f32 0.0, %v455
        %v457 = vpop.f32.mrf.mxu0
        %v458 = vadd.f32 0.0, %v457
        %459 = vmatmul.bf16.gmra.mxu0 %v378
        %v460 = vpop.f32.mrf.mxu0
        %v461 = vadd.f32 0.0, %v460
        %v462 = vpop.f32.mrf.mxu0
        %v463 = vadd.f32 0.0, %v462
        %464 = vmatmul.bf16.gmra.mxu0 %v379
        %v465 = vpop.f32.mrf.mxu0
        %v466 = vadd.f32 0.0, %v465
        %v467 = vpop.f32.mrf.mxu0
        %v468 = vadd.f32 0.0, %v467
        %469 = vmatmul.bf16.gmra.mxu0 %v380
        %v470 = vpop.f32.mrf.mxu0
        %v471 = vadd.f32 0.0, %v470
        %v472 = vpop.f32.mrf.mxu0
        %v473 = vadd.f32 0.0, %v472
        %474 = vdwg.mxu0
        %v491 = vunpack.c.l.b16 %v345
        %v492 = vunpack.c.l.b16 %v346
        %v493 = vunpack.c.l.b16 %v347
        %v494 = vunpack.c.l.b16 %v348
        %v495 = vunpack.c.l.b16 %v349
        %v496 = vunpack.c.l.b16 %v350
        %v497 = vunpack.c.l.b16 %v351
        %v498 = vunpack.c.l.b16 %v352
        %v499 = vunpack.c.l.b16 %v353
        %v500 = vunpack.c.l.b16 %v354
        %v501 = vunpack.c.l.b16 %v355
        %v502 = vunpack.c.l.b16 %v356
        %v503 = vunpack.c.l.b16 %v357
        %v504 = vunpack.c.l.b16 %v358
        %v505 = vunpack.c.l.b16 %v359
        %v506 = vunpack.c.l.b16 %v360
        %v507 = vpack.c.b16 %v492, %v491
        %v508 = vpack.c.b16 %v494, %v493
        %v509 = vpack.c.b16 %v496, %v495
        %v510 = vpack.c.b16 %v498, %v497
        %v511 = vpack.c.b16 %v500, %v499
        %v512 = vpack.c.b16 %v502, %v501
        %v513 = vpack.c.b16 %v504, %v503
        %v514 = vpack.c.b16 %v506, %v505
        %523 = vmatpush.bf16.msra.mxu0 %v514
        %524 = vmatpush.bf16.msra.mxu0 %v513
        %525 = vmatpush.bf16.msra.mxu0 %v512
        %526 = vmatpush.bf16.msra.mxu0 %v511
        %527 = vmatpush.bf16.msra.mxu0 %v510
        %528 = vmatpush.bf16.msra.mxu0 %v509
        %529 = vmatpush.bf16.msra.mxu0 %v508
        %530 = vmatpush.bf16.msra.mxu0 %v507
        %531 = vmatmul.bf16.gmra.mxu0 %v341
        %v532 = vpop.f32.mrf.mxu0
        %v533 = vadd.f32 %v456, %v532
        %v534 = vpop.f32.mrf.mxu0
        %v535 = vadd.f32 %v458, %v534
        %536 = vmatmul.bf16.gmra.mxu0 %v342
        %v537 = vpop.f32.mrf.mxu0
        %v538 = vadd.f32 %v461, %v537
        %v539 = vpop.f32.mrf.mxu0
        %v540 = vadd.f32 %v463, %v539
        %541 = vmatmul.bf16.gmra.mxu0 %v343
        %v542 = vpop.f32.mrf.mxu0
        %v543 = vadd.f32 %v466, %v542
        %v544 = vpop.f32.mrf.mxu0
        %v545 = vadd.f32 %v468, %v544
        %546 = vmatmul.bf16.gmra.mxu0 %v344
        %v547 = vpop.f32.mrf.mxu0
        %v548 = vadd.f32 %v471, %v547
        %v549 = vpop.f32.mrf.mxu0
        %v550 = vadd.f32 %v473, %v549
        %551 = vdwg.mxu0
        %s552 = scalar_lea.vmem [#allocation2], 2
        %v553 = vld [vmem:[%s552] ss:$2 sm:$0xff]
        %s554 = scalar_lea.vmem [#allocation2], 50
        %v555 = vld [vmem:[%s554] ss:$2 sm:$0xff]
        %s556 = scalar_lea.vmem [#allocation2], 98
        %v557 = vld [vmem:[%s556] ss:$2 sm:$0xff]
        %s558 = scalar_lea.vmem [#allocation2], 146
        %v559 = vld [vmem:[%s558] ss:$2 sm:$0xff]
        %s560 = scalar_lea.vmem [#allocation2], 194
        %v561 = vld [vmem:[%s560] ss:$2 sm:$0xff]
        %s562 = scalar_lea.vmem [#allocation2], 242
        %v563 = vld [vmem:[%s562] ss:$2 sm:$0xff]
        %s564 = scalar_lea.vmem [#allocation2], 290
        %v565 = vld [vmem:[%s564] ss:$2 sm:$0xff]
        %s566 = scalar_lea.vmem [#allocation2], 338
        %v567 = vld [vmem:[%s566] ss:$2 sm:$0xff]
        %v568 = vpack.c.bf16 %v555, %v553
        %v569 = vpack.c.bf16 %v559, %v557
        %v570 = vpack.c.bf16 %v563, %v561
        %v571 = vpack.c.bf16 %v567, %v565
        %s572 = scalar_lea.vmem %s1, 128
        %v573 = vld [vmem:[%s572] sm:$0xf]
        %v574 = vld [vmem:[%s572 + $0x4] sm:$0xf]
        %v575 = vld [vmem:[%s572 + $0x8] sm:$0xf]
        %v576 = vld [vmem:[%s572 + $0xc] sm:$0xf]
        %v577 = vld [vmem:[%s572 + $0x10] sm:$0xf]
        %v578 = vld [vmem:[%s572 + $0x14] sm:$0xf]
        %v579 = vld [vmem:[%s572 + $0x18] sm:$0xf]
        %v580 = vld [vmem:[%s572 + $0x1c] sm:$0xf]
        %v581 = vld [vmem:[%s572 + $0x20] sm:$0xf]
        %v582 = vld [vmem:[%s572 + $0x24] sm:$0xf]
        %v583 = vld [vmem:[%s572 + $0x28] sm:$0xf]
        %v584 = vld [vmem:[%s572 + $0x2c] sm:$0xf]
        %v585 = vld [vmem:[%s572 + $0x30] sm:$0xf]
        %v586 = vld [vmem:[%s572 + $0x34] sm:$0xf]
        %v587 = vld [vmem:[%s572 + $0x38] sm:$0xf]
        %v588 = vld [vmem:[%s572 + $0x3c] sm:$0xf]
        %v605 = vunpack.c.l.b16 %v573
        %v606 = vunpack.c.l.b16 %v574
        %v607 = vunpack.c.l.b16 %v575
        %v608 = vunpack.c.l.b16 %v576
        %v609 = vunpack.c.l.b16 %v577
        %v610 = vunpack.c.l.b16 %v578
        %v611 = vunpack.c.l.b16 %v579
        %v612 = vunpack.c.l.b16 %v580
        %v613 = vunpack.c.l.b16 %v581
        %v614 = vunpack.c.l.b16 %v582
        %v615 = vunpack.c.l.b16 %v583
        %v616 = vunpack.c.l.b16 %v584
        %v617 = vunpack.c.l.b16 %v585
        %v618 = vunpack.c.l.b16 %v586
        %v619 = vunpack.c.l.b16 %v587
        %v620 = vunpack.c.l.b16 %v588
        %v621 = vpack.c.b16 %v606, %v605
        %v622 = vpack.c.b16 %v608, %v607
        %v623 = vpack.c.b16 %v610, %v609
        %v624 = vpack.c.b16 %v612, %v611
        %v625 = vpack.c.b16 %v614, %v613
        %v626 = vpack.c.b16 %v616, %v615
        %v627 = vpack.c.b16 %v618, %v617
        %v628 = vpack.c.b16 %v620, %v619
        %637 = vmatpush.bf16.msra.mxu0 %v628
        %638 = vmatpush.bf16.msra.mxu0 %v627
        %639 = vmatpush.bf16.msra.mxu0 %v626
        %640 = vmatpush.bf16.msra.mxu0 %v625
        %641 = vmatpush.bf16.msra.mxu0 %v624
        %642 = vmatpush.bf16.msra.mxu0 %v623
        %643 = vmatpush.bf16.msra.mxu0 %v622
        %644 = vmatpush.bf16.msra.mxu0 %v621
        %645 = vmatmul.bf16.gmra.mxu0 %v568
        %v646 = vpop.f32.mrf.mxu0
        %v647 = vadd.f32 0.0, %v646
        %v648 = vpop.f32.mrf.mxu0
        %v649 = vadd.f32 0.0, %v648
        %650 = vmatmul.bf16.gmra.mxu0 %v569
        %v651 = vpop.f32.mrf.mxu0
        %v652 = vadd.f32 0.0, %v651
        %v653 = vpop.f32.mrf.mxu0
        %v654 = vadd.f32 0.0, %v653
        %655 = vmatmul.bf16.gmra.mxu0 %v570
        %v656 = vpop.f32.mrf.mxu0
        %v657 = vadd.f32 0.0, %v656
        %v658 = vpop.f32.mrf.mxu0
        %v659 = vadd.f32 0.0, %v658
        %660 = vmatmul.bf16.gmra.mxu0 %v571
        %v661 = vpop.f32.mrf.mxu0
        %v662 = vadd.f32 0.0, %v661
        %v663 = vpop.f32.mrf.mxu0
        %v664 = vadd.f32 0.0, %v663
        %665 = vdwg.mxu0
        %v666 = vadd.f32 %v533, %v647
        %v667 = vadd.f32 %v535, %v649
        %v668 = vadd.f32 %v538, %v652
        %v669 = vadd.f32 %v540, %v654
        %v670 = vadd.f32 %v543, %v657
        %v671 = vadd.f32 %v545, %v659
        %v672 = vadd.f32 %v548, %v662
        %v673 = vadd.f32 %v550, %v664
        %v674 = vld [vmem:[%s261] ss:$2 sm:$0xff]
        %s675 = scalar_lea.vmem %s261, 48 [#allocation2]
        %v676 = vld [vmem:[%s675] ss:$2 sm:$0xff]
        %s677 = scalar_lea.vmem %s261, 96 [#allocation2]
        %v678 = vld [vmem:[%s677] ss:$2 sm:$0xff]
        %s679 = scalar_lea.vmem %s261, 144 [#allocation2]
        %v680 = vld [vmem:[%s679] ss:$2 sm:$0xff]
        %s681 = scalar_lea.vmem %s261, 192 [#allocation2]
        %v682 = vld [vmem:[%s681] ss:$2 sm:$0xff]
        %s683 = scalar_lea.vmem %s261, 240 [#allocation2]
        %v684 = vld [vmem:[%s683] ss:$2 sm:$0xff]
        %s685 = scalar_lea.vmem %s261, 288 [#allocation2]
        %v686 = vld [vmem:[%s685] ss:$2 sm:$0xff]
        %s687 = scalar_lea.vmem %s261, 336 [#allocation2]
        %v688 = vld [vmem:[%s687] ss:$2 sm:$0xff]
        %v689 = vpack.c.bf16 %v676, %v674
        %v690 = vpack.c.bf16 %v680, %v678
        %v691 = vpack.c.bf16 %v684, %v682
        %v692 = vpack.c.bf16 %v688, %v686
        %s693 = scalar_lea.vmem %s1, 192
        %v694 = vld [vmem:[%s693] sm:$0xf]
        %v695 = vld [vmem:[%s693 + $0x4] sm:$0xf]
        %v696 = vld [vmem:[%s693 + $0x8] sm:$0xf]
        %v697 = vld [vmem:[%s693 + $0xc] sm:$0xf]
        %v698 = vld [vmem:[%s693 + $0x10] sm:$0xf]
        %v699 = vld [vmem:[%s693 + $0x14] sm:$0xf]
        %v700 = vld [vmem:[%s693 + $0x18] sm:$0xf]
        %v701 = vld [vmem:[%s693 + $0x1c] sm:$0xf]
        %v702 = vld [vmem:[%s693 + $0x20] sm:$0xf]
        %v703 = vld [vmem:[%s693 + $0x24] sm:$0xf]
        %v704 = vld [vmem:[%s693 + $0x28] sm:$0xf]
        %v705 = vld [vmem:[%s693 + $0x2c] sm:$0xf]
        %v706 = vld [vmem:[%s693 + $0x30] sm:$0xf]
        %v707 = vld [vmem:[%s693 + $0x34] sm:$0xf]
        %v708 = vld [vmem:[%s693 + $0x38] sm:$0xf]
        %v709 = vld [vmem:[%s693 + $0x3c] sm:$0xf]
        %v726 = vunpack.c.l.b16 %v694
        %v727 = vunpack.c.l.b16 %v695
        %v728 = vunpack.c.l.b16 %v696
        %v729 = vunpack.c.l.b16 %v697
        %v730 = vunpack.c.l.b16 %v698
        %v731 = vunpack.c.l.b16 %v699
        %v732 = vunpack.c.l.b16 %v700
        %v733 = vunpack.c.l.b16 %v701
        %v734 = vunpack.c.l.b16 %v702
        %v735 = vunpack.c.l.b16 %v703
        %v736 = vunpack.c.l.b16 %v704
        %v737 = vunpack.c.l.b16 %v705
        %v738 = vunpack.c.l.b16 %v706
        %v739 = vunpack.c.l.b16 %v707
        %v740 = vunpack.c.l.b16 %v708
        %v741 = vunpack.c.l.b16 %v709
        %v742 = vpack.c.b16 %v727, %v726
        %v743 = vpack.c.b16 %v729, %v728
        %v744 = vpack.c.b16 %v731, %v730
        %v745 = vpack.c.b16 %v733, %v732
        %v746 = vpack.c.b16 %v735, %v734
        %v747 = vpack.c.b16 %v737, %v736
        %v748 = vpack.c.b16 %v739, %v738
        %v749 = vpack.c.b16 %v741, %v740
        %758 = vmatpush.bf16.msra.mxu0 %v749
        %759 = vmatpush.bf16.msra.mxu0 %v748
        %760 = vmatpush.bf16.msra.mxu0 %v747
        %761 = vmatpush.bf16.msra.mxu0 %v746
        %762 = vmatpush.bf16.msra.mxu0 %v745
        %763 = vmatpush.bf16.msra.mxu0 %v744
        %764 = vmatpush.bf16.msra.mxu0 %v743
        %765 = vmatpush.bf16.msra.mxu0 %v742
        %766 = vmatmul.bf16.gmra.mxu0 %v689
        %v767 = vpop.f32.mrf.mxu0
        %v768 = vadd.f32 0.0, %v767
        %v769 = vpop.f32.mrf.mxu0
        %v770 = vadd.f32 0.0, %v769
        %771 = vmatmul.bf16.gmra.mxu0 %v690
        %v772 = vpop.f32.mrf.mxu0
        %v773 = vadd.f32 0.0, %v772
        %v774 = vpop.f32.mrf.mxu0
        %v775 = vadd.f32 0.0, %v774
        %776 = vmatmul.bf16.gmra.mxu0 %v691
        %v777 = vpop.f32.mrf.mxu0
        %v778 = vadd.f32 0.0, %v777
        %v779 = vpop.f32.mrf.mxu0
        %v780 = vadd.f32 0.0, %v779
        %781 = vmatmul.bf16.gmra.mxu0 %v692
        %v782 = vpop.f32.mrf.mxu0
        %v783 = vadd.f32 0.0, %v782
        %v784 = vpop.f32.mrf.mxu0
        %v785 = vadd.f32 0.0, %v784
        %786 = vdwg.mxu0
        %v787 = vadd.f32 %v666, %v768
        %v788 = vadd.f32 %v667, %v770
        %v789 = vadd.f32 %v668, %v773
        %v790 = vadd.f32 %v669, %v775
        %v791 = vadd.f32 %v670, %v778
        %v792 = vadd.f32 %v671, %v780
        %v793 = vadd.f32 %v672, %v783
        %v794 = vadd.f32 %v673, %v785
        %s795 = scalar_lea.vmem %s261, 1 [#allocation2]
        %v796 = vld [vmem:[%s795] ss:$2 sm:$0xff]
        %s797 = scalar_lea.vmem %s261, 49 [#allocation2]
        %v798 = vld [vmem:[%s797] ss:$2 sm:$0xff]
        %s799 = scalar_lea.vmem %s261, 97 [#allocation2]
        %v800 = vld [vmem:[%s799] ss:$2 sm:$0xff]
        %s801 = scalar_lea.vmem %s261, 145 [#allocation2]
        %v802 = vld [vmem:[%s801] ss:$2 sm:$0xff]
        %s803 = scalar_lea.vmem %s261, 193 [#allocation2]
        %v804 = vld [vmem:[%s803] ss:$2 sm:$0xff]
        %s805 = scalar_lea.vmem %s261, 241 [#allocation2]
        %v806 = vld [vmem:[%s805] ss:$2 sm:$0xff]
        %s807 = scalar_lea.vmem %s261, 289 [#allocation2]
        %v808 = vld [vmem:[%s807] ss:$2 sm:$0xff]
        %s809 = scalar_lea.vmem %s261, 337 [#allocation2]
        %v810 = vld [vmem:[%s809] ss:$2 sm:$0xff]
        %v811 = vpack.c.bf16 %v798, %v796
        %v812 = vpack.c.bf16 %v802, %v800
        %v813 = vpack.c.bf16 %v806, %v804
        %v814 = vpack.c.bf16 %v810, %v808
        %s815 = scalar_lea.vmem %s1, 256
        %v816 = vld [vmem:[%s815] sm:$0xf]
        %v817 = vld [vmem:[%s815 + $0x4] sm:$0xf]
        %v818 = vld [vmem:[%s815 + $0x8] sm:$0xf]
        %v819 = vld [vmem:[%s815 + $0xc] sm:$0xf]
        %v820 = vld [vmem:[%s815 + $0x10] sm:$0xf]
        %v821 = vld [vmem:[%s815 + $0x14] sm:$0xf]
        %v822 = vld [vmem:[%s815 + $0x18] sm:$0xf]
        %v823 = vld [vmem:[%s815 + $0x1c] sm:$0xf]
        %v824 = vld [vmem:[%s815 + $0x20] sm:$0xf]
        %v825 = vld [vmem:[%s815 + $0x24] sm:$0xf]
        %v826 = vld [vmem:[%s815 + $0x28] sm:$0xf]
        %v827 = vld [vmem:[%s815 + $0x2c] sm:$0xf]
        %v828 = vld [vmem:[%s815 + $0x30] sm:$0xf]
        %v829 = vld [vmem:[%s815 + $0x34] sm:$0xf]
        %v830 = vld [vmem:[%s815 + $0x38] sm:$0xf]
        %v831 = vld [vmem:[%s815 + $0x3c] sm:$0xf]
        %v848 = vunpack.c.l.b16 %v816
        %v849 = vunpack.c.l.b16 %v817
        %v850 = vunpack.c.l.b16 %v818
        %v851 = vunpack.c.l.b16 %v819
        %v852 = vunpack.c.l.b16 %v820
        %v853 = vunpack.c.l.b16 %v821
        %v854 = vunpack.c.l.b16 %v822
        %v855 = vunpack.c.l.b16 %v823
        %v856 = vunpack.c.l.b16 %v824
        %v857 = vunpack.c.l.b16 %v825
        %v858 = vunpack.c.l.b16 %v826
        %v859 = vunpack.c.l.b16 %v827
        %v860 = vunpack.c.l.b16 %v828
        %v861 = vunpack.c.l.b16 %v829
        %v862 = vunpack.c.l.b16 %v830
        %v863 = vunpack.c.l.b16 %v831
        %v864 = vpack.c.b16 %v849, %v848
        %v865 = vpack.c.b16 %v851, %v850
        %v866 = vpack.c.b16 %v853, %v852
        %v867 = vpack.c.b16 %v855, %v854
        %v868 = vpack.c.b16 %v857, %v856
        %v869 = vpack.c.b16 %v859, %v858
        %v870 = vpack.c.b16 %v861, %v860
        %v871 = vpack.c.b16 %v863, %v862
        %880 = vmatpush.bf16.msra.mxu0 %v871
        %881 = vmatpush.bf16.msra.mxu0 %v870
        %882 = vmatpush.bf16.msra.mxu0 %v869
        %883 = vmatpush.bf16.msra.mxu0 %v868
        %884 = vmatpush.bf16.msra.mxu0 %v867
        %885 = vmatpush.bf16.msra.mxu0 %v866
        %886 = vmatpush.bf16.msra.mxu0 %v865
        %887 = vmatpush.bf16.msra.mxu0 %v864
        %888 = vmatmul.bf16.gmra.mxu0 %v811
        %v889 = vpop.f32.mrf.mxu0
        %v890 = vadd.f32 0.0, %v889
        %v891 = vpop.f32.mrf.mxu0
        %v892 = vadd.f32 0.0, %v891
        %893 = vmatmul.bf16.gmra.mxu0 %v812
        %v894 = vpop.f32.mrf.mxu0
        %v895 = vadd.f32 0.0, %v894
        %v896 = vpop.f32.mrf.mxu0
        %v897 = vadd.f32 0.0, %v896
        %898 = vmatmul.bf16.gmra.mxu0 %v813
        %v899 = vpop.f32.mrf.mxu0
        %v900 = vadd.f32 0.0, %v899
        %v901 = vpop.f32.mrf.mxu0
        %v902 = vadd.f32 0.0, %v901
        %903 = vmatmul.bf16.gmra.mxu0 %v814
        %v904 = vpop.f32.mrf.mxu0
        %v905 = vadd.f32 0.0, %v904
        %v906 = vpop.f32.mrf.mxu0
        %v907 = vadd.f32 0.0, %v906
        %908 = vdwg.mxu0
        %v909 = vadd.f32 %v787, %v890
        %v910 = vadd.f32 %v788, %v892
        %v911 = vadd.f32 %v789, %v895
        %v912 = vadd.f32 %v790, %v897
        %v913 = vadd.f32 %v791, %v900
        %v914 = vadd.f32 %v792, %v902
        %v915 = vadd.f32 %v793, %v905
        %v916 = vadd.f32 %v794, %v907
        %s917 = scalar_lea.vmem %s261, 2 [#allocation2]
        %v918 = vld [vmem:[%s917] ss:$2 sm:$0xff]
        %s919 = scalar_lea.vmem %s261, 50 [#allocation2]
        %v920 = vld [vmem:[%s919] ss:$2 sm:$0xff]
        %s921 = scalar_lea.vmem %s261, 98 [#allocation2]
        %v922 = vld [vmem:[%s921] ss:$2 sm:$0xff]
        %s923 = scalar_lea.vmem %s261, 146 [#allocation2]
        %v924 = vld [vmem:[%s923] ss:$2 sm:$0xff]
        %s925 = scalar_lea.vmem %s261, 194 [#allocation2]
        %v926 = vld [vmem:[%s925] ss:$2 sm:$0xff]
        %s927 = scalar_lea.vmem %s261, 242 [#allocation2]
        %v928 = vld [vmem:[%s927] ss:$2 sm:$0xff]
        %s929 = scalar_lea.vmem %s261, 290 [#allocation2]
        %v930 = vld [vmem:[%s929] ss:$2 sm:$0xff]
        %s931 = scalar_lea.vmem %s261, 338 [#allocation2]
        %v932 = vld [vmem:[%s931] ss:$2 sm:$0xff]
        %v933 = vpack.c.bf16 %v920, %v918
        %v934 = vpack.c.bf16 %v924, %v922
        %v935 = vpack.c.bf16 %v928, %v926
        %v936 = vpack.c.bf16 %v932, %v930
        %s937 = scalar_lea.vmem %s1, 320
        %v938 = vld [vmem:[%s937] sm:$0xf]
        %v939 = vld [vmem:[%s937 + $0x4] sm:$0xf]
        %v940 = vld [vmem:[%s937 + $0x8] sm:$0xf]
        %v941 = vld [vmem:[%s937 + $0xc] sm:$0xf]
        %v942 = vld [vmem:[%s937 + $0x10] sm:$0xf]
        %v943 = vld [vmem:[%s937 + $0x14] sm:$0xf]
        %v944 = vld [vmem:[%s937 + $0x18] sm:$0xf]
        %v945 = vld [vmem:[%s937 + $0x1c] sm:$0xf]
        %v946 = vld [vmem:[%s937 + $0x20] sm:$0xf]
        %v947 = vld [vmem:[%s937 + $0x24] sm:$0xf]
        %v948 = vld [vmem:[%s937 + $0x28] sm:$0xf]
        %v949 = vld [vmem:[%s937 + $0x2c] sm:$0xf]
        %v950 = vld [vmem:[%s937 + $0x30] sm:$0xf]
        %v951 = vld [vmem:[%s937 + $0x34] sm:$0xf]
        %v952 = vld [vmem:[%s937 + $0x38] sm:$0xf]
        %v953 = vld [vmem:[%s937 + $0x3c] sm:$0xf]
        %v970 = vunpack.c.l.b16 %v938
        %v971 = vunpack.c.l.b16 %v939
        %v972 = vunpack.c.l.b16 %v940
        %v973 = vunpack.c.l.b16 %v941
        %v974 = vunpack.c.l.b16 %v942
        %v975 = vunpack.c.l.b16 %v943
        %v976 = vunpack.c.l.b16 %v944
        %v977 = vunpack.c.l.b16 %v945
        %v978 = vunpack.c.l.b16 %v946
        %v979 = vunpack.c.l.b16 %v947
        %v980 = vunpack.c.l.b16 %v948
        %v981 = vunpack.c.l.b16 %v949
        %v982 = vunpack.c.l.b16 %v950
        %v983 = vunpack.c.l.b16 %v951
        %v984 = vunpack.c.l.b16 %v952
        %v985 = vunpack.c.l.b16 %v953
        %v986 = vpack.c.b16 %v971, %v970
        %v987 = vpack.c.b16 %v973, %v972
        %v988 = vpack.c.b16 %v975, %v974
        %v989 = vpack.c.b16 %v977, %v976
        %v990 = vpack.c.b16 %v979, %v978
        %v991 = vpack.c.b16 %v981, %v980
        %v992 = vpack.c.b16 %v983, %v982
        %v993 = vpack.c.b16 %v985, %v984
        %1002 = vmatpush.bf16.msra.mxu0 %v993
        %1003 = vmatpush.bf16.msra.mxu0 %v992
        %1004 = vmatpush.bf16.msra.mxu0 %v991
        %1005 = vmatpush.bf16.msra.mxu0 %v990
        %1006 = vmatpush.bf16.msra.mxu0 %v989
        %1007 = vmatpush.bf16.msra.mxu0 %v988
        %1008 = vmatpush.bf16.msra.mxu0 %v987
        %1009 = vmatpush.bf16.msra.mxu0 %v986
        %1010 = vmatmul.bf16.gmra.mxu0 %v933
        %v1011 = vpop.f32.mrf.mxu0
        %v1012 = vadd.f32 0.0, %v1011
        %v1013 = vpop.f32.mrf.mxu0
        %v1014 = vadd.f32 0.0, %v1013
        %1015 = vmatmul.bf16.gmra.mxu0 %v934
        %v1016 = vpop.f32.mrf.mxu0
        %v1017 = vadd.f32 0.0, %v1016
        %v1018 = vpop.f32.mrf.mxu0
        %v1019 = vadd.f32 0.0, %v1018
        %1020 = vmatmul.bf16.gmra.mxu0 %v935
        %v1021 = vpop.f32.mrf.mxu0
        %v1022 = vadd.f32 0.0, %v1021
        %v1023 = vpop.f32.mrf.mxu0
        %v1024 = vadd.f32 0.0, %v1023
        %1025 = vmatmul.bf16.gmra.mxu0 %v936
        %v1026 = vpop.f32.mrf.mxu0
        %v1027 = vadd.f32 0.0, %v1026
        %v1028 = vpop.f32.mrf.mxu0
        %v1029 = vadd.f32 0.0, %v1028
        %1030 = vdwg.mxu0
        %v1031 = vadd.f32 %v909, %v1012
        %v1032 = vadd.f32 %v910, %v1014
        %v1033 = vadd.f32 %v911, %v1017
        %v1034 = vadd.f32 %v912, %v1019
        %v1035 = vadd.f32 %v913, %v1022
        %v1036 = vadd.f32 %v914, %v1024
        %v1037 = vadd.f32 %v915, %v1027
        %v1038 = vadd.f32 %v916, %v1029
        %s1039 = scalar_lea.vmem [#allocation2], 48
        %v1040 = vld [vmem:[%s1039] ss:$2 sm:$0xff]
        %s1041 = scalar_lea.vmem %s1039, 48 [#allocation2]
        %v1042 = vld [vmem:[%s1041] ss:$2 sm:$0xff]
        %s1043 = scalar_lea.vmem %s1039, 96 [#allocation2]
        %v1044 = vld [vmem:[%s1043] ss:$2 sm:$0xff]
        %s1045 = scalar_lea.vmem %s1039, 144 [#allocation2]
        %v1046 = vld [vmem:[%s1045] ss:$2 sm:$0xff]
        %s1047 = scalar_lea.vmem %s1039, 192 [#allocation2]
        %v1048 = vld [vmem:[%s1047] ss:$2 sm:$0xff]
        %s1049 = scalar_lea.vmem %s1039, 240 [#allocation2]
        %v1050 = vld [vmem:[%s1049] ss:$2 sm:$0xff]
        %s1051 = scalar_lea.vmem %s1039, 288 [#allocation2]
        %v1052 = vld [vmem:[%s1051] ss:$2 sm:$0xff]
        %s1053 = scalar_lea.vmem %s1039, 336 [#allocation2]
        %v1054 = vld [vmem:[%s1053] ss:$2 sm:$0xff]
        %v1055 = vpack.c.bf16 %v1042, %v1040
        %v1056 = vpack.c.bf16 %v1046, %v1044
        %v1057 = vpack.c.bf16 %v1050, %v1048
        %v1058 = vpack.c.bf16 %v1054, %v1052
        %s1059 = scalar_lea.vmem %s1, 384
        %v1060 = vld [vmem:[%s1059] sm:$0xf]
        %v1061 = vld [vmem:[%s1059 + $0x4] sm:$0xf]
        %v1062 = vld [vmem:[%s1059 + $0x8] sm:$0xf]
        %v1063 = vld [vmem:[%s1059 + $0xc] sm:$0xf]
        %v1064 = vld [vmem:[%s1059 + $0x10] sm:$0xf]
        %v1065 = vld [vmem:[%s1059 + $0x14] sm:$0xf]
        %v1066 = vld [vmem:[%s1059 + $0x18] sm:$0xf]
        %v1067 = vld [vmem:[%s1059 + $0x1c] sm:$0xf]
        %v1068 = vld [vmem:[%s1059 + $0x20] sm:$0xf]
        %v1069 = vld [vmem:[%s1059 + $0x24] sm:$0xf]
        %v1070 = vld [vmem:[%s1059 + $0x28] sm:$0xf]
        %v1071 = vld [vmem:[%s1059 + $0x2c] sm:$0xf]
        %v1072 = vld [vmem:[%s1059 + $0x30] sm:$0xf]
        %v1073 = vld [vmem:[%s1059 + $0x34] sm:$0xf]
        %v1074 = vld [vmem:[%s1059 + $0x38] sm:$0xf]
        %v1075 = vld [vmem:[%s1059 + $0x3c] sm:$0xf]
        %v1092 = vunpack.c.l.b16 %v1060
        %v1093 = vunpack.c.l.b16 %v1061
        %v1094 = vunpack.c.l.b16 %v1062
        %v1095 = vunpack.c.l.b16 %v1063
        %v1096 = vunpack.c.l.b16 %v1064
        %v1097 = vunpack.c.l.b16 %v1065
        %v1098 = vunpack.c.l.b16 %v1066
        %v1099 = vunpack.c.l.b16 %v1067
        %v1100 = vunpack.c.l.b16 %v1068
        %v1101 = vunpack.c.l.b16 %v1069
        %v1102 = vunpack.c.l.b16 %v1070
        %v1103 = vunpack.c.l.b16 %v1071
        %v1104 = vunpack.c.l.b16 %v1072
        %v1105 = vunpack.c.l.b16 %v1073
        %v1106 = vunpack.c.l.b16 %v1074
        %v1107 = vunpack.c.l.b16 %v1075
        %v1108 = vpack.c.b16 %v1093, %v1092
        %v1109 = vpack.c.b16 %v1095, %v1094
        %v1110 = vpack.c.b16 %v1097, %v1096
        %v1111 = vpack.c.b16 %v1099, %v1098
        %v1112 = vpack.c.b16 %v1101, %v1100
        %v1113 = vpack.c.b16 %v1103, %v1102
        %v1114 = vpack.c.b16 %v1105, %v1104
        %v1115 = vpack.c.b16 %v1107, %v1106
        %1124 = vmatpush.bf16.msra.mxu0 %v1115
        %1125 = vmatpush.bf16.msra.mxu0 %v1114
        %1126 = vmatpush.bf16.msra.mxu0 %v1113
        %1127 = vmatpush.bf16.msra.mxu0 %v1112
        %1128 = vmatpush.bf16.msra.mxu0 %v1111
        %1129 = vmatpush.bf16.msra.mxu0 %v1110
        %1130 = vmatpush.bf16.msra.mxu0 %v1109
        %1131 = vmatpush.bf16.msra.mxu0 %v1108
        %1132 = vmatmul.bf16.gmra.mxu0 %v1055
        %v1133 = vpop.f32.mrf.mxu0
        %v1134 = vadd.f32 0.0, %v1133
        %v1135 = vpop.f32.mrf.mxu0
        %v1136 = vadd.f32 0.0, %v1135
        %1137 = vmatmul.bf16.gmra.mxu0 %v1056
        %v1138 = vpop.f32.mrf.mxu0
        %v1139 = vadd.f32 0.0, %v1138
        %v1140 = vpop.f32.mrf.mxu0
        %v1141 = vadd.f32 0.0, %v1140
        %1142 = vmatmul.bf16.gmra.mxu0 %v1057
        %v1143 = vpop.f32.mrf.mxu0
        %v1144 = vadd.f32 0.0, %v1143
        %v1145 = vpop.f32.mrf.mxu0
        %v1146 = vadd.f32 0.0, %v1145
        %1147 = vmatmul.bf16.gmra.mxu0 %v1058
        %v1148 = vpop.f32.mrf.mxu0
        %v1149 = vadd.f32 0.0, %v1148
        %v1150 = vpop.f32.mrf.mxu0
        %v1151 = vadd.f32 0.0, %v1150
        %1152 = vdwg.mxu0
        %v1153 = vadd.f32 %v1031, %v1134
        %v1154 = vadd.f32 %v1032, %v1136
        %v1155 = vadd.f32 %v1033, %v1139
        %v1156 = vadd.f32 %v1034, %v1141
        %v1157 = vadd.f32 %v1035, %v1144
        %v1158 = vadd.f32 %v1036, %v1146
        %v1159 = vadd.f32 %v1037, %v1149
        %v1160 = vadd.f32 %v1038, %v1151
        %s1161 = scalar_lea.vmem %s1039, 1 [#allocation2]
        %v1162 = vld [vmem:[%s1161] ss:$2 sm:$0xff]
        %s1163 = scalar_lea.vmem %s1039, 49 [#allocation2]
        %v1164 = vld [vmem:[%s1163] ss:$2 sm:$0xff]
        %s1165 = scalar_lea.vmem %s1039, 97 [#allocation2]
        %v1166 = vld [vmem:[%s1165] ss:$2 sm:$0xff]
        %s1167 = scalar_lea.vmem %s1039, 145 [#allocation2]
        %v1168 = vld [vmem:[%s1167] ss:$2 sm:$0xff]
        %s1169 = scalar_lea.vmem %s1039, 193 [#allocation2]
        %v1170 = vld [vmem:[%s1169] ss:$2 sm:$0xff]
        %s1171 = scalar_lea.vmem %s1039, 241 [#allocation2]
        %v1172 = vld [vmem:[%s1171] ss:$2 sm:$0xff]
        %s1173 = scalar_lea.vmem %s1039, 289 [#allocation2]
        %v1174 = vld [vmem:[%s1173] ss:$2 sm:$0xff]
        %s1175 = scalar_lea.vmem %s1039, 337 [#allocation2]
        %v1176 = vld [vmem:[%s1175] ss:$2 sm:$0xff]
        %v1177 = vpack.c.bf16 %v1164, %v1162
        %v1178 = vpack.c.bf16 %v1168, %v1166
        %v1179 = vpack.c.bf16 %v1172, %v1170
        %v1180 = vpack.c.bf16 %v1176, %v1174
        %s1181 = scalar_lea.vmem %s1, 448
        %v1182 = vld [vmem:[%s1181] sm:$0xf]
        %v1183 = vld [vmem:[%s1181 + $0x4] sm:$0xf]
        %v1184 = vld [vmem:[%s1181 + $0x8] sm:$0xf]
        %v1185 = vld [vmem:[%s1181 + $0xc] sm:$0xf]
        %v1186 = vld [vmem:[%s1181 + $0x10] sm:$0xf]
        %v1187 = vld [vmem:[%s1181 + $0x14] sm:$0xf]
        %v1188 = vld [vmem:[%s1181 + $0x18] sm:$0xf]
        %v1189 = vld [vmem:[%s1181 + $0x1c] sm:$0xf]
        %v1190 = vld [vmem:[%s1181 + $0x20] sm:$0xf]
        %v1191 = vld [vmem:[%s1181 + $0x24] sm:$0xf]
        %v1192 = vld [vmem:[%s1181 + $0x28] sm:$0xf]
        %v1193 = vld [vmem:[%s1181 + $0x2c] sm:$0xf]
        %v1194 = vld [vmem:[%s1181 + $0x30] sm:$0xf]
        %v1195 = vld [vmem:[%s1181 + $0x34] sm:$0xf]
        %v1196 = vld [vmem:[%s1181 + $0x38] sm:$0xf]
        %v1197 = vld [vmem:[%s1181 + $0x3c] sm:$0xf]
        %v1214 = vunpack.c.l.b16 %v1182
        %v1215 = vunpack.c.l.b16 %v1183
        %v1216 = vunpack.c.l.b16 %v1184
        %v1217 = vunpack.c.l.b16 %v1185
        %v1218 = vunpack.c.l.b16 %v1186
        %v1219 = vunpack.c.l.b16 %v1187
        %v1220 = vunpack.c.l.b16 %v1188
        %v1221 = vunpack.c.l.b16 %v1189
        %v1222 = vunpack.c.l.b16 %v1190
        %v1223 = vunpack.c.l.b16 %v1191
        %v1224 = vunpack.c.l.b16 %v1192
        %v1225 = vunpack.c.l.b16 %v1193
        %v1226 = vunpack.c.l.b16 %v1194
        %v1227 = vunpack.c.l.b16 %v1195
        %v1228 = vunpack.c.l.b16 %v1196
        %v1229 = vunpack.c.l.b16 %v1197
        %v1230 = vpack.c.b16 %v1215, %v1214
        %v1231 = vpack.c.b16 %v1217, %v1216
        %v1232 = vpack.c.b16 %v1219, %v1218
        %v1233 = vpack.c.b16 %v1221, %v1220
        %v1234 = vpack.c.b16 %v1223, %v1222
        %v1235 = vpack.c.b16 %v1225, %v1224
        %v1236 = vpack.c.b16 %v1227, %v1226
        %v1237 = vpack.c.b16 %v1229, %v1228
        %1246 = vmatpush.bf16.msra.mxu0 %v1237
        %1247 = vmatpush.bf16.msra.mxu0 %v1236
        %1248 = vmatpush.bf16.msra.mxu0 %v1235
        %1249 = vmatpush.bf16.msra.mxu0 %v1234
        %1250 = vmatpush.bf16.msra.mxu0 %v1233
        %1251 = vmatpush.bf16.msra.mxu0 %v1232
        %1252 = vmatpush.bf16.msra.mxu0 %v1231
        %1253 = vmatpush.bf16.msra.mxu0 %v1230
        %1254 = vmatmul.bf16.gmra.mxu0 %v1177
        %v1255 = vpop.f32.mrf.mxu0
        %v1256 = vadd.f32 0.0, %v1255
        %v1257 = vpop.f32.mrf.mxu0
        %v1258 = vadd.f32 0.0, %v1257
        %1259 = vmatmul.bf16.gmra.mxu0 %v1178
        %v1260 = vpop.f32.mrf.mxu0
        %v1261 = vadd.f32 0.0, %v1260
        %v1262 = vpop.f32.mrf.mxu0
        %v1263 = vadd.f32 0.0, %v1262
        %1264 = vmatmul.bf16.gmra.mxu0 %v1179
        %v1265 = vpop.f32.mrf.mxu0
        %v1266 = vadd.f32 0.0, %v1265
        %v1267 = vpop.f32.mrf.mxu0
        %v1268 = vadd.f32 0.0, %v1267
        %1269 = vmatmul.bf16.gmra.mxu0 %v1180
        %v1270 = vpop.f32.mrf.mxu0
        %v1271 = vadd.f32 0.0, %v1270
        %v1272 = vpop.f32.mrf.mxu0
        %v1273 = vadd.f32 0.0, %v1272
        %1274 = vdwg.mxu0
        %v1275 = vadd.f32 %v1153, %v1256
        %v1276 = vadd.f32 %v1154, %v1258
        %v1277 = vadd.f32 %v1155, %v1261
        %v1278 = vadd.f32 %v1156, %v1263
        %v1279 = vadd.f32 %v1157, %v1266
        %v1280 = vadd.f32 %v1158, %v1268
        %v1281 = vadd.f32 %v1159, %v1271
        %v1282 = vadd.f32 %v1160, %v1273
        %s1283 = scalar_lea.vmem %s1039, 2 [#allocation2]
        %v1284 = vld [vmem:[%s1283] ss:$2 sm:$0xff]
        %s1285 = scalar_lea.vmem %s1039, 50 [#allocation2]
        %v1286 = vld [vmem:[%s1285] ss:$2 sm:$0xff]
        %s1287 = scalar_lea.vmem %s1039, 98 [#allocation2]
        %v1288 = vld [vmem:[%s1287] ss:$2 sm:$0xff]
        %s1289 = scalar_lea.vmem %s1039, 146 [#allocation2]
        %v1290 = vld [vmem:[%s1289] ss:$2 sm:$0xff]
        %s1291 = scalar_lea.vmem %s1039, 194 [#allocation2]
        %v1292 = vld [vmem:[%s1291] ss:$2 sm:$0xff]
        %s1293 = scalar_lea.vmem %s1039, 242 [#allocation2]
        %v1294 = vld [vmem:[%s1293] ss:$2 sm:$0xff]
        %s1295 = scalar_lea.vmem %s1039, 290 [#allocation2]
        %v1296 = vld [vmem:[%s1295] ss:$2 sm:$0xff]
        %s1297 = scalar_lea.vmem %s1039, 338 [#allocation2]
        %v1298 = vld [vmem:[%s1297] ss:$2 sm:$0xff]
        %v1299 = vpack.c.bf16 %v1286, %v1284
        %v1300 = vpack.c.bf16 %v1290, %v1288
        %v1301 = vpack.c.bf16 %v1294, %v1292
        %v1302 = vpack.c.bf16 %v1298, %v1296
        %s1303 = scalar_lea.vmem %s1, 512
        %v1304 = vld [vmem:[%s1303] sm:$0xf]
        %v1305 = vld [vmem:[%s1303 + $0x4] sm:$0xf]
        %v1306 = vld [vmem:[%s1303 + $0x8] sm:$0xf]
        %v1307 = vld [vmem:[%s1303 + $0xc] sm:$0xf]
        %v1308 = vld [vmem:[%s1303 + $0x10] sm:$0xf]
        %v1309 = vld [vmem:[%s1303 + $0x14] sm:$0xf]
        %v1310 = vld [vmem:[%s1303 + $0x18] sm:$0xf]
        %v1311 = vld [vmem:[%s1303 + $0x1c] sm:$0xf]
        %v1312 = vld [vmem:[%s1303 + $0x20] sm:$0xf]
        %v1313 = vld [vmem:[%s1303 + $0x24] sm:$0xf]
        %v1314 = vld [vmem:[%s1303 + $0x28] sm:$0xf]
        %v1315 = vld [vmem:[%s1303 + $0x2c] sm:$0xf]
        %v1316 = vld [vmem:[%s1303 + $0x30] sm:$0xf]
        %v1317 = vld [vmem:[%s1303 + $0x34] sm:$0xf]
        %v1318 = vld [vmem:[%s1303 + $0x38] sm:$0xf]
        %v1319 = vld [vmem:[%s1303 + $0x3c] sm:$0xf]
        %v1336 = vunpack.c.l.b16 %v1304
        %v1337 = vunpack.c.l.b16 %v1305
        %v1338 = vunpack.c.l.b16 %v1306
        %v1339 = vunpack.c.l.b16 %v1307
        %v1340 = vunpack.c.l.b16 %v1308
        %v1341 = vunpack.c.l.b16 %v1309
        %v1342 = vunpack.c.l.b16 %v1310
        %v1343 = vunpack.c.l.b16 %v1311
        %v1344 = vunpack.c.l.b16 %v1312
        %v1345 = vunpack.c.l.b16 %v1313
        %v1346 = vunpack.c.l.b16 %v1314
        %v1347 = vunpack.c.l.b16 %v1315
        %v1348 = vunpack.c.l.b16 %v1316
        %v1349 = vunpack.c.l.b16 %v1317
        %v1350 = vunpack.c.l.b16 %v1318
        %v1351 = vunpack.c.l.b16 %v1319
        %v1352 = vpack.c.b16 %v1337, %v1336
        %v1353 = vpack.c.b16 %v1339, %v1338
        %v1354 = vpack.c.b16 %v1341, %v1340
        %v1355 = vpack.c.b16 %v1343, %v1342
        %v1356 = vpack.c.b16 %v1345, %v1344
        %v1357 = vpack.c.b16 %v1347, %v1346
        %v1358 = vpack.c.b16 %v1349, %v1348
        %v1359 = vpack.c.b16 %v1351, %v1350
        %1368 = vmatpush.bf16.msra.mxu0 %v1359
        %1369 = vmatpush.bf16.msra.mxu0 %v1358
        %1370 = vmatpush.bf16.msra.mxu0 %v1357
        %1371 = vmatpush.bf16.msra.mxu0 %v1356
        %1372 = vmatpush.bf16.msra.mxu0 %v1355
        %1373 = vmatpush.bf16.msra.mxu0 %v1354
        %1374 = vmatpush.bf16.msra.mxu0 %v1353
        %1375 = vmatpush.bf16.msra.mxu0 %v1352
        %1376 = vmatmul.bf16.gmra.mxu0 %v1299
        %v1377 = vpop.f32.mrf.mxu0
        %v1378 = vadd.f32 0.0, %v1377
        %v1379 = vpop.f32.mrf.mxu0
        %v1380 = vadd.f32 0.0, %v1379
        %1381 = vmatmul.bf16.gmra.mxu0 %v1300
        %v1382 = vpop.f32.mrf.mxu0
        %v1383 = vadd.f32 0.0, %v1382
        %v1384 = vpop.f32.mrf.mxu0
        %v1385 = vadd.f32 0.0, %v1384
        %1386 = vmatmul.bf16.gmra.mxu0 %v1301
        %v1387 = vpop.f32.mrf.mxu0
        %v1388 = vadd.f32 0.0, %v1387
        %v1389 = vpop.f32.mrf.mxu0
        %v1390 = vadd.f32 0.0, %v1389
        %1391 = vmatmul.bf16.gmra.mxu0 %v1302
        %v1392 = vpop.f32.mrf.mxu0
        %v1393 = vadd.f32 0.0, %v1392
        %v1394 = vpop.f32.mrf.mxu0
        %v1395 = vadd.f32 0.0, %v1394
        %1396 = vdwg.mxu0
        %v1397 = vadd.f32 %v1275, %v1378
        %v1398 = vadd.f32 %v1276, %v1380
        %v1399 = vadd.f32 %v1277, %v1383
        %v1400 = vadd.f32 %v1278, %v1385
        %v1401 = vadd.f32 %v1279, %v1388
        %v1402 = vadd.f32 %v1280, %v1390
        %v1403 = vadd.f32 %v1281, %v1393
        %v1404 = vadd.f32 %v1282, %v1395
        %v1405 = vld [vmem:[%s2] sm:$0x1]
        %v1406 = vperm.slane %v1405, 0
        %v1407 = vadd.f32 %v1397, %v1406
        %v1408 = vadd.f32 %v1398, %v1406
        %v1409 = vadd.f32 %v1399, %v1406
        %v1410 = vadd.f32 %v1400, %v1406
        %v1411 = vadd.f32 %v1401, %v1406
        %v1412 = vadd.f32 %v1402, %v1406
        %v1413 = vadd.f32 %v1403, %v1406
        %v1414 = vadd.f32 %v1404, %v1406
        %1415 = vadd.xlane.f32.xlu0 %v1407
        %v1416 = vpop.xlane.xlu0 %1415
        %1417 = vadd.xlane.f32.xlu0 %v1408
        %v1418 = vpop.xlane.xlu0 %1417
        %1419 = vadd.xlane.f32.xlu0 %v1409
        %v1420 = vpop.xlane.xlu0 %1419
        %1421 = vadd.xlane.f32.xlu0 %v1410
        %v1422 = vpop.xlane.xlu0 %1421
        %1423 = vadd.xlane.f32.xlu0 %v1411
        %v1424 = vpop.xlane.xlu0 %1423
        %1425 = vadd.xlane.f32.xlu0 %v1412
        %v1426 = vpop.xlane.xlu0 %1425
        %1427 = vadd.xlane.f32.xlu0 %v1413
        %v1428 = vpop.xlane.xlu0 %1427
        %1429 = vadd.xlane.f32.xlu0 %v1414
        %v1430 = vpop.xlane.xlu0 %1429
        %v1431 = vmul.f32 %v1416, 0.25
        %v1432 = vmul.f32 %v1418, 0.25
        %v1433 = vmul.f32 %v1420, 0.25
        %v1434 = vmul.f32 %v1422, 0.25
        %v1435 = vmul.f32 %v1424, 0.25
        %v1436 = vmul.f32 %v1426, 0.25
        %v1437 = vmul.f32 %v1428, 0.25
        %v1438 = vmul.f32 %v1430, 0.25
        %v1439 = vmul.f32 %v1407, %v1407
        %v1440 = vmul.f32 %v1408, %v1408
        %v1441 = vmul.f32 %v1409, %v1409
        %v1442 = vmul.f32 %v1410, %v1410
        %v1443 = vmul.f32 %v1411, %v1411
        %v1444 = vmul.f32 %v1412, %v1412
        %v1445 = vmul.f32 %v1413, %v1413
        %v1446 = vmul.f32 %v1414, %v1414
        %1447 = vadd.xlane.f32.xlu0 %v1439
        %v1448 = vpop.xlane.xlu0 %1447
        %1449 = vadd.xlane.f32.xlu0 %v1440
        %v1450 = vpop.xlane.xlu0 %1449
        %1451 = vadd.xlane.f32.xlu0 %v1441
        %v1452 = vpop.xlane.xlu0 %1451
        %1453 = vadd.xlane.f32.xlu0 %v1442
        %v1454 = vpop.xlane.xlu0 %1453
        %1455 = vadd.xlane.f32.xlu0 %v1443
        %v1456 = vpop.xlane.xlu0 %1455
        %1457 = vadd.xlane.f32.xlu0 %v1444
        %v1458 = vpop.xlane.xlu0 %1457
        %1459 = vadd.xlane.f32.xlu0 %v1445
        %v1460 = vpop.xlane.xlu0 %1459
        %1461 = vadd.xlane.f32.xlu0 %v1446
        %v1462 = vpop.xlane.xlu0 %1461
        %v1463 = vmul.f32 %v1448, 0.25
        %v1464 = vmul.f32 %v1450, 0.25
        %v1465 = vmul.f32 %v1452, 0.25
        %v1466 = vmul.f32 %v1454, 0.25
        %v1467 = vmul.f32 %v1456, 0.25
        %v1468 = vmul.f32 %v1458, 0.25
        %v1469 = vmul.f32 %v1460, 0.25
        %v1470 = vmul.f32 %v1462, 0.25
        %v1471 = vsub.f32 %v1407, %v1431
        %v1472 = vsub.f32 %v1408, %v1432
        %v1473 = vsub.f32 %v1409, %v1433
        %v1474 = vsub.f32 %v1410, %v1434
        %v1475 = vsub.f32 %v1411, %v1435
        %v1476 = vsub.f32 %v1412, %v1436
        %v1477 = vsub.f32 %v1413, %v1437
        %v1478 = vsub.f32 %v1414, %v1438
        %v1479 = vmul.f32 %v1431, %v1431
        %v1480 = vmul.f32 %v1432, %v1432
        %v1481 = vmul.f32 %v1433, %v1433
        %v1482 = vmul.f32 %v1434, %v1434
        %v1483 = vmul.f32 %v1435, %v1435
        %v1484 = vmul.f32 %v1436, %v1436
        %v1485 = vmul.f32 %v1437, %v1437
        %v1486 = vmul.f32 %v1438, %v1438
        %v1487 = vsub.f32 %v1463, %v1479
        %v1488 = vsub.f32 %v1464, %v1480
        %v1489 = vsub.f32 %v1465, %v1481
        %v1490 = vsub.f32 %v1466, %v1482
        %v1491 = vsub.f32 %v1467, %v1483
        %v1492 = vsub.f32 %v1468, %v1484
        %v1493 = vsub.f32 %v1469, %v1485
        %v1494 = vsub.f32 %v1470, %v1486
        %v1495 = vadd.f32 %v1487, 1e-06
        %v1496 = vadd.f32 %v1488, 1e-06
        %v1497 = vadd.f32 %v1489, 1e-06
        %v1498 = vadd.f32 %v1490, 1e-06
        %v1499 = vadd.f32 %v1491, 1e-06
        %v1500 = vadd.f32 %v1492, 1e-06
        %v1501 = vadd.f32 %v1493, 1e-06
        %v1502 = vadd.f32 %v1494, 1e-06
        %v1503 = vrsqrt.pop %v1495
        %v1504 = vmul.f32 %v1503, %v1495
        %v1505 = vmul.f32 %v1504, %v1503
        %v1506 = vmul.f32 0.5, %v1505
        %v1507 = vsub.f32 1.5, %v1506
        %v1508 = vmul.f32 %v1503, %v1507
        %vm1509 = vweird.f32 %v1495
        %vm1510 = vweird.f32 %v1503
        %vm1511 = vmor %vm1509, %vm1510
        %v1512 = vsel %vm1511, %v1503, %v1508
        %v1513 = vrsqrt.pop %v1496
        %v1514 = vmul.f32 %v1513, %v1496
        %v1515 = vmul.f32 %v1514, %v1513
        %v1516 = vmul.f32 0.5, %v1515
        %v1517 = vsub.f32 1.5, %v1516
        %v1518 = vmul.f32 %v1513, %v1517
        %vm1519 = vweird.f32 %v1496
        %vm1520 = vweird.f32 %v1513
        %vm1521 = vmor %vm1519, %vm1520
        %v1522 = vsel %vm1521, %v1513, %v1518
        %v1523 = vrsqrt.pop %v1497
        %v1524 = vmul.f32 %v1523, %v1497
        %v1525 = vmul.f32 %v1524, %v1523
        %v1526 = vmul.f32 0.5, %v1525
        %v1527 = vsub.f32 1.5, %v1526
        %v1528 = vmul.f32 %v1523, %v1527
        %vm1529 = vweird.f32 %v1497
        %vm1530 = vweird.f32 %v1523
        %vm1531 = vmor %vm1529, %vm1530
        %v1532 = vsel %vm1531, %v1523, %v1528
        %v1533 = vrsqrt.pop %v1498
        %v1534 = vmul.f32 %v1533, %v1498
        %v1535 = vmul.f32 %v1534, %v1533
        %v1536 = vmul.f32 0.5, %v1535
        %v1537 = vsub.f32 1.5, %v1536
        %v1538 = vmul.f32 %v1533, %v1537
        %vm1539 = vweird.f32 %v1498
        %vm1540 = vweird.f32 %v1533
        %vm1541 = vmor %vm1539, %vm1540
        %v1542 = vsel %vm1541, %v1533, %v1538
        %v1543 = vrsqrt.pop %v1499
        %v1544 = vmul.f32 %v1543, %v1499
        %v1545 = vmul.f32 %v1544, %v1543
        %v1546 = vmul.f32 0.5, %v1545
        %v1547 = vsub.f32 1.5, %v1546
        %v1548 = vmul.f32 %v1543, %v1547
        %vm1549 = vweird.f32 %v1499
        %vm1550 = vweird.f32 %v1543
        %vm1551 = vmor %vm1549, %vm1550
        %v1552 = vsel %vm1551, %v1543, %v1548
        %v1553 = vrsqrt.pop %v1500
        %v1554 = vmul.f32 %v1553, %v1500
        %v1555 = vmul.f32 %v1554, %v1553
        %v1556 = vmul.f32 0.5, %v1555
        %v1557 = vsub.f32 1.5, %v1556
        %v1558 = vmul.f32 %v1553, %v1557
        %vm1559 = vweird.f32 %v1500
        %vm1560 = vweird.f32 %v1553
        %vm1561 = vmor %vm1559, %vm1560
        %v1562 = vsel %vm1561, %v1553, %v1558
        %v1563 = vrsqrt.pop %v1501
        %v1564 = vmul.f32 %v1563, %v1501
        %v1565 = vmul.f32 %v1564, %v1563
        %v1566 = vmul.f32 0.5, %v1565
        %v1567 = vsub.f32 1.5, %v1566
        %v1568 = vmul.f32 %v1563, %v1567
        %vm1569 = vweird.f32 %v1501
        %vm1570 = vweird.f32 %v1563
        %vm1571 = vmor %vm1569, %vm1570
        %v1572 = vsel %vm1571, %v1563, %v1568
        %v1573 = vrsqrt.pop %v1502
        %v1574 = vmul.f32 %v1573, %v1502
        %v1575 = vmul.f32 %v1574, %v1573
        %v1576 = vmul.f32 0.5, %v1575
        %v1577 = vsub.f32 1.5, %v1576
        %v1578 = vmul.f32 %v1573, %v1577
        %vm1579 = vweird.f32 %v1502
        %vm1580 = vweird.f32 %v1573
        %vm1581 = vmor %vm1579, %vm1580
        %v1582 = vsel %vm1581, %v1573, %v1578
        %v1583 = vmul.f32 %v1471, %v1512
        %v1584 = vmul.f32 %v1472, %v1522
        %v1585 = vmul.f32 %v1473, %v1532
        %v1586 = vmul.f32 %v1474, %v1542
        %v1587 = vmul.f32 %v1475, %v1552
        %v1588 = vmul.f32 %v1476, %v1562
        %v1589 = vmul.f32 %v1477, %v1572
        %v1590 = vmul.f32 %v1478, %v1582
        %v1591 = vld [vmem:[%s2 + $0x1] sm:$0x1]
        %v1592 = vperm.slane %v1591, 0
        %v1593 = vmul.f32 %v1592, %v1583
        %v1594 = vmul.f32 %v1592, %v1584
        %v1595 = vmul.f32 %v1592, %v1585
        %v1596 = vmul.f32 %v1592, %v1586
        %v1597 = vmul.f32 %v1592, %v1587
        %v1598 = vmul.f32 %v1592, %v1588
        %v1599 = vmul.f32 %v1592, %v1589
        %v1600 = vmul.f32 %v1592, %v1590
        %v1601 = vld [vmem:[%s2 + $0x2] sm:$0x1]
        %v1602 = vperm.slane %v1601, 0
        %v1603 = vadd.f32 %v1593, %v1602
        %v1604 = vadd.f32 %v1594, %v1602
        %v1605 = vadd.f32 %v1595, %v1602
        %v1606 = vadd.f32 %v1596, %v1602
        %v1607 = vadd.f32 %v1597, %v1602
        %v1608 = vadd.f32 %v1598, %v1602
        %v1609 = vadd.f32 %v1599, %v1602
        %v1610 = vadd.f32 %v1600, %v1602
        %v1611 = vmul.f32 %v1603, 0.5
        %v1612 = vmul.f32 %v1604, 0.5
        %v1613 = vmul.f32 %v1605, 0.5
        %v1614 = vmul.f32 %v1606, 0.5
        %v1615 = vmul.f32 %v1607, 0.5
        %v1616 = vmul.f32 %v1608, 0.5
        %v1617 = vmul.f32 %v1609, 0.5
        %v1618 = vmul.f32 %v1610, 0.5
        %v1619 = vmul.f32 %v1603, 0.70710677
        %v1620 = vmul.f32 %v1604, 0.70710677
        %v1621 = vmul.f32 %v1605, 0.70710677
        %v1622 = vmul.f32 %v1606, 0.70710677
        %v1623 = vmul.f32 %v1607, 0.70710677
        %v1624 = vmul.f32 %v1608, 0.70710677
        %v1625 = vmul.f32 %v1609, 0.70710677
        %v1626 = vmul.f32 %v1610, 0.70710677
        %v1627 = vand.u32 2147483647, %v1619
        %v1628 = vand.u32 2147483647, %v1620
        %v1629 = vand.u32 2147483647, %v1621
        %v1630 = vand.u32 2147483647, %v1622
        %v1631 = vand.u32 2147483647, %v1623
        %v1632 = vand.u32 2147483647, %v1624
        %v1633 = vand.u32 2147483647, %v1625
        %v1634 = vand.u32 2147483647, %v1626
        %v1635 = vmul.f32 %v1627, 0.3275911
        %v1636 = vmul.f32 %v1628, 0.3275911
        %v1637 = vmul.f32 %v1629, 0.3275911
        %v1638 = vmul.f32 %v1630, 0.3275911
        %v1639 = vmul.f32 %v1631, 0.3275911
        %v1640 = vmul.f32 %v1632, 0.3275911
        %v1641 = vmul.f32 %v1633, 0.3275911
        %v1642 = vmul.f32 %v1634, 0.3275911
        %v1643 = vadd.f32 %v1635, 1.0
        %v1644 = vadd.f32 %v1636, 1.0
        %v1645 = vadd.f32 %v1637, 1.0
        %v1646 = vadd.f32 %v1638, 1.0
        %v1647 = vadd.f32 %v1639, 1.0
        %v1648 = vadd.f32 %v1640, 1.0
        %v1649 = vadd.f32 %v1641, 1.0
        %v1650 = vadd.f32 %v1642, 1.0
        %v1651 = vrcp.pop %v1643
        %v1652 = vmul.f32 %v1643, %v1651
        %v1653 = vsub.f32 1.0, %v1652
        %v1654 = vmul.f32 %v1651, %v1653
        %v1655 = vadd.f32 %v1651, %v1654
        %vm1656 = vweird.f32 %v1643
        %vm1657 = vweird.f32 %v1651
        %vm1658 = vmor %vm1656, %vm1657
        %v1659 = vsel %vm1658, %v1651, %v1655
        %v1660 = vand.u32 2147483647, %v1643
        %vm1661 = vcmp.eq.f32.partialorder %v1660, 8.507059e+37
        %v1662 = vand.u32 %v1643, 2147483648
        %v1663 = vor.u32 1.1754944e-38, %v1662
        %v1664 = vsel %vm1661, %v1663, %v1659
        %v1665 = vmul.f32 1.0, %v1664
        %v1666 = vrcp.pop %v1644
        %v1667 = vmul.f32 %v1644, %v1666
        %v1668 = vsub.f32 1.0, %v1667
        %v1669 = vmul.f32 %v1666, %v1668
        %v1670 = vadd.f32 %v1666, %v1669
        %vm1671 = vweird.f32 %v1644
        %vm1672 = vweird.f32 %v1666
        %vm1673 = vmor %vm1671, %vm1672
        %v1674 = vsel %vm1673, %v1666, %v1670
        %v1675 = vand.u32 2147483647, %v1644
        %vm1676 = vcmp.eq.f32.partialorder %v1675, 8.507059e+37
        %v1677 = vand.u32 %v1644, 2147483648
        %v1678 = vor.u32 1.1754944e-38, %v1677
        %v1679 = vsel %vm1676, %v1678, %v1674
        %v1680 = vmul.f32 1.0, %v1679
        %v1681 = vrcp.pop %v1645
        %v1682 = vmul.f32 %v1645, %v1681
        %v1683 = vsub.f32 1.0, %v1682
        %v1684 = vmul.f32 %v1681, %v1683
        %v1685 = vadd.f32 %v1681, %v1684
        %vm1686 = vweird.f32 %v1645
        %vm1687 = vweird.f32 %v1681
        %vm1688 = vmor %vm1686, %vm1687
        %v1689 = vsel %vm1688, %v1681, %v1685
        %v1690 = vand.u32 2147483647, %v1645
        %vm1691 = vcmp.eq.f32.partialorder %v1690, 8.507059e+37
        %v1692 = vand.u32 %v1645, 2147483648
        %v1693 = vor.u32 1.1754944e-38, %v1692
        %v1694 = vsel %vm1691, %v1693, %v1689
        %v1695 = vmul.f32 1.0, %v1694
        %v1696 = vrcp.pop %v1646
        %v1697 = vmul.f32 %v1646, %v1696
        %v1698 = vsub.f32 1.0, %v1697
        %v1699 = vmul.f32 %v1696, %v1698
        %v1700 = vadd.f32 %v1696, %v1699
        %vm1701 = vweird.f32 %v1646
        %vm1702 = vweird.f32 %v1696
        %vm1703 = vmor %vm1701, %vm1702
        %v1704 = vsel %vm1703, %v1696, %v1700
        %v1705 = vand.u32 2147483647, %v1646
        %vm1706 = vcmp.eq.f32.partialorder %v1705, 8.507059e+37
        %v1707 = vand.u32 %v1646, 2147483648
        %v1708 = vor.u32 1.1754944e-38, %v1707
        %v1709 = vsel %vm1706, %v1708, %v1704
        %v1710 = vmul.f32 1.0, %v1709
        %v1711 = vrcp.pop %v1647
        %v1712 = vmul.f32 %v1647, %v1711
        %v1713 = vsub.f32 1.0, %v1712
        %v1714 = vmul.f32 %v1711, %v1713
        %v1715 = vadd.f32 %v1711, %v1714
        %vm1716 = vweird.f32 %v1647
        %vm1717 = vweird.f32 %v1711
        %vm1718 = vmor %vm1716, %vm1717
        %v1719 = vsel %vm1718, %v1711, %v1715
        %v1720 = vand.u32 2147483647, %v1647
        %vm1721 = vcmp.eq.f32.partialorder %v1720, 8.507059e+37
        %v1722 = vand.u32 %v1647, 2147483648
        %v1723 = vor.u32 1.1754944e-38, %v1722
        %v1724 = vsel %vm1721, %v1723, %v1719
        %v1725 = vmul.f32 1.0, %v1724
        %v1726 = vrcp.pop %v1648
        %v1727 = vmul.f32 %v1648, %v1726
        %v1728 = vsub.f32 1.0, %v1727
        %v1729 = vmul.f32 %v1726, %v1728
        %v1730 = vadd.f32 %v1726, %v1729
        %vm1731 = vweird.f32 %v1648
        %vm1732 = vweird.f32 %v1726
        %vm1733 = vmor %vm1731, %vm1732
        %v1734 = vsel %vm1733, %v1726, %v1730
        %v1735 = vand.u32 2147483647, %v1648
        %vm1736 = vcmp.eq.f32.partialorder %v1735, 8.507059e+37
        %v1737 = vand.u32 %v1648, 2147483648
        %v1738 = vor.u32 1.1754944e-38, %v1737
        %v1739 = vsel %vm1736, %v1738, %v1734
        %v1740 = vmul.f32 1.0, %v1739
        %v1741 = vrcp.pop %v1649
        %v1742 = vmul.f32 %v1649, %v1741
        %v1743 = vsub.f32 1.0, %v1742
        %v1744 = vmul.f32 %v1741, %v1743
        %v1745 = vadd.f32 %v1741, %v1744
        %vm1746 = vweird.f32 %v1649
        %vm1747 = vweird.f32 %v1741
        %vm1748 = vmor %vm1746, %vm1747
        %v1749 = vsel %vm1748, %v1741, %v1745
        %v1750 = vand.u32 2147483647, %v1649
        %vm1751 = vcmp.eq.f32.partialorder %v1750, 8.507059e+37
        %v1752 = vand.u32 %v1649, 2147483648
        %v1753 = vor.u32 1.1754944e-38, %v1752
        %v1754 = vsel %vm1751, %v1753, %v1749
        %v1755 = vmul.f32 1.0, %v1754
        %v1756 = vrcp.pop %v1650
        %v1757 = vmul.f32 %v1650, %v1756
        %v1758 = vsub.f32 1.0, %v1757
        %v1759 = vmul.f32 %v1756, %v1758
        %v1760 = vadd.f32 %v1756, %v1759
        %vm1761 = vweird.f32 %v1650
        %vm1762 = vweird.f32 %v1756
        %vm1763 = vmor %vm1761, %vm1762
        %v1764 = vsel %vm1763, %v1756, %v1760
        %v1765 = vand.u32 2147483647, %v1650
        %vm1766 = vcmp.eq.f32.partialorder %v1765, 8.507059e+37
        %v1767 = vand.u32 %v1650, 2147483648
        %v1768 = vor.u32 1.1754944e-38, %v1767
        %v1769 = vsel %vm1766, %v1768, %v1764
        %v1770 = vmul.f32 1.0, %v1769
        %v1771 = vmul.f32 %v1665, 1.0614054
        %v1772 = vmul.f32 %v1680, 1.0614054
        %v1773 = vmul.f32 %v1695, 1.0614054
        %v1774 = vmul.f32 %v1710, 1.0614054
        %v1775 = vmul.f32 %v1725, 1.0614054
        %v1776 = vmul.f32 %v1740, 1.0614054
        %v1777 = vmul.f32 %v1755, 1.0614054
        %v1778 = vmul.f32 %v1770, 1.0614054
        %v1779 = vadd.f32 %v1771, -1.4531521
        %v1780 = vadd.f32 %v1772, -1.4531521
        %v1781 = vadd.f32 %v1773, -1.4531521
        %v1782 = vadd.f32 %v1774, -1.4531521
        %v1783 = vadd.f32 %v1775, -1.4531521
        %v1784 = vadd.f32 %v1776, -1.4531521
        %v1785 = vadd.f32 %v1777, -1.4531521
        %v1786 = vadd.f32 %v1778, -1.4531521
        %v1787 = vmul.f32 %v1779, %v1665
        %v1788 = vmul.f32 %v1780, %v1680
        %v1789 = vmul.f32 %v1781, %v1695
        %v1790 = vmul.f32 %v1782, %v1710
        %v1791 = vmul.f32 %v1783, %v1725
        %v1792 = vmul.f32 %v1784, %v1740
        %v1793 = vmul.f32 %v1785, %v1755
        %v1794 = vmul.f32 %v1786, %v1770
        %v1795 = vadd.f32 %v1787, 1.4214138
        %v1796 = vadd.f32 %v1788, 1.4214138
        %v1797 = vadd.f32 %v1789, 1.4214138
        %v1798 = vadd.f32 %v1790, 1.4214138
        %v1799 = vadd.f32 %v1791, 1.4214138
        %v1800 = vadd.f32 %v1792, 1.4214138
        %v1801 = vadd.f32 %v1793, 1.4214138
        %v1802 = vadd.f32 %v1794, 1.4214138
        %v1803 = vmul.f32 %v1795, %v1665
        %v1804 = vmul.f32 %v1796, %v1680
        %v1805 = vmul.f32 %v1797, %v1695
        %v1806 = vmul.f32 %v1798, %v1710
        %v1807 = vmul.f32 %v1799, %v1725
        %v1808 = vmul.f32 %v1800, %v1740
        %v1809 = vmul.f32 %v1801, %v1755
        %v1810 = vmul.f32 %v1802, %v1770
        %v1811 = vadd.f32 %v1803, -0.28449672
        %v1812 = vadd.f32 %v1804, -0.28449672
        %v1813 = vadd.f32 %v1805, -0.28449672
        %v1814 = vadd.f32 %v1806, -0.28449672
        %v1815 = vadd.f32 %v1807, -0.28449672
        %v1816 = vadd.f32 %v1808, -0.28449672
        %v1817 = vadd.f32 %v1809, -0.28449672
        %v1818 = vadd.f32 %v1810, -0.28449672
        %v1819 = vmul.f32 %v1811, %v1665
        %v1820 = vmul.f32 %v1812, %v1680
        %v1821 = vmul.f32 %v1813, %v1695
        %v1822 = vmul.f32 %v1814, %v1710
        %v1823 = vmul.f32 %v1815, %v1725
        %v1824 = vmul.f32 %v1816, %v1740
        %v1825 = vmul.f32 %v1817, %v1755
        %v1826 = vmul.f32 %v1818, %v1770
        %v1827 = vadd.f32 %v1819, 0.2548296
        %v1828 = vadd.f32 %v1820, 0.2548296
        %v1829 = vadd.f32 %v1821, 0.2548296
        %v1830 = vadd.f32 %v1822, 0.2548296
        %v1831 = vadd.f32 %v1823, 0.2548296
        %v1832 = vadd.f32 %v1824, 0.2548296
        %v1833 = vadd.f32 %v1825, 0.2548296
        %v1834 = vadd.f32 %v1826, 0.2548296
        %v1835 = vmul.f32 %v1827, %v1665
        %v1836 = vmul.f32 %v1828, %v1680
        %v1837 = vmul.f32 %v1829, %v1695
        %v1838 = vmul.f32 %v1830, %v1710
        %v1839 = vmul.f32 %v1831, %v1725
        %v1840 = vmul.f32 %v1832, %v1740
        %v1841 = vmul.f32 %v1833, %v1755
        %v1842 = vmul.f32 %v1834, %v1770
        %v1843 = vsub.f32 0.0, %v1627
        %v1844 = vsub.f32 0.0, %v1628
        %v1845 = vsub.f32 0.0, %v1629
        %v1846 = vsub.f32 0.0, %v1630
        %v1847 = vsub.f32 0.0, %v1631
        %v1848 = vsub.f32 0.0, %v1632
        %v1849 = vsub.f32 0.0, %v1633
        %v1850 = vsub.f32 0.0, %v1634
        %v1851 = vmul.f32 %v1843, %v1627
        %v1852 = vmul.f32 %v1844, %v1628
        %v1853 = vmul.f32 %v1845, %v1629
        %v1854 = vmul.f32 %v1846, %v1630
        %v1855 = vmul.f32 %v1847, %v1631
        %v1856 = vmul.f32 %v1848, %v1632
        %v1857 = vmul.f32 %v1849, %v1633
        %v1858 = vmul.f32 %v1850, %v1634
        %v1859 = vmul.f32 %v1851, 1.442695
        %v1860 = vpow.pop %v1859
        %v1861 = vmul.f32 %v1852, 1.442695
        %v1862 = vpow.pop %v1861
        %v1863 = vmul.f32 %v1853, 1.442695
        %v1864 = vpow.pop %v1863
        %v1865 = vmul.f32 %v1854, 1.442695
        %v1866 = vpow.pop %v1865
        %v1867 = vmul.f32 %v1855, 1.442695
        %v1868 = vpow.pop %v1867
        %v1869 = vmul.f32 %v1856, 1.442695
        %v1870 = vpow.pop %v1869
        %v1871 = vmul.f32 %v1857, 1.442695
        %v1872 = vpow.pop %v1871
        %v1873 = vmul.f32 %v1858, 1.442695
        %v1874 = vpow.pop %v1873
        %v1875 = vmul.f32 %v1835, %v1860
        %v1876 = vmul.f32 %v1836, %v1862
        %v1877 = vmul.f32 %v1837, %v1864
        %v1878 = vmul.f32 %v1838, %v1866
        %v1879 = vmul.f32 %v1839, %v1868
        %v1880 = vmul.f32 %v1840, %v1870
        %v1881 = vmul.f32 %v1841, %v1872
        %v1882 = vmul.f32 %v1842, %v1874
        %v1883 = vsub.f32 1.0, %v1875
        %v1884 = vsub.f32 1.0, %v1876
        %v1885 = vsub.f32 1.0, %v1877
        %v1886 = vsub.f32 1.0, %v1878
        %v1887 = vsub.f32 1.0, %v1879
        %v1888 = vsub.f32 1.0, %v1880
        %v1889 = vsub.f32 1.0, %v1881
        %v1890 = vsub.f32 1.0, %v1882
        %vm1891 = vcmp.ge.f32.partialorder %v1619, 0.0
        %vm1892 = vcmp.ge.f32.partialorder %v1620, 0.0
        %vm1893 = vcmp.ge.f32.partialorder %v1621, 0.0
        %vm1894 = vcmp.ge.f32.partialorder %v1622, 0.0
        %vm1895 = vcmp.ge.f32.partialorder %v1623, 0.0
        %vm1896 = vcmp.ge.f32.partialorder %v1624, 0.0
        %vm1897 = vcmp.ge.f32.partialorder %v1625, 0.0
        %vm1898 = vcmp.ge.f32.partialorder %v1626, 0.0
        %v1899 = vsub.f32 0.0, %v1883
        %v1900 = vsub.f32 0.0, %v1884
        %v1901 = vsub.f32 0.0, %v1885
        %v1902 = vsub.f32 0.0, %v1886
        %v1903 = vsub.f32 0.0, %v1887
        %v1904 = vsub.f32 0.0, %v1888
        %v1905 = vsub.f32 0.0, %v1889
        %v1906 = vsub.f32 0.0, %v1890
        %v1907 = vsel %vm1891, %v1883, %v1899
        %v1908 = vsel %vm1892, %v1884, %v1900
        %v1909 = vsel %vm1893, %v1885, %v1901
        %v1910 = vsel %vm1894, %v1886, %v1902
        %v1911 = vsel %vm1895, %v1887, %v1903
        %v1912 = vsel %vm1896, %v1888, %v1904
        %v1913 = vsel %vm1897, %v1889, %v1905
        %v1914 = vsel %vm1898, %v1890, %v1906
        %v1915 = vadd.f32 %v1907, 1.0
        %v1916 = vadd.f32 %v1908, 1.0
        %v1917 = vadd.f32 %v1909, 1.0
        %v1918 = vadd.f32 %v1910, 1.0
        %v1919 = vadd.f32 %v1911, 1.0
        %v1920 = vadd.f32 %v1912, 1.0
        %v1921 = vadd.f32 %v1913, 1.0
        %v1922 = vadd.f32 %v1914, 1.0
        %v1923 = vmul.f32 %v1611, %v1915
        %v1924 = vmul.f32 %v1612, %v1916
        %v1925 = vmul.f32 %v1613, %v1917
        %v1926 = vmul.f32 %v1614, %v1918
        %v1927 = vmul.f32 %v1615, %v1919
        %v1928 = vmul.f32 %v1616, %v1920
        %v1929 = vmul.f32 %v1617, %v1921
        %v1930 = vmul.f32 %v1618, %v1922
        %1931 = vst [vmem:[#allocation2] sm:$0xff] 0.0
        %1932 = vst [vmem:[#allocation2 + $0x8] sm:$0x3] 0.0
        %s1933 = scalar_lea.vmem [#allocation2], 216
        %1934 = vst [vmem:[%s1933] sm:$0xff] 0.0
        %1935 = vst [vmem:[%s1933 + $0x8] sm:$0x3] 0.0
        %1936 = vst [vmem:[%s261] sm:$0x1] 0.0
        %1937 = vst [vmem:[%s261 + $0x18] sm:$0x1] 0.0
        %1938 = vst [vmem:[%s261 + $0x30] sm:$0x1] 0.0
        %1939 = vst [vmem:[%s261 + $0x48] sm:$0x1] 0.0
        %1940 = vst [vmem:[%s261 + $0x60] sm:$0x1] 0.0
        %1941 = vst [vmem:[%s261 + $0x78] sm:$0x1] 0.0
        %1942 = vst [vmem:[%s261 + $0x90] sm:$0x1] 0.0
        %1943 = vst [vmem:[%s261 + $0xa8] sm:$0x1] 0.0
        %1944 = vst [vmem:[%s261 + $0x9] sm:$0x1] 0.0
        %1945 = vst [vmem:[%s261 + $0x21] sm:$0x1] 0.0
        %1946 = vst [vmem:[%s261 + $0x39] sm:$0x1] 0.0
        %1947 = vst [vmem:[%s261 + $0x51] sm:$0x1] 0.0
        %1948 = vst [vmem:[%s261 + $0x69] sm:$0x1] 0.0
        %1949 = vst [vmem:[%s261 + $0x81] sm:$0x1] 0.0
        %1950 = vst [vmem:[%s261 + $0x99] sm:$0x1] 0.0
        %1951 = vst [vmem:[%s261 + $0xb1] sm:$0x1] 0.0
        %1952 = vst [vmem:[%s261 + $0x1] sm:$0xff] %v1923
        %1953 = vst [vmem:[%s261 + $0x19] sm:$0xff] %v1924
        %1954 = vst [vmem:[%s261 + $0x31] sm:$0xff] %v1925
        %1955 = vst [vmem:[%s261 + $0x49] sm:$0xff] %v1926
        %1956 = vst [vmem:[%s261 + $0x61] sm:$0xff] %v1927
        %1957 = vst [vmem:[%s261 + $0x79] sm:$0xff] %v1928
        %1958 = vst [vmem:[%s261 + $0x91] sm:$0xff] %v1929
        %1959 = vst [vmem:[%s261 + $0xa9] sm:$0xff] %v1930
        %v1960 = vld [vmem:[#allocation2] ss:$2 sm:$0xff]
        %v1961 = vld [vmem:[%s327] ss:$2 sm:$0xff]
        %v1962 = vld [vmem:[%s329] ss:$2 sm:$0xff]
        %v1963 = vld [vmem:[%s331] ss:$2 sm:$0xff]
        %v1964 = vpack.c.bf16 %v1961, %v1960
        %v1965 = vpack.c.bf16 %v1963, %v1962
        %s1966 = scalar_lea.vmem %s1, 576
        %v1967 = vld [vmem:[%s1966] sm:$0xf]
        %v1968 = vld [vmem:[%s1966 + $0x4] sm:$0xf]
        %v1969 = vld [vmem:[%s1966 + $0x8] sm:$0xf]
        %v1970 = vld [vmem:[%s1966 + $0xc] sm:$0xf]
        %v1971 = vld [vmem:[%s1966 + $0x10] sm:$0xf]
        %v1972 = vld [vmem:[%s1966 + $0x14] sm:$0xf]
        %v1973 = vld [vmem:[%s1966 + $0x18] sm:$0xf]
        %v1974 = vld [vmem:[%s1966 + $0x1c] sm:$0xf]
        %v1975 = vld [vmem:[%s1966 + $0x20] sm:$0xf]
        %v1976 = vld [vmem:[%s1966 + $0x24] sm:$0xf]
        %v1977 = vld [vmem:[%s1966 + $0x28] sm:$0xf]
        %v1978 = vld [vmem:[%s1966 + $0x2c] sm:$0xf]
        %v1979 = vld [vmem:[%s1966 + $0x30] sm:$0xf]
        %v1980 = vld [vmem:[%s1966 + $0x34] sm:$0xf]
        %v1981 = vld [vmem:[%s1966 + $0x38] sm:$0xf]
        %v1982 = vld [vmem:[%s1966 + $0x3c] sm:$0xf]
        %v1983 = vld [vmem:[%s361] ss:$2 sm:$0xff]
        %v1984 = vld [vmem:[%s363] ss:$2 sm:$0xff]
        %v1985 = vld [vmem:[%s365] ss:$2 sm:$0xff]
        %v1986 = vld [vmem:[%s367] ss:$2 sm:$0xff]
        %v1987 = vpack.c.bf16 %v1984, %v1983
        %v1988 = vpack.c.bf16 %v1986, %v1985
        %s1989 = scalar_lea.vmem %s1, 640
        %v1990 = vld [vmem:[%s1989] sm:$0xf]
        %v1991 = vld [vmem:[%s1989 + $0x4] sm:$0xf]
        %v1992 = vld [vmem:[%s1989 + $0x8] sm:$0xf]
        %v1993 = vld [vmem:[%s1989 + $0xc] sm:$0xf]
        %v1994 = vld [vmem:[%s1989 + $0x10] sm:$0xf]
        %v1995 = vld [vmem:[%s1989 + $0x14] sm:$0xf]
        %v1996 = vld [vmem:[%s1989 + $0x18] sm:$0xf]
        %v1997 = vld [vmem:[%s1989 + $0x1c] sm:$0xf]
        %v1998 = vld [vmem:[%s1989 + $0x20] sm:$0xf]
        %v1999 = vld [vmem:[%s1989 + $0x24] sm:$0xf]
        %v2000 = vld [vmem:[%s1989 + $0x28] sm:$0xf]
        %v2001 = vld [vmem:[%s1989 + $0x2c] sm:$0xf]
        %v2002 = vld [vmem:[%s1989 + $0x30] sm:$0xf]
        %v2003 = vld [vmem:[%s1989 + $0x34] sm:$0xf]
        %v2004 = vld [vmem:[%s1989 + $0x38] sm:$0xf]
        %v2005 = vld [vmem:[%s1989 + $0x3c] sm:$0xf]
        %v2022 = vunpack.c.l.b16 %v1990
        %v2023 = vunpack.c.l.b16 %v1991
        %v2024 = vunpack.c.l.b16 %v1992
        %v2025 = vunpack.c.l.b16 %v1993
        %v2026 = vunpack.c.l.b16 %v1994
        %v2027 = vunpack.c.l.b16 %v1995
        %v2028 = vunpack.c.l.b16 %v1996
        %v2029 = vunpack.c.l.b16 %v1997
        %v2030 = vunpack.c.l.b16 %v1998
        %v2031 = vunpack.c.l.b16 %v1999
        %v2032 = vunpack.c.l.b16 %v2000
        %v2033 = vunpack.c.l.b16 %v2001
        %v2034 = vunpack.c.l.b16 %v2002
        %v2035 = vunpack.c.l.b16 %v2003
        %v2036 = vunpack.c.l.b16 %v2004
        %v2037 = vunpack.c.l.b16 %v2005
        %v2038 = vpack.c.b16 %v2023, %v2022
        %v2039 = vpack.c.b16 %v2025, %v2024
        %v2040 = vpack.c.b16 %v2027, %v2026
        %v2041 = vpack.c.b16 %v2029, %v2028
        %v2042 = vpack.c.b16 %v2031, %v2030
        %v2043 = vpack.c.b16 %v2033, %v2032
        %v2044 = vpack.c.b16 %v2035, %v2034
        %v2045 = vpack.c.b16 %v2037, %v2036
        %2054 = vmatpush.bf16.msra.mxu0 %v2045
        %2055 = vmatpush.bf16.msra.mxu0 %v2044
        %2056 = vmatpush.bf16.msra.mxu0 %v2043
        %2057 = vmatpush.bf16.msra.mxu0 %v2042
        %2058 = vmatpush.bf16.msra.mxu0 %v2041
        %2059 = vmatpush.bf16.msra.mxu0 %v2040
        %2060 = vmatpush.bf16.msra.mxu0 %v2039
        %2061 = vmatpush.bf16.msra.mxu0 %v2038
        %2062 = vmatmul.bf16.gmra.mxu0 %v1987
        %v2063 = vpop.f32.mrf.mxu0
        %v2064 = vadd.f32 0.0, %v2063
        %v2065 = vpop.f32.mrf.mxu0
        %v2066 = vadd.f32 0.0, %v2065
        %2067 = vmatmul.bf16.gmra.mxu0 %v1988
        %v2068 = vpop.f32.mrf.mxu0
        %v2069 = vadd.f32 0.0, %v2068
        %v2070 = vpop.f32.mrf.mxu0
        %v2071 = vadd.f32 0.0, %v2070
        %2072 = vdwg.mxu0
        %v2089 = vunpack.c.l.b16 %v1967
        %v2090 = vunpack.c.l.b16 %v1968
        %v2091 = vunpack.c.l.b16 %v1969
        %v2092 = vunpack.c.l.b16 %v1970
        %v2093 = vunpack.c.l.b16 %v1971
        %v2094 = vunpack.c.l.b16 %v1972
        %v2095 = vunpack.c.l.b16 %v1973
        %v2096 = vunpack.c.l.b16 %v1974
        %v2097 = vunpack.c.l.b16 %v1975
        %v2098 = vunpack.c.l.b16 %v1976
        %v2099 = vunpack.c.l.b16 %v1977
        %v2100 = vunpack.c.l.b16 %v1978
        %v2101 = vunpack.c.l.b16 %v1979
        %v2102 = vunpack.c.l.b16 %v1980
        %v2103 = vunpack.c.l.b16 %v1981
        %v2104 = vunpack.c.l.b16 %v1982
        %v2105 = vpack.c.b16 %v2090, %v2089
        %v2106 = vpack.c.b16 %v2092, %v2091
        %v2107 = vpack.c.b16 %v2094, %v2093
        %v2108 = vpack.c.b16 %v2096, %v2095
        %v2109 = vpack.c.b16 %v2098, %v2097
        %v2110 = vpack.c.b16 %v2100, %v2099
        %v2111 = vpack.c.b16 %v2102, %v2101
        %v2112 = vpack.c.b16 %v2104, %v2103
        %2121 = vmatpush.bf16.msra.mxu0 %v2112
        %2122 = vmatpush.bf16.msra.mxu0 %v2111
        %2123 = vmatpush.bf16.msra.mxu0 %v2110
        %2124 = vmatpush.bf16.msra.mxu0 %v2109
        %2125 = vmatpush.bf16.msra.mxu0 %v2108
        %2126 = vmatpush.bf16.msra.mxu0 %v2107
        %2127 = vmatpush.bf16.msra.mxu0 %v2106
        %2128 = vmatpush.bf16.msra.mxu0 %v2105
        %2129 = vmatmul.bf16.gmra.mxu0 %v1964
        %v2130 = vpop.f32.mrf.mxu0
        %v2131 = vadd.f32 %v2064, %v2130
        %v2132 = vpop.f32.mrf.mxu0
        %v2133 = vadd.f32 %v2066, %v2132
        %2134 = vmatmul.bf16.gmra.mxu0 %v1965
        %v2135 = vpop.f32.mrf.mxu0
        %v2136 = vadd.f32 %v2069, %v2135
        %v2137 = vpop.f32.mrf.mxu0
        %v2138 = vadd.f32 %v2071, %v2137
        %2139 = vdwg.mxu0
        %v2140 = vld [vmem:[%s552] ss:$2 sm:$0xff]
        %v2141 = vld [vmem:[%s554] ss:$2 sm:$0xff]
        %v2142 = vld [vmem:[%s556] ss:$2 sm:$0xff]
        %v2143 = vld [vmem:[%s558] ss:$2 sm:$0xff]
        %v2144 = vpack.c.bf16 %v2141, %v2140
        %v2145 = vpack.c.bf16 %v2143, %v2142
        %s2146 = scalar_lea.vmem %s1, 704
        %v2147 = vld [vmem:[%s2146] sm:$0xf]
        %v2148 = vld [vmem:[%s2146 + $0x4] sm:$0xf]
        %v2149 = vld [vmem:[%s2146 + $0x8] sm:$0xf]
        %v2150 = vld [vmem:[%s2146 + $0xc] sm:$0xf]
        %v2151 = vld [vmem:[%s2146 + $0x10] sm:$0xf]
        %v2152 = vld [vmem:[%s2146 + $0x14] sm:$0xf]
        %v2153 = vld [vmem:[%s2146 + $0x18] sm:$0xf]
        %v2154 = vld [vmem:[%s2146 + $0x1c] sm:$0xf]
        %v2155 = vld [vmem:[%s2146 + $0x20] sm:$0xf]
        %v2156 = vld [vmem:[%s2146 + $0x24] sm:$0xf]
        %v2157 = vld [vmem:[%s2146 + $0x28] sm:$0xf]
        %v2158 = vld [vmem:[%s2146 + $0x2c] sm:$0xf]
        %v2159 = vld [vmem:[%s2146 + $0x30] sm:$0xf]
        %v2160 = vld [vmem:[%s2146 + $0x34] sm:$0xf]
        %v2161 = vld [vmem:[%s2146 + $0x38] sm:$0xf]
        %v2162 = vld [vmem:[%s2146 + $0x3c] sm:$0xf]
        %v2179 = vunpack.c.l.b16 %v2147
        %v2180 = vunpack.c.l.b16 %v2148
        %v2181 = vunpack.c.l.b16 %v2149
        %v2182 = vunpack.c.l.b16 %v2150
        %v2183 = vunpack.c.l.b16 %v2151
        %v2184 = vunpack.c.l.b16 %v2152
        %v2185 = vunpack.c.l.b16 %v2153
        %v2186 = vunpack.c.l.b16 %v2154
        %v2187 = vunpack.c.l.b16 %v2155
        %v2188 = vunpack.c.l.b16 %v2156
        %v2189 = vunpack.c.l.b16 %v2157
        %v2190 = vunpack.c.l.b16 %v2158
        %v2191 = vunpack.c.l.b16 %v2159
        %v2192 = vunpack.c.l.b16 %v2160
        %v2193 = vunpack.c.l.b16 %v2161
        %v2194 = vunpack.c.l.b16 %v2162
        %v2195 = vpack.c.b16 %v2180, %v2179
        %v2196 = vpack.c.b16 %v2182, %v2181
        %v2197 = vpack.c.b16 %v2184, %v2183
        %v2198 = vpack.c.b16 %v2186, %v2185
        %v2199 = vpack.c.b16 %v2188, %v2187
        %v2200 = vpack.c.b16 %v2190, %v2189
        %v2201 = vpack.c.b16 %v2192, %v2191
        %v2202 = vpack.c.b16 %v2194, %v2193
        %2211 = vmatpush.bf16.msra.mxu0 %v2202
        %2212 = vmatpush.bf16.msra.mxu0 %v2201
        %2213 = vmatpush.bf16.msra.mxu0 %v2200
        %2214 = vmatpush.bf16.msra.mxu0 %v2199
        %2215 = vmatpush.bf16.msra.mxu0 %v2198
        %2216 = vmatpush.bf16.msra.mxu0 %v2197
        %2217 = vmatpush.bf16.msra.mxu0 %v2196
        %2218 = vmatpush.bf16.msra.mxu0 %v2195
        %2219 = vmatmul.bf16.gmra.mxu0 %v2144
        %v2220 = vpop.f32.mrf.mxu0
        %v2221 = vadd.f32 0.0, %v2220
        %v2222 = vpop.f32.mrf.mxu0
        %v2223 = vadd.f32 0.0, %v2222
        %2224 = vmatmul.bf16.gmra.mxu0 %v2145
        %v2225 = vpop.f32.mrf.mxu0
        %v2226 = vadd.f32 0.0, %v2225
        %v2227 = vpop.f32.mrf.mxu0
        %v2228 = vadd.f32 0.0, %v2227
        %2229 = vdwg.mxu0
        %v2230 = vadd.f32 %v2131, %v2221
        %v2231 = vadd.f32 %v2133, %v2223
        %v2232 = vadd.f32 %v2136, %v2226
        %v2233 = vadd.f32 %v2138, %v2228
        %v2234 = vld [vmem:[%s261] ss:$2 sm:$0xff]
        %v2235 = vld [vmem:[%s675] ss:$2 sm:$0xff]
        %v2236 = vld [vmem:[%s677] ss:$2 sm:$0xff]
        %v2237 = vld [vmem:[%s679] ss:$2 sm:$0xff]
        %v2238 = vpack.c.bf16 %v2235, %v2234
        %v2239 = vpack.c.bf16 %v2237, %v2236
        %s2240 = scalar_lea.vmem %s1, 768
        %v2241 = vld [vmem:[%s2240] sm:$0xf]
        %v2242 = vld [vmem:[%s2240 + $0x4] sm:$0xf]
        %v2243 = vld [vmem:[%s2240 + $0x8] sm:$0xf]
        %v2244 = vld [vmem:[%s2240 + $0xc] sm:$0xf]
        %v2245 = vld [vmem:[%s2240 + $0x10] sm:$0xf]
        %v2246 = vld [vmem:[%s2240 + $0x14] sm:$0xf]
        %v2247 = vld [vmem:[%s2240 + $0x18] sm:$0xf]
        %v2248 = vld [vmem:[%s2240 + $0x1c] sm:$0xf]
        %v2249 = vld [vmem:[%s2240 + $0x20] sm:$0xf]
        %v2250 = vld [vmem:[%s2240 + $0x24] sm:$0xf]
        %v2251 = vld [vmem:[%s2240 + $0x28] sm:$0xf]
        %v2252 = vld [vmem:[%s2240 + $0x2c] sm:$0xf]
        %v2253 = vld [vmem:[%s2240 + $0x30] sm:$0xf]
        %v2254 = vld [vmem:[%s2240 + $0x34] sm:$0xf]
        %v2255 = vld [vmem:[%s2240 + $0x38] sm:$0xf]
        %v2256 = vld [vmem:[%s2240 + $0x3c] sm:$0xf]
        %v2273 = vunpack.c.l.b16 %v2241
        %v2274 = vunpack.c.l.b16 %v2242
        %v2275 = vunpack.c.l.b16 %v2243
        %v2276 = vunpack.c.l.b16 %v2244
        %v2277 = vunpack.c.l.b16 %v2245
        %v2278 = vunpack.c.l.b16 %v2246
        %v2279 = vunpack.c.l.b16 %v2247
        %v2280 = vunpack.c.l.b16 %v2248
        %v2281 = vunpack.c.l.b16 %v2249
        %v2282 = vunpack.c.l.b16 %v2250
        %v2283 = vunpack.c.l.b16 %v2251
        %v2284 = vunpack.c.l.b16 %v2252
        %v2285 = vunpack.c.l.b16 %v2253
        %v2286 = vunpack.c.l.b16 %v2254
        %v2287 = vunpack.c.l.b16 %v2255
        %v2288 = vunpack.c.l.b16 %v2256
        %v2289 = vpack.c.b16 %v2274, %v2273
        %v2290 = vpack.c.b16 %v2276, %v2275
        %v2291 = vpack.c.b16 %v2278, %v2277
        %v2292 = vpack.c.b16 %v2280, %v2279
        %v2293 = vpack.c.b16 %v2282, %v2281
        %v2294 = vpack.c.b16 %v2284, %v2283
        %v2295 = vpack.c.b16 %v2286, %v2285
        %v2296 = vpack.c.b16 %v2288, %v2287
        %2305 = vmatpush.bf16.msra.mxu0 %v2296
        %2306 = vmatpush.bf16.msra.mxu0 %v2295
        %2307 = vmatpush.bf16.msra.mxu0 %v2294
        %2308 = vmatpush.bf16.msra.mxu0 %v2293
        %2309 = vmatpush.bf16.msra.mxu0 %v2292
        %2310 = vmatpush.bf16.msra.mxu0 %v2291
        %2311 = vmatpush.bf16.msra.mxu0 %v2290
        %2312 = vmatpush.bf16.msra.mxu0 %v2289
        %2313 = vmatmul.bf16.gmra.mxu0 %v2238
        %v2314 = vpop.f32.mrf.mxu0
        %v2315 = vadd.f32 0.0, %v2314
        %v2316 = vpop.f32.mrf.mxu0
        %v2317 = vadd.f32 0.0, %v2316
        %2318 = vmatmul.bf16.gmra.mxu0 %v2239
        %v2319 = vpop.f32.mrf.mxu0
        %v2320 = vadd.f32 0.0, %v2319
        %v2321 = vpop.f32.mrf.mxu0
        %v2322 = vadd.f32 0.0, %v2321
        %2323 = vdwg.mxu0
        %v2324 = vadd.f32 %v2230, %v2315
        %v2325 = vadd.f32 %v2231, %v2317
        %v2326 = vadd.f32 %v2232, %v2320
        %v2327 = vadd.f32 %v2233, %v2322
        %v2328 = vld [vmem:[%s795] ss:$2 sm:$0xff]
        %v2329 = vld [vmem:[%s797] ss:$2 sm:$0xff]
        %v2330 = vld [vmem:[%s799] ss:$2 sm:$0xff]
        %v2331 = vld [vmem:[%s801] ss:$2 sm:$0xff]
        %v2332 = vpack.c.bf16 %v2329, %v2328
        %v2333 = vpack.c.bf16 %v2331, %v2330
        %s2334 = scalar_lea.vmem %s1, 832
        %v2335 = vld [vmem:[%s2334] sm:$0xf]
        %v2336 = vld [vmem:[%s2334 + $0x4] sm:$0xf]
        %v2337 = vld [vmem:[%s2334 + $0x8] sm:$0xf]
        %v2338 = vld [vmem:[%s2334 + $0xc] sm:$0xf]
        %v2339 = vld [vmem:[%s2334 + $0x10] sm:$0xf]
        %v2340 = vld [vmem:[%s2334 + $0x14] sm:$0xf]
        %v2341 = vld [vmem:[%s2334 + $0x18] sm:$0xf]
        %v2342 = vld [vmem:[%s2334 + $0x1c] sm:$0xf]
        %v2343 = vld [vmem:[%s2334 + $0x20] sm:$0xf]
        %v2344 = vld [vmem:[%s2334 + $0x24] sm:$0xf]
        %v2345 = vld [vmem:[%s2334 + $0x28] sm:$0xf]
        %v2346 = vld [vmem:[%s2334 + $0x2c] sm:$0xf]
        %v2347 = vld [vmem:[%s2334 + $0x30] sm:$0xf]
        %v2348 = vld [vmem:[%s2334 + $0x34] sm:$0xf]
        %v2349 = vld [vmem:[%s2334 + $0x38] sm:$0xf]
        %v2350 = vld [vmem:[%s2334 + $0x3c] sm:$0xf]
        %v2367 = vunpack.c.l.b16 %v2335
        %v2368 = vunpack.c.l.b16 %v2336
        %v2369 = vunpack.c.l.b16 %v2337
        %v2370 = vunpack.c.l.b16 %v2338
        %v2371 = vunpack.c.l.b16 %v2339
        %v2372 = vunpack.c.l.b16 %v2340
        %v2373 = vunpack.c.l.b16 %v2341
        %v2374 = vunpack.c.l.b16 %v2342
        %v2375 = vunpack.c.l.b16 %v2343
        %v2376 = vunpack.c.l.b16 %v2344
        %v2377 = vunpack.c.l.b16 %v2345
        %v2378 = vunpack.c.l.b16 %v2346
        %v2379 = vunpack.c.l.b16 %v2347
        %v2380 = vunpack.c.l.b16 %v2348
        %v2381 = vunpack.c.l.b16 %v2349
        %v2382 = vunpack.c.l.b16 %v2350
        %v2383 = vpack.c.b16 %v2368, %v2367
        %v2384 = vpack.c.b16 %v2370, %v2369
        %v2385 = vpack.c.b16 %v2372, %v2371
        %v2386 = vpack.c.b16 %v2374, %v2373
        %v2387 = vpack.c.b16 %v2376, %v2375
        %v2388 = vpack.c.b16 %v2378, %v2377
        %v2389 = vpack.c.b16 %v2380, %v2379
        %v2390 = vpack.c.b16 %v2382, %v2381
        %2399 = vmatpush.bf16.msra.mxu0 %v2390
        %2400 = vmatpush.bf16.msra.mxu0 %v2389
        %2401 = vmatpush.bf16.msra.mxu0 %v2388
        %2402 = vmatpush.bf16.msra.mxu0 %v2387
        %2403 = vmatpush.bf16.msra.mxu0 %v2386
        %2404 = vmatpush.bf16.msra.mxu0 %v2385
        %2405 = vmatpush.bf16.msra.mxu0 %v2384
        %2406 = vmatpush.bf16.msra.mxu0 %v2383
        %2407 = vmatmul.bf16.gmra.mxu0 %v2332
        %v2408 = vpop.f32.mrf.mxu0
        %v2409 = vadd.f32 0.0, %v2408
        %v2410 = vpop.f32.mrf.mxu0
        %v2411 = vadd.f32 0.0, %v2410
        %2412 = vmatmul.bf16.gmra.mxu0 %v2333
        %v2413 = vpop.f32.mrf.mxu0
        %v2414 = vadd.f32 0.0, %v2413
        %v2415 = vpop.f32.mrf.mxu0
        %v2416 = vadd.f32 0.0, %v2415
        %2417 = vdwg.mxu0
        %v2418 = vadd.f32 %v2324, %v2409
        %v2419 = vadd.f32 %v2325, %v2411
        %v2420 = vadd.f32 %v2326, %v2414
        %v2421 = vadd.f32 %v2327, %v2416
        %v2422 = vld [vmem:[%s917] ss:$2 sm:$0xff]
        %v2423 = vld [vmem:[%s919] ss:$2 sm:$0xff]
        %v2424 = vld [vmem:[%s921] ss:$2 sm:$0xff]
        %v2425 = vld [vmem:[%s923] ss:$2 sm:$0xff]
        %v2426 = vpack.c.bf16 %v2423, %v2422
        %v2427 = vpack.c.bf16 %v2425, %v2424
        %s2428 = scalar_lea.vmem %s1, 896
        %v2429 = vld [vmem:[%s2428] sm:$0xf]
        %v2430 = vld [vmem:[%s2428 + $0x4] sm:$0xf]
        %v2431 = vld [vmem:[%s2428 + $0x8] sm:$0xf]
        %v2432 = vld [vmem:[%s2428 + $0xc] sm:$0xf]
        %v2433 = vld [vmem:[%s2428 + $0x10] sm:$0xf]
        %v2434 = vld [vmem:[%s2428 + $0x14] sm:$0xf]
        %v2435 = vld [vmem:[%s2428 + $0x18] sm:$0xf]
        %v2436 = vld [vmem:[%s2428 + $0x1c] sm:$0xf]
        %v2437 = vld [vmem:[%s2428 + $0x20] sm:$0xf]
        %v2438 = vld [vmem:[%s2428 + $0x24] sm:$0xf]
        %v2439 = vld [vmem:[%s2428 + $0x28] sm:$0xf]
        %v2440 = vld [vmem:[%s2428 + $0x2c] sm:$0xf]
        %v2441 = vld [vmem:[%s2428 + $0x30] sm:$0xf]
        %v2442 = vld [vmem:[%s2428 + $0x34] sm:$0xf]
        %v2443 = vld [vmem:[%s2428 + $0x38] sm:$0xf]
        %v2444 = vld [vmem:[%s2428 + $0x3c] sm:$0xf]
        %v2461 = vunpack.c.l.b16 %v2429
        %v2462 = vunpack.c.l.b16 %v2430
        %v2463 = vunpack.c.l.b16 %v2431
        %v2464 = vunpack.c.l.b16 %v2432
        %v2465 = vunpack.c.l.b16 %v2433
        %v2466 = vunpack.c.l.b16 %v2434
        %v2467 = vunpack.c.l.b16 %v2435
        %v2468 = vunpack.c.l.b16 %v2436
        %v2469 = vunpack.c.l.b16 %v2437
        %v2470 = vunpack.c.l.b16 %v2438
        %v2471 = vunpack.c.l.b16 %v2439
        %v2472 = vunpack.c.l.b16 %v2440
        %v2473 = vunpack.c.l.b16 %v2441
        %v2474 = vunpack.c.l.b16 %v2442
        %v2475 = vunpack.c.l.b16 %v2443
        %v2476 = vunpack.c.l.b16 %v2444
        %v2477 = vpack.c.b16 %v2462, %v2461
        %v2478 = vpack.c.b16 %v2464, %v2463
        %v2479 = vpack.c.b16 %v2466, %v2465
        %v2480 = vpack.c.b16 %v2468, %v2467
        %v2481 = vpack.c.b16 %v2470, %v2469
        %v2482 = vpack.c.b16 %v2472, %v2471
        %v2483 = vpack.c.b16 %v2474, %v2473
        %v2484 = vpack.c.b16 %v2476, %v2475
        %2493 = vmatpush.bf16.msra.mxu0 %v2484
        %2494 = vmatpush.bf16.msra.mxu0 %v2483
        %2495 = vmatpush.bf16.msra.mxu0 %v2482
        %2496 = vmatpush.bf16.msra.mxu0 %v2481
        %2497 = vmatpush.bf16.msra.mxu0 %v2480
        %2498 = vmatpush.bf16.msra.mxu0 %v2479
        %2499 = vmatpush.bf16.msra.mxu0 %v2478
        %2500 = vmatpush.bf16.msra.mxu0 %v2477
        %2501 = vmatmul.bf16.gmra.mxu0 %v2426
        %v2502 = vpop.f32.mrf.mxu0
        %v2503 = vadd.f32 0.0, %v2502
        %v2504 = vpop.f32.mrf.mxu0
        %v2505 = vadd.f32 0.0, %v2504
        %2506 = vmatmul.bf16.gmra.mxu0 %v2427
        %v2507 = vpop.f32.mrf.mxu0
        %v2508 = vadd.f32 0.0, %v2507
        %v2509 = vpop.f32.mrf.mxu0
        %v2510 = vadd.f32 0.0, %v2509
        %2511 = vdwg.mxu0
        %v2512 = vadd.f32 %v2418, %v2503
        %v2513 = vadd.f32 %v2419, %v2505
        %v2514 = vadd.f32 %v2420, %v2508
        %v2515 = vadd.f32 %v2421, %v2510
        %v2516 = vld [vmem:[%s1039] ss:$2 sm:$0xff]
        %v2517 = vld [vmem:[%s1041] ss:$2 sm:$0xff]
        %v2518 = vld [vmem:[%s1043] ss:$2 sm:$0xff]
        %v2519 = vld [vmem:[%s1045] ss:$2 sm:$0xff]
        %v2520 = vpack.c.bf16 %v2517, %v2516
        %v2521 = vpack.c.bf16 %v2519, %v2518
        %s2522 = scalar_lea.vmem %s1, 960
        %v2523 = vld [vmem:[%s2522] sm:$0xf]
        %v2524 = vld [vmem:[%s2522 + $0x4] sm:$0xf]
        %v2525 = vld [vmem:[%s2522 + $0x8] sm:$0xf]
        %v2526 = vld [vmem:[%s2522 + $0xc] sm:$0xf]
        %v2527 = vld [vmem:[%s2522 + $0x10] sm:$0xf]
        %v2528 = vld [vmem:[%s2522 + $0x14] sm:$0xf]
        %v2529 = vld [vmem:[%s2522 + $0x18] sm:$0xf]
        %v2530 = vld [vmem:[%s2522 + $0x1c] sm:$0xf]
        %v2531 = vld [vmem:[%s2522 + $0x20] sm:$0xf]
        %v2532 = vld [vmem:[%s2522 + $0x24] sm:$0xf]
        %v2533 = vld [vmem:[%s2522 + $0x28] sm:$0xf]
        %v2534 = vld [vmem:[%s2522 + $0x2c] sm:$0xf]
        %v2535 = vld [vmem:[%s2522 + $0x30] sm:$0xf]
        %v2536 = vld [vmem:[%s2522 + $0x34] sm:$0xf]
        %v2537 = vld [vmem:[%s2522 + $0x38] sm:$0xf]
        %v2538 = vld [vmem:[%s2522 + $0x3c] sm:$0xf]
        %v2555 = vunpack.c.l.b16 %v2523
        %v2556 = vunpack.c.l.b16 %v2524
        %v2557 = vunpack.c.l.b16 %v2525
        %v2558 = vunpack.c.l.b16 %v2526
        %v2559 = vunpack.c.l.b16 %v2527
        %v2560 = vunpack.c.l.b16 %v2528
        %v2561 = vunpack.c.l.b16 %v2529
        %v2562 = vunpack.c.l.b16 %v2530
        %v2563 = vunpack.c.l.b16 %v2531
        %v2564 = vunpack.c.l.b16 %v2532
        %v2565 = vunpack.c.l.b16 %v2533
        %v2566 = vunpack.c.l.b16 %v2534
        %v2567 = vunpack.c.l.b16 %v2535
        %v2568 = vunpack.c.l.b16 %v2536
        %v2569 = vunpack.c.l.b16 %v2537
        %v2570 = vunpack.c.l.b16 %v2538
        %v2571 = vpack.c.b16 %v2556, %v2555
        %v2572 = vpack.c.b16 %v2558, %v2557
        %v2573 = vpack.c.b16 %v2560, %v2559
        %v2574 = vpack.c.b16 %v2562, %v2561
        %v2575 = vpack.c.b16 %v2564, %v2563
        %v2576 = vpack.c.b16 %v2566, %v2565
        %v2577 = vpack.c.b16 %v2568, %v2567
        %v2578 = vpack.c.b16 %v2570, %v2569
        %2587 = vmatpush.bf16.msra.mxu0 %v2578
        %2588 = vmatpush.bf16.msra.mxu0 %v2577
        %2589 = vmatpush.bf16.msra.mxu0 %v2576
        %2590 = vmatpush.bf16.msra.mxu0 %v2575
        %2591 = vmatpush.bf16.msra.mxu0 %v2574
        %2592 = vmatpush.bf16.msra.mxu0 %v2573
        %2593 = vmatpush.bf16.msra.mxu0 %v2572
        %2594 = vmatpush.bf16.msra.mxu0 %v2571
        %2595 = vmatmul.bf16.gmra.mxu0 %v2520
        %v2596 = vpop.f32.mrf.mxu0
        %v2597 = vadd.f32 0.0, %v2596
        %v2598 = vpop.f32.mrf.mxu0
        %v2599 = vadd.f32 0.0, %v2598
        %2600 = vmatmul.bf16.gmra.mxu0 %v2521
        %v2601 = vpop.f32.mrf.mxu0
        %v2602 = vadd.f32 0.0, %v2601
        %v2603 = vpop.f32.mrf.mxu0
        %v2604 = vadd.f32 0.0, %v2603
        %2605 = vdwg.mxu0
        %v2606 = vadd.f32 %v2512, %v2597
        %v2607 = vadd.f32 %v2513, %v2599
        %v2608 = vadd.f32 %v2514, %v2602
        %v2609 = vadd.f32 %v2515, %v2604
        %v2610 = vld [vmem:[%s1161] ss:$2 sm:$0xff]
        %v2611 = vld [vmem:[%s1163] ss:$2 sm:$0xff]
        %v2612 = vld [vmem:[%s1165] ss:$2 sm:$0xff]
        %v2613 = vld [vmem:[%s1167] ss:$2 sm:$0xff]
        %v2614 = vpack.c.bf16 %v2611, %v2610
        %v2615 = vpack.c.bf16 %v2613, %v2612
        %s2616 = scalar_lea.vmem %s1, 1024
        %v2617 = vld [vmem:[%s2616] sm:$0xf]
        %v2618 = vld [vmem:[%s2616 + $0x4] sm:$0xf]
        %v2619 = vld [vmem:[%s2616 + $0x8] sm:$0xf]
        %v2620 = vld [vmem:[%s2616 + $0xc] sm:$0xf]
        %v2621 = vld [vmem:[%s2616 + $0x10] sm:$0xf]
        %v2622 = vld [vmem:[%s2616 + $0x14] sm:$0xf]
        %v2623 = vld [vmem:[%s2616 + $0x18] sm:$0xf]
        %v2624 = vld [vmem:[%s2616 + $0x1c] sm:$0xf]
        %v2625 = vld [vmem:[%s2616 + $0x20] sm:$0xf]
        %v2626 = vld [vmem:[%s2616 + $0x24] sm:$0xf]
        %v2627 = vld [vmem:[%s2616 + $0x28] sm:$0xf]
        %v2628 = vld [vmem:[%s2616 + $0x2c] sm:$0xf]
        %v2629 = vld [vmem:[%s2616 + $0x30] sm:$0xf]
        %v2630 = vld [vmem:[%s2616 + $0x34] sm:$0xf]
        %v2631 = vld [vmem:[%s2616 + $0x38] sm:$0xf]
        %v2632 = vld [vmem:[%s2616 + $0x3c] sm:$0xf]
        %v2649 = vunpack.c.l.b16 %v2617
        %v2650 = vunpack.c.l.b16 %v2618
        %v2651 = vunpack.c.l.b16 %v2619
        %v2652 = vunpack.c.l.b16 %v2620
        %v2653 = vunpack.c.l.b16 %v2621
        %v2654 = vunpack.c.l.b16 %v2622
        %v2655 = vunpack.c.l.b16 %v2623
        %v2656 = vunpack.c.l.b16 %v2624
        %v2657 = vunpack.c.l.b16 %v2625
        %v2658 = vunpack.c.l.b16 %v2626
        %v2659 = vunpack.c.l.b16 %v2627
        %v2660 = vunpack.c.l.b16 %v2628
        %v2661 = vunpack.c.l.b16 %v2629
        %v2662 = vunpack.c.l.b16 %v2630
        %v2663 = vunpack.c.l.b16 %v2631
        %v2664 = vunpack.c.l.b16 %v2632
        %v2665 = vpack.c.b16 %v2650, %v2649
        %v2666 = vpack.c.b16 %v2652, %v2651
        %v2667 = vpack.c.b16 %v2654, %v2653
        %v2668 = vpack.c.b16 %v2656, %v2655
        %v2669 = vpack.c.b16 %v2658, %v2657
        %v2670 = vpack.c.b16 %v2660, %v2659
        %v2671 = vpack.c.b16 %v2662, %v2661
        %v2672 = vpack.c.b16 %v2664, %v2663
        %2681 = vmatpush.bf16.msra.mxu0 %v2672
        %2682 = vmatpush.bf16.msra.mxu0 %v2671
        %2683 = vmatpush.bf16.msra.mxu0 %v2670
        %2684 = vmatpush.bf16.msra.mxu0 %v2669
        %2685 = vmatpush.bf16.msra.mxu0 %v2668
        %2686 = vmatpush.bf16.msra.mxu0 %v2667
        %2687 = vmatpush.bf16.msra.mxu0 %v2666
        %2688 = vmatpush.bf16.msra.mxu0 %v2665
        %2689 = vmatmul.bf16.gmra.mxu0 %v2614
        %v2690 = vpop.f32.mrf.mxu0
        %v2691 = vadd.f32 0.0, %v2690
        %v2692 = vpop.f32.mrf.mxu0
        %v2693 = vadd.f32 0.0, %v2692
        %2694 = vmatmul.bf16.gmra.mxu0 %v2615
        %v2695 = vpop.f32.mrf.mxu0
        %v2696 = vadd.f32 0.0, %v2695
        %v2697 = vpop.f32.mrf.mxu0
        %v2698 = vadd.f32 0.0, %v2697
        %2699 = vdwg.mxu0
        %v2700 = vadd.f32 %v2606, %v2691
        %v2701 = vadd.f32 %v2607, %v2693
        %v2702 = vadd.f32 %v2608, %v2696
        %v2703 = vadd.f32 %v2609, %v2698
        %v2704 = vld [vmem:[%s1283] ss:$2 sm:$0xff]
        %v2705 = vld [vmem:[%s1285] ss:$2 sm:$0xff]
        %v2706 = vld [vmem:[%s1287] ss:$2 sm:$0xff]
        %v2707 = vld [vmem:[%s1289] ss:$2 sm:$0xff]
        %v2708 = vpack.c.bf16 %v2705, %v2704
        %v2709 = vpack.c.bf16 %v2707, %v2706
        %s2710 = scalar_lea.vmem %s1, 1088
        %v2711 = vld [vmem:[%s2710] sm:$0xf]
        %v2712 = vld [vmem:[%s2710 + $0x4] sm:$0xf]
        %v2713 = vld [vmem:[%s2710 + $0x8] sm:$0xf]
        %v2714 = vld [vmem:[%s2710 + $0xc] sm:$0xf]
        %v2715 = vld [vmem:[%s2710 + $0x10] sm:$0xf]
        %v2716 = vld [vmem:[%s2710 + $0x14] sm:$0xf]
        %v2717 = vld [vmem:[%s2710 + $0x18] sm:$0xf]
        %v2718 = vld [vmem:[%s2710 + $0x1c] sm:$0xf]
        %v2719 = vld [vmem:[%s2710 + $0x20] sm:$0xf]
        %v2720 = vld [vmem:[%s2710 + $0x24] sm:$0xf]
        %v2721 = vld [vmem:[%s2710 + $0x28] sm:$0xf]
        %v2722 = vld [vmem:[%s2710 + $0x2c] sm:$0xf]
        %v2723 = vld [vmem:[%s2710 + $0x30] sm:$0xf]
        %v2724 = vld [vmem:[%s2710 + $0x34] sm:$0xf]
        %v2725 = vld [vmem:[%s2710 + $0x38] sm:$0xf]
        %v2726 = vld [vmem:[%s2710 + $0x3c] sm:$0xf]
        %v2743 = vunpack.c.l.b16 %v2711
        %v2744 = vunpack.c.l.b16 %v2712
        %v2745 = vunpack.c.l.b16 %v2713
        %v2746 = vunpack.c.l.b16 %v2714
        %v2747 = vunpack.c.l.b16 %v2715
        %v2748 = vunpack.c.l.b16 %v2716
        %v2749 = vunpack.c.l.b16 %v2717
        %v2750 = vunpack.c.l.b16 %v2718
        %v2751 = vunpack.c.l.b16 %v2719
        %v2752 = vunpack.c.l.b16 %v2720
        %v2753 = vunpack.c.l.b16 %v2721
        %v2754 = vunpack.c.l.b16 %v2722
        %v2755 = vunpack.c.l.b16 %v2723
        %v2756 = vunpack.c.l.b16 %v2724
        %v2757 = vunpack.c.l.b16 %v2725
        %v2758 = vunpack.c.l.b16 %v2726
        %v2759 = vpack.c.b16 %v2744, %v2743
        %v2760 = vpack.c.b16 %v2746, %v2745
        %v2761 = vpack.c.b16 %v2748, %v2747
        %v2762 = vpack.c.b16 %v2750, %v2749
        %v2763 = vpack.c.b16 %v2752, %v2751
        %v2764 = vpack.c.b16 %v2754, %v2753
        %v2765 = vpack.c.b16 %v2756, %v2755
        %v2766 = vpack.c.b16 %v2758, %v2757
        %2775 = vmatpush.bf16.msra.mxu0 %v2766
        %2776 = vmatpush.bf16.msra.mxu0 %v2765
        %2777 = vmatpush.bf16.msra.mxu0 %v2764
        %2778 = vmatpush.bf16.msra.mxu0 %v2763
        %2779 = vmatpush.bf16.msra.mxu0 %v2762
        %2780 = vmatpush.bf16.msra.mxu0 %v2761
        %2781 = vmatpush.bf16.msra.mxu0 %v2760
        %2782 = vmatpush.bf16.msra.mxu0 %v2759
        %2783 = vmatmul.bf16.gmra.mxu0 %v2708
        %v2784 = vpop.f32.mrf.mxu0
        %v2785 = vadd.f32 0.0, %v2784
        %v2786 = vpop.f32.mrf.mxu0
        %v2787 = vadd.f32 0.0, %v2786
        %2788 = vmatmul.bf16.gmra.mxu0 %v2709
        %v2789 = vpop.f32.mrf.mxu0
        %v2790 = vadd.f32 0.0, %v2789
        %v2791 = vpop.f32.mrf.mxu0
        %v2792 = vadd.f32 0.0, %v2791
        %2793 = vdwg.mxu0
        %v2794 = vadd.f32 %v2700, %v2785
        %v2795 = vadd.f32 %v2701, %v2787
        %v2796 = vadd.f32 %v2702, %v2790
        %v2797 = vadd.f32 %v2703, %v2792
        %s2798 = scalar_lea.vmem %s2, 4
        %v2799 = vld [vmem:[%s2798] sm:$0x1]
        %v2800 = vperm.slane %v2799, 0
        %v2801 = vadd.f32 %v2794, %v2800
        %v2802 = vadd.f32 %v2795, %v2800
        %v2803 = vadd.f32 %v2796, %v2800
        %v2804 = vadd.f32 %v2797, %v2800
        %2805 = vadd.xlane.f32.xlu0 %v2801
        %v2806 = vpop.xlane.xlu0 %2805
        %2807 = vadd.xlane.f32.xlu0 %v2802
        %v2808 = vpop.xlane.xlu0 %2807
        %2809 = vadd.xlane.f32.xlu0 %v2803
        %v2810 = vpop.xlane.xlu0 %2809
        %2811 = vadd.xlane.f32.xlu0 %v2804
        %v2812 = vpop.xlane.xlu0 %2811
        %v2813 = vmul.f32 %v2806, 0.125
        %v2814 = vmul.f32 %v2808, 0.125
        %v2815 = vmul.f32 %v2810, 0.125
        %v2816 = vmul.f32 %v2812, 0.125
        %v2817 = vmul.f32 %v2801, %v2801
        %v2818 = vmul.f32 %v2802, %v2802
        %v2819 = vmul.f32 %v2803, %v2803
        %v2820 = vmul.f32 %v2804, %v2804
        %2821 = vadd.xlane.f32.xlu0 %v2817
        %v2822 = vpop.xlane.xlu0 %2821
        %2823 = vadd.xlane.f32.xlu0 %v2818
        %v2824 = vpop.xlane.xlu0 %2823
        %2825 = vadd.xlane.f32.xlu0 %v2819
        %v2826 = vpop.xlane.xlu0 %2825
        %2827 = vadd.xlane.f32.xlu0 %v2820
        %v2828 = vpop.xlane.xlu0 %2827
        %v2829 = vmul.f32 %v2822, 0.125
        %v2830 = vmul.f32 %v2824, 0.125
        %v2831 = vmul.f32 %v2826, 0.125
        %v2832 = vmul.f32 %v2828, 0.125
        %v2833 = vsub.f32 %v2801, %v2813
        %v2834 = vsub.f32 %v2802, %v2814
        %v2835 = vsub.f32 %v2803, %v2815
        %v2836 = vsub.f32 %v2804, %v2816
        %v2837 = vmul.f32 %v2813, %v2813
        %v2838 = vmul.f32 %v2814, %v2814
        %v2839 = vmul.f32 %v2815, %v2815
        %v2840 = vmul.f32 %v2816, %v2816
        %v2841 = vsub.f32 %v2829, %v2837
        %v2842 = vsub.f32 %v2830, %v2838
        %v2843 = vsub.f32 %v2831, %v2839
        %v2844 = vsub.f32 %v2832, %v2840
        %v2845 = vadd.f32 %v2841, 1e-06
        %v2846 = vadd.f32 %v2842, 1e-06
        %v2847 = vadd.f32 %v2843, 1e-06
        %v2848 = vadd.f32 %v2844, 1e-06
        %v2849 = vrsqrt.pop %v2845
        %v2850 = vmul.f32 %v2849, %v2845
        %v2851 = vmul.f32 %v2850, %v2849
        %v2852 = vmul.f32 0.5, %v2851
        %v2853 = vsub.f32 1.5, %v2852
        %v2854 = vmul.f32 %v2849, %v2853
        %vm2855 = vweird.f32 %v2845
        %vm2856 = vweird.f32 %v2849
        %vm2857 = vmor %vm2855, %vm2856
        %v2858 = vsel %vm2857, %v2849, %v2854
        %v2859 = vrsqrt.pop %v2846
        %v2860 = vmul.f32 %v2859, %v2846
        %v2861 = vmul.f32 %v2860, %v2859
        %v2862 = vmul.f32 0.5, %v2861
        %v2863 = vsub.f32 1.5, %v2862
        %v2864 = vmul.f32 %v2859, %v2863
        %vm2865 = vweird.f32 %v2846
        %vm2866 = vweird.f32 %v2859
        %vm2867 = vmor %vm2865, %vm2866
        %v2868 = vsel %vm2867, %v2859, %v2864
        %v2869 = vrsqrt.pop %v2847
        %v2870 = vmul.f32 %v2869, %v2847
        %v2871 = vmul.f32 %v2870, %v2869
        %v2872 = vmul.f32 0.5, %v2871
        %v2873 = vsub.f32 1.5, %v2872
        %v2874 = vmul.f32 %v2869, %v2873
        %vm2875 = vweird.f32 %v2847
        %vm2876 = vweird.f32 %v2869
        %vm2877 = vmor %vm2875, %vm2876
        %v2878 = vsel %vm2877, %v2869, %v2874
        %v2879 = vrsqrt.pop %v2848
        %v2880 = vmul.f32 %v2879, %v2848
        %v2881 = vmul.f32 %v2880, %v2879
        %v2882 = vmul.f32 0.5, %v2881
        %v2883 = vsub.f32 1.5, %v2882
        %v2884 = vmul.f32 %v2879, %v2883
        %vm2885 = vweird.f32 %v2848
        %vm2886 = vweird.f32 %v2879
        %vm2887 = vmor %vm2885, %vm2886
        %v2888 = vsel %vm2887, %v2879, %v2884
        %v2889 = vmul.f32 %v2833, %v2858
        %v2890 = vmul.f32 %v2834, %v2868
        %v2891 = vmul.f32 %v2835, %v2878
        %v2892 = vmul.f32 %v2836, %v2888
        %v2893 = vld [vmem:[%s2798 + $0x1] sm:$0x1]
        %v2894 = vperm.slane %v2893, 0
        %v2895 = vmul.f32 %v2894, %v2889
        %v2896 = vmul.f32 %v2894, %v2890
        %v2897 = vmul.f32 %v2894, %v2891
        %v2898 = vmul.f32 %v2894, %v2892
        %v2899 = vld [vmem:[%s2798 + $0x2] sm:$0x1]
        %v2900 = vperm.slane %v2899, 0
        %v2901 = vadd.f32 %v2895, %v2900
        %v2902 = vadd.f32 %v2896, %v2900
        %v2903 = vadd.f32 %v2897, %v2900
        %v2904 = vadd.f32 %v2898, %v2900
        %v2905 = vmul.f32 %v2901, 0.5
        %v2906 = vmul.f32 %v2902, 0.5
        %v2907 = vmul.f32 %v2903, 0.5
        %v2908 = vmul.f32 %v2904, 0.5
        %v2909 = vmul.f32 %v2901, 0.70710677
        %v2910 = vmul.f32 %v2902, 0.70710677
        %v2911 = vmul.f32 %v2903, 0.70710677
        %v2912 = vmul.f32 %v2904, 0.70710677
        %v2913 = vand.u32 2147483647, %v2909
        %v2914 = vand.u32 2147483647, %v2910
        %v2915 = vand.u32 2147483647, %v2911
        %v2916 = vand.u32 2147483647, %v2912
        %v2917 = vmul.f32 %v2913, 0.3275911
        %v2918 = vmul.f32 %v2914, 0.3275911
        %v2919 = vmul.f32 %v2915, 0.3275911
        %v2920 = vmul.f32 %v2916, 0.3275911
        %v2921 = vadd.f32 %v2917, 1.0
        %v2922 = vadd.f32 %v2918, 1.0
        %v2923 = vadd.f32 %v2919, 1.0
        %v2924 = vadd.f32 %v2920, 1.0
        %v2925 = vrcp.pop %v2921
        %v2926 = vmul.f32 %v2921, %v2925
        %v2927 = vsub.f32 1.0, %v2926
        %v2928 = vmul.f32 %v2925, %v2927
        %v2929 = vadd.f32 %v2925, %v2928
        %vm2930 = vweird.f32 %v2921
        %vm2931 = vweird.f32 %v2925
        %vm2932 = vmor %vm2930, %vm2931
        %v2933 = vsel %vm2932, %v2925, %v2929
        %v2934 = vand.u32 2147483647, %v2921
        %vm2935 = vcmp.eq.f32.partialorder %v2934, 8.507059e+37
        %v2936 = vand.u32 %v2921, 2147483648
        %v2937 = vor.u32 1.1754944e-38, %v2936
        %v2938 = vsel %vm2935, %v2937, %v2933
        %v2939 = vmul.f32 1.0, %v2938
        %v2940 = vrcp.pop %v2922
        %v2941 = vmul.f32 %v2922, %v2940
        %v2942 = vsub.f32 1.0, %v2941
        %v2943 = vmul.f32 %v2940, %v2942
        %v2944 = vadd.f32 %v2940, %v2943
        %vm2945 = vweird.f32 %v2922
        %vm2946 = vweird.f32 %v2940
        %vm2947 = vmor %vm2945, %vm2946
        %v2948 = vsel %vm2947, %v2940, %v2944
        %v2949 = vand.u32 2147483647, %v2922
        %vm2950 = vcmp.eq.f32.partialorder %v2949, 8.507059e+37
        %v2951 = vand.u32 %v2922, 2147483648
        %v2952 = vor.u32 1.1754944e-38, %v2951
        %v2953 = vsel %vm2950, %v2952, %v2948
        %v2954 = vmul.f32 1.0, %v2953
        %v2955 = vrcp.pop %v2923
        %v2956 = vmul.f32 %v2923, %v2955
        %v2957 = vsub.f32 1.0, %v2956
        %v2958 = vmul.f32 %v2955, %v2957
        %v2959 = vadd.f32 %v2955, %v2958
        %vm2960 = vweird.f32 %v2923
        %vm2961 = vweird.f32 %v2955
        %vm2962 = vmor %vm2960, %vm2961
        %v2963 = vsel %vm2962, %v2955, %v2959
        %v2964 = vand.u32 2147483647, %v2923
        %vm2965 = vcmp.eq.f32.partialorder %v2964, 8.507059e+37
        %v2966 = vand.u32 %v2923, 2147483648
        %v2967 = vor.u32 1.1754944e-38, %v2966
        %v2968 = vsel %vm2965, %v2967, %v2963
        %v2969 = vmul.f32 1.0, %v2968
        %v2970 = vrcp.pop %v2924
        %v2971 = vmul.f32 %v2924, %v2970
        %v2972 = vsub.f32 1.0, %v2971
        %v2973 = vmul.f32 %v2970, %v2972
        %v2974 = vadd.f32 %v2970, %v2973
        %vm2975 = vweird.f32 %v2924
        %vm2976 = vweird.f32 %v2970
        %vm2977 = vmor %vm2975, %vm2976
        %v2978 = vsel %vm2977, %v2970, %v2974
        %v2979 = vand.u32 2147483647, %v2924
        %vm2980 = vcmp.eq.f32.partialorder %v2979, 8.507059e+37
        %v2981 = vand.u32 %v2924, 2147483648
        %v2982 = vor.u32 1.1754944e-38, %v2981
        %v2983 = vsel %vm2980, %v2982, %v2978
        %v2984 = vmul.f32 1.0, %v2983
        %v2985 = vmul.f32 %v2939, 1.0614054
        %v2986 = vmul.f32 %v2954, 1.0614054
        %v2987 = vmul.f32 %v2969, 1.0614054
        %v2988 = vmul.f32 %v2984, 1.0614054
        %v2989 = vadd.f32 %v2985, -1.4531521
        %v2990 = vadd.f32 %v2986, -1.4531521
        %v2991 = vadd.f32 %v2987, -1.4531521
        %v2992 = vadd.f32 %v2988, -1.4531521
        %v2993 = vmul.f32 %v2989, %v2939
        %v2994 = vmul.f32 %v2990, %v2954
        %v2995 = vmul.f32 %v2991, %v2969
        %v2996 = vmul.f32 %v2992, %v2984
        %v2997 = vadd.f32 %v2993, 1.4214138
        %v2998 = vadd.f32 %v2994, 1.4214138
        %v2999 = vadd.f32 %v2995, 1.4214138
        %v3000 = vadd.f32 %v2996, 1.4214138
        %v3001 = vmul.f32 %v2997, %v2939
        %v3002 = vmul.f32 %v2998, %v2954
        %v3003 = vmul.f32 %v2999, %v2969
        %v3004 = vmul.f32 %v3000, %v2984
        %v3005 = vadd.f32 %v3001, -0.28449672
        %v3006 = vadd.f32 %v3002, -0.28449672
        %v3007 = vadd.f32 %v3003, -0.28449672
        %v3008 = vadd.f32 %v3004, -0.28449672
        %v3009 = vmul.f32 %v3005, %v2939
        %v3010 = vmul.f32 %v3006, %v2954
        %v3011 = vmul.f32 %v3007, %v2969
        %v3012 = vmul.f32 %v3008, %v2984
        %v3013 = vadd.f32 %v3009, 0.2548296
        %v3014 = vadd.f32 %v3010, 0.2548296
        %v3015 = vadd.f32 %v3011, 0.2548296
        %v3016 = vadd.f32 %v3012, 0.2548296
        %v3017 = vmul.f32 %v3013, %v2939
        %v3018 = vmul.f32 %v3014, %v2954
        %v3019 = vmul.f32 %v3015, %v2969
        %v3020 = vmul.f32 %v3016, %v2984
        %v3021 = vsub.f32 0.0, %v2913
        %v3022 = vsub.f32 0.0, %v2914
        %v3023 = vsub.f32 0.0, %v2915
        %v3024 = vsub.f32 0.0, %v2916
        %v3025 = vmul.f32 %v3021, %v2913
        %v3026 = vmul.f32 %v3022, %v2914
        %v3027 = vmul.f32 %v3023, %v2915
        %v3028 = vmul.f32 %v3024, %v2916
        %v3029 = vmul.f32 %v3025, 1.442695
        %v3030 = vpow.pop %v3029
        %v3031 = vmul.f32 %v3026, 1.442695
        %v3032 = vpow.pop %v3031
        %v3033 = vmul.f32 %v3027, 1.442695
        %v3034 = vpow.pop %v3033
        %v3035 = vmul.f32 %v3028, 1.442695
        %v3036 = vpow.pop %v3035
        %v3037 = vmul.f32 %v3017, %v3030
        %v3038 = vmul.f32 %v3018, %v3032
        %v3039 = vmul.f32 %v3019, %v3034
        %v3040 = vmul.f32 %v3020, %v3036
        %v3041 = vsub.f32 1.0, %v3037
        %v3042 = vsub.f32 1.0, %v3038
        %v3043 = vsub.f32 1.0, %v3039
        %v3044 = vsub.f32 1.0, %v3040
        %vm3045 = vcmp.ge.f32.partialorder %v2909, 0.0
        %vm3046 = vcmp.ge.f32.partialorder %v2910, 0.0
        %vm3047 = vcmp.ge.f32.partialorder %v2911, 0.0
        %vm3048 = vcmp.ge.f32.partialorder %v2912, 0.0
        %v3049 = vsub.f32 0.0, %v3041
        %v3050 = vsub.f32 0.0, %v3042
        %v3051 = vsub.f32 0.0, %v3043
        %v3052 = vsub.f32 0.0, %v3044
        %v3053 = vsel %vm3045, %v3041, %v3049
        %v3054 = vsel %vm3046, %v3042, %v3050
        %v3055 = vsel %vm3047, %v3043, %v3051
        %v3056 = vsel %vm3048, %v3044, %v3052
        %v3057 = vadd.f32 %v3053, 1.0
        %v3058 = vadd.f32 %v3054, 1.0
        %v3059 = vadd.f32 %v3055, 1.0
        %v3060 = vadd.f32 %v3056, 1.0
        %v3061 = vmul.f32 %v2905, %v3057
        %v3062 = vmul.f32 %v2906, %v3058
        %v3063 = vmul.f32 %v2907, %v3059
        %v3064 = vmul.f32 %v2908, %v3060
        %3065 = vst [vmem:[#allocation2] sm:$0x3f] 0.0
        %s3066 = scalar_lea.vmem [#allocation2], 120
        %3067 = vst [vmem:[%s3066] sm:$0x3f] 0.0
        %3068 = vst [vmem:[%s261] sm:$0x1] 0.0
        %3069 = vst [vmem:[%s261 + $0x18] sm:$0x1] 0.0
        %3070 = vst [vmem:[%s261 + $0x30] sm:$0x1] 0.0
        %3071 = vst [vmem:[%s261 + $0x48] sm:$0x1] 0.0
        %3072 = vst [vmem:[%s261 + $0x5] sm:$0x1] 0.0
        %3073 = vst [vmem:[%s261 + $0x1d] sm:$0x1] 0.0
        %3074 = vst [vmem:[%s261 + $0x35] sm:$0x1] 0.0
        %3075 = vst [vmem:[%s261 + $0x4d] sm:$0x1] 0.0
        %3076 = vst [vmem:[%s261 + $0x1] sm:$0xf] %v3061
        %3077 = vst [vmem:[%s261 + $0x19] sm:$0xf] %v3062
        %3078 = vst [vmem:[%s261 + $0x31] sm:$0xf] %v3063
        %3079 = vst [vmem:[%s261 + $0x49] sm:$0xf] %v3064
        %v3080 = vld [vmem:[#allocation2] ss:$2 sm:$0xff]
        %v3081 = vld [vmem:[%s327] ss:$2 sm:$0xff]
        %v3082 = vpack.c.bf16 %v3081, %v3080
        %s3083 = scalar_lea.vmem %s1, 1152
        %v3084 = vld [vmem:[%s3083] sm:$0xf]
        %v3085 = vld [vmem:[%s3083 + $0x4] sm:$0xf]
        %v3086 = vld [vmem:[%s3083 + $0x8] sm:$0xf]
        %v3087 = vld [vmem:[%s3083 + $0xc] sm:$0xf]
        %v3088 = vld [vmem:[%s3083 + $0x10] sm:$0xf]
        %v3089 = vld [vmem:[%s3083 + $0x14] sm:$0xf]
        %v3090 = vld [vmem:[%s3083 + $0x18] sm:$0xf]
        %v3091 = vld [vmem:[%s3083 + $0x1c] sm:$0xf]
        %v3092 = vld [vmem:[%s3083 + $0x20] sm:$0xf]
        %v3093 = vld [vmem:[%s3083 + $0x24] sm:$0xf]
        %v3094 = vld [vmem:[%s3083 + $0x28] sm:$0xf]
        %v3095 = vld [vmem:[%s3083 + $0x2c] sm:$0xf]
        %v3096 = vld [vmem:[%s3083 + $0x30] sm:$0xf]
        %v3097 = vld [vmem:[%s3083 + $0x34] sm:$0xf]
        %v3098 = vld [vmem:[%s3083 + $0x38] sm:$0xf]
        %v3099 = vld [vmem:[%s3083 + $0x3c] sm:$0xf]
        %v3100 = vld [vmem:[%s361] ss:$2 sm:$0xff]
        %v3101 = vld [vmem:[%s363] ss:$2 sm:$0xff]
        %v3102 = vpack.c.bf16 %v3101, %v3100
        %s3103 = scalar_lea.vmem %s1, 1216
        %v3104 = vld [vmem:[%s3103] sm:$0xf]
        %v3105 = vld [vmem:[%s3103 + $0x4] sm:$0xf]
        %v3106 = vld [vmem:[%s3103 + $0x8] sm:$0xf]
        %v3107 = vld [vmem:[%s3103 + $0xc] sm:$0xf]
        %v3108 = vld [vmem:[%s3103 + $0x10] sm:$0xf]
        %v3109 = vld [vmem:[%s3103 + $0x14] sm:$0xf]
        %v3110 = vld [vmem:[%s3103 + $0x18] sm:$0xf]
        %v3111 = vld [vmem:[%s3103 + $0x1c] sm:$0xf]
        %v3112 = vld [vmem:[%s3103 + $0x20] sm:$0xf]
        %v3113 = vld [vmem:[%s3103 + $0x24] sm:$0xf]
        %v3114 = vld [vmem:[%s3103 + $0x28] sm:$0xf]
        %v3115 = vld [vmem:[%s3103 + $0x2c] sm:$0xf]
        %v3116 = vld [vmem:[%s3103 + $0x30] sm:$0xf]
        %v3117 = vld [vmem:[%s3103 + $0x34] sm:$0xf]
        %v3118 = vld [vmem:[%s3103 + $0x38] sm:$0xf]
        %v3119 = vld [vmem:[%s3103 + $0x3c] sm:$0xf]
        %v3136 = vunpack.c.l.b16 %v3104
        %v3137 = vunpack.c.l.b16 %v3105
        %v3138 = vunpack.c.l.b16 %v3106
        %v3139 = vunpack.c.l.b16 %v3107
        %v3140 = vunpack.c.l.b16 %v3108
        %v3141 = vunpack.c.l.b16 %v3109
        %v3142 = vunpack.c.l.b16 %v3110
        %v3143 = vunpack.c.l.b16 %v3111
        %v3144 = vunpack.c.l.b16 %v3112
        %v3145 = vunpack.c.l.b16 %v3113
        %v3146 = vunpack.c.l.b16 %v3114
        %v3147 = vunpack.c.l.b16 %v3115
        %v3148 = vunpack.c.l.b16 %v3116
        %v3149 = vunpack.c.l.b16 %v3117
        %v3150 = vunpack.c.l.b16 %v3118
        %v3151 = vunpack.c.l.b16 %v3119
        %v3152 = vpack.c.b16 %v3137, %v3136
        %v3153 = vpack.c.b16 %v3139, %v3138
        %v3154 = vpack.c.b16 %v3141, %v3140
        %v3155 = vpack.c.b16 %v3143, %v3142
        %v3156 = vpack.c.b16 %v3145, %v3144
        %v3157 = vpack.c.b16 %v3147, %v3146
        %v3158 = vpack.c.b16 %v3149, %v3148
        %v3159 = vpack.c.b16 %v3151, %v3150
        %3168 = vmatpush.bf16.msra.mxu0 %v3159
        %3169 = vmatpush.bf16.msra.mxu0 %v3158
        %3170 = vmatpush.bf16.msra.mxu0 %v3157
        %3171 = vmatpush.bf16.msra.mxu0 %v3156
        %3172 = vmatpush.bf16.msra.mxu0 %v3155
        %3173 = vmatpush.bf16.msra.mxu0 %v3154
        %3174 = vmatpush.bf16.msra.mxu0 %v3153
        %3175 = vmatpush.bf16.msra.mxu0 %v3152
        %3176 = vmatmul.bf16.gmra.mxu0 %v3102
        %v3177 = vpop.f32.mrf.mxu0
        %v3178 = vadd.f32 0.0, %v3177
        %v3179 = vpop.f32.mrf.mxu0
        %v3180 = vadd.f32 0.0, %v3179
        %3181 = vdwg.mxu0
        %v3198 = vunpack.c.l.b16 %v3084
        %v3199 = vunpack.c.l.b16 %v3085
        %v3200 = vunpack.c.l.b16 %v3086
        %v3201 = vunpack.c.l.b16 %v3087
        %v3202 = vunpack.c.l.b16 %v3088
        %v3203 = vunpack.c.l.b16 %v3089
        %v3204 = vunpack.c.l.b16 %v3090
        %v3205 = vunpack.c.l.b16 %v3091
        %v3206 = vunpack.c.l.b16 %v3092
        %v3207 = vunpack.c.l.b16 %v3093
        %v3208 = vunpack.c.l.b16 %v3094
        %v3209 = vunpack.c.l.b16 %v3095
        %v3210 = vunpack.c.l.b16 %v3096
        %v3211 = vunpack.c.l.b16 %v3097
        %v3212 = vunpack.c.l.b16 %v3098
        %v3213 = vunpack.c.l.b16 %v3099
        %v3214 = vpack.c.b16 %v3199, %v3198
        %v3215 = vpack.c.b16 %v3201, %v3200
        %v3216 = vpack.c.b16 %v3203, %v3202
        %v3217 = vpack.c.b16 %v3205, %v3204
        %v3218 = vpack.c.b16 %v3207, %v3206
        %v3219 = vpack.c.b16 %v3209, %v3208
        %v3220 = vpack.c.b16 %v3211, %v3210
        %v3221 = vpack.c.b16 %v3213, %v3212
        %3230 = vmatpush.bf16.msra.mxu0 %v3221
        %3231 = vmatpush.bf16.msra.mxu0 %v3220
        %3232 = vmatpush.bf16.msra.mxu0 %v3219
        %3233 = vmatpush.bf16.msra.mxu0 %v3218
        %3234 = vmatpush.bf16.msra.mxu0 %v3217
        %3235 = vmatpush.bf16.msra.mxu0 %v3216
        %3236 = vmatpush.bf16.msra.mxu0 %v3215
        %3237 = vmatpush.bf16.msra.mxu0 %v3214
        %3238 = vmatmul.bf16.gmra.mxu0 %v3082
        %v3239 = vpop.f32.mrf.mxu0
        %v3240 = vadd.f32 %v3178, %v3239
        %v3241 = vpop.f32.mrf.mxu0
        %v3242 = vadd.f32 %v3180, %v3241
        %3243 = vdwg.mxu0
        %v3244 = vld [vmem:[%s552] ss:$2 sm:$0xff]
        %v3245 = vld [vmem:[%s554] ss:$2 sm:$0xff]
        %v3246 = vpack.c.bf16 %v3245, %v3244
        %s3247 = scalar_lea.vmem %s1, 1280
        %v3248 = vld [vmem:[%s3247] sm:$0xf]
        %v3249 = vld [vmem:[%s3247 + $0x4] sm:$0xf]
        %v3250 = vld [vmem:[%s3247 + $0x8] sm:$0xf]
        %v3251 = vld [vmem:[%s3247 + $0xc] sm:$0xf]
        %v3252 = vld [vmem:[%s3247 + $0x10] sm:$0xf]
        %v3253 = vld [vmem:[%s3247 + $0x14] sm:$0xf]
        %v3254 = vld [vmem:[%s3247 + $0x18] sm:$0xf]
        %v3255 = vld [vmem:[%s3247 + $0x1c] sm:$0xf]
        %v3256 = vld [vmem:[%s3247 + $0x20] sm:$0xf]
        %v3257 = vld [vmem:[%s3247 + $0x24] sm:$0xf]
        %v3258 = vld [vmem:[%s3247 + $0x28] sm:$0xf]
        %v3259 = vld [vmem:[%s3247 + $0x2c] sm:$0xf]
        %v3260 = vld [vmem:[%s3247 + $0x30] sm:$0xf]
        %v3261 = vld [vmem:[%s3247 + $0x34] sm:$0xf]
        %v3262 = vld [vmem:[%s3247 + $0x38] sm:$0xf]
        %v3263 = vld [vmem:[%s3247 + $0x3c] sm:$0xf]
        %v3280 = vunpack.c.l.b16 %v3248
        %v3281 = vunpack.c.l.b16 %v3249
        %v3282 = vunpack.c.l.b16 %v3250
        %v3283 = vunpack.c.l.b16 %v3251
        %v3284 = vunpack.c.l.b16 %v3252
        %v3285 = vunpack.c.l.b16 %v3253
        %v3286 = vunpack.c.l.b16 %v3254
        %v3287 = vunpack.c.l.b16 %v3255
        %v3288 = vunpack.c.l.b16 %v3256
        %v3289 = vunpack.c.l.b16 %v3257
        %v3290 = vunpack.c.l.b16 %v3258
        %v3291 = vunpack.c.l.b16 %v3259
        %v3292 = vunpack.c.l.b16 %v3260
        %v3293 = vunpack.c.l.b16 %v3261
        %v3294 = vunpack.c.l.b16 %v3262
        %v3295 = vunpack.c.l.b16 %v3263
        %v3296 = vpack.c.b16 %v3281, %v3280
        %v3297 = vpack.c.b16 %v3283, %v3282
        %v3298 = vpack.c.b16 %v3285, %v3284
        %v3299 = vpack.c.b16 %v3287, %v3286
        %v3300 = vpack.c.b16 %v3289, %v3288
        %v3301 = vpack.c.b16 %v3291, %v3290
        %v3302 = vpack.c.b16 %v3293, %v3292
        %v3303 = vpack.c.b16 %v3295, %v3294
        %3312 = vmatpush.bf16.msra.mxu0 %v3303
        %3313 = vmatpush.bf16.msra.mxu0 %v3302
        %3314 = vmatpush.bf16.msra.mxu0 %v3301
        %3315 = vmatpush.bf16.msra.mxu0 %v3300
        %3316 = vmatpush.bf16.msra.mxu0 %v3299
        %3317 = vmatpush.bf16.msra.mxu0 %v3298
        %3318 = vmatpush.bf16.msra.mxu0 %v3297
        %3319 = vmatpush.bf16.msra.mxu0 %v3296
        %3320 = vmatmul.bf16.gmra.mxu0 %v3246
        %v3321 = vpop.f32.mrf.mxu0
        %v3322 = vadd.f32 0.0, %v3321
        %v3323 = vpop.f32.mrf.mxu0
        %v3324 = vadd.f32 0.0, %v3323
        %3325 = vdwg.mxu0
        %v3326 = vadd.f32 %v3240, %v3322
        %v3327 = vadd.f32 %v3242, %v3324
        %v3328 = vld [vmem:[%s261] ss:$2 sm:$0xff]
        %v3329 = vld [vmem:[%s675] ss:$2 sm:$0xff]
        %v3330 = vpack.c.bf16 %v3329, %v3328
        %s3331 = scalar_lea.vmem %s1, 1344
        %v3332 = vld [vmem:[%s3331] sm:$0xf]
        %v3333 = vld [vmem:[%s3331 + $0x4] sm:$0xf]
        %v3334 = vld [vmem:[%s3331 + $0x8] sm:$0xf]
        %v3335 = vld [vmem:[%s3331 + $0xc] sm:$0xf]
        %v3336 = vld [vmem:[%s3331 + $0x10] sm:$0xf]
        %v3337 = vld [vmem:[%s3331 + $0x14] sm:$0xf]
        %v3338 = vld [vmem:[%s3331 + $0x18] sm:$0xf]
        %v3339 = vld [vmem:[%s3331 + $0x1c] sm:$0xf]
        %v3340 = vld [vmem:[%s3331 + $0x20] sm:$0xf]
        %v3341 = vld [vmem:[%s3331 + $0x24] sm:$0xf]
        %v3342 = vld [vmem:[%s3331 + $0x28] sm:$0xf]
        %v3343 = vld [vmem:[%s3331 + $0x2c] sm:$0xf]
        %v3344 = vld [vmem:[%s3331 + $0x30] sm:$0xf]
        %v3345 = vld [vmem:[%s3331 + $0x34] sm:$0xf]
        %v3346 = vld [vmem:[%s3331 + $0x38] sm:$0xf]
        %v3347 = vld [vmem:[%s3331 + $0x3c] sm:$0xf]
        %v3364 = vunpack.c.l.b16 %v3332
        %v3365 = vunpack.c.l.b16 %v3333
        %v3366 = vunpack.c.l.b16 %v3334
        %v3367 = vunpack.c.l.b16 %v3335
        %v3368 = vunpack.c.l.b16 %v3336
        %v3369 = vunpack.c.l.b16 %v3337
        %v3370 = vunpack.c.l.b16 %v3338
        %v3371 = vunpack.c.l.b16 %v3339
        %v3372 = vunpack.c.l.b16 %v3340
        %v3373 = vunpack.c.l.b16 %v3341
        %v3374 = vunpack.c.l.b16 %v3342
        %v3375 = vunpack.c.l.b16 %v3343
        %v3376 = vunpack.c.l.b16 %v3344
        %v3377 = vunpack.c.l.b16 %v3345
        %v3378 = vunpack.c.l.b16 %v3346
        %v3379 = vunpack.c.l.b16 %v3347
        %v3380 = vpack.c.b16 %v3365, %v3364
        %v3381 = vpack.c.b16 %v3367, %v3366
        %v3382 = vpack.c.b16 %v3369, %v3368
        %v3383 = vpack.c.b16 %v3371, %v3370
        %v3384 = vpack.c.b16 %v3373, %v3372
        %v3385 = vpack.c.b16 %v3375, %v3374
        %v3386 = vpack.c.b16 %v3377, %v3376
        %v3387 = vpack.c.b16 %v3379, %v3378
        %3396 = vmatpush.bf16.msra.mxu0 %v3387
        %3397 = vmatpush.bf16.msra.mxu0 %v3386
        %3398 = vmatpush.bf16.msra.mxu0 %v3385
        %3399 = vmatpush.bf16.msra.mxu0 %v3384
        %3400 = vmatpush.bf16.msra.mxu0 %v3383
        %3401 = vmatpush.bf16.msra.mxu0 %v3382
        %3402 = vmatpush.bf16.msra.mxu0 %v3381
        %3403 = vmatpush.bf16.msra.mxu0 %v3380
        %3404 = vmatmul.bf16.gmra.mxu0 %v3330
        %v3405 = vpop.f32.mrf.mxu0
        %v3406 = vadd.f32 0.0, %v3405
        %v3407 = vpop.f32.mrf.mxu0
        %v3408 = vadd.f32 0.0, %v3407
        %3409 = vdwg.mxu0
        %v3410 = vadd.f32 %v3326, %v3406
        %v3411 = vadd.f32 %v3327, %v3408
        %v3412 = vld [vmem:[%s795] ss:$2 sm:$0xff]
        %v3413 = vld [vmem:[%s797] ss:$2 sm:$0xff]
        %v3414 = vpack.c.bf16 %v3413, %v3412
        %s3415 = scalar_lea.vmem %s1, 1408
        %v3416 = vld [vmem:[%s3415] sm:$0xf]
        %v3417 = vld [vmem:[%s3415 + $0x4] sm:$0xf]
        %v3418 = vld [vmem:[%s3415 + $0x8] sm:$0xf]
        %v3419 = vld [vmem:[%s3415 + $0xc] sm:$0xf]
        %v3420 = vld [vmem:[%s3415 + $0x10] sm:$0xf]
        %v3421 = vld [vmem:[%s3415 + $0x14] sm:$0xf]
        %v3422 = vld [vmem:[%s3415 + $0x18] sm:$0xf]
        %v3423 = vld [vmem:[%s3415 + $0x1c] sm:$0xf]
        %v3424 = vld [vmem:[%s3415 + $0x20] sm:$0xf]
        %v3425 = vld [vmem:[%s3415 + $0x24] sm:$0xf]
        %v3426 = vld [vmem:[%s3415 + $0x28] sm:$0xf]
        %v3427 = vld [vmem:[%s3415 + $0x2c] sm:$0xf]
        %v3428 = vld [vmem:[%s3415 + $0x30] sm:$0xf]
        %v3429 = vld [vmem:[%s3415 + $0x34] sm:$0xf]
        %v3430 = vld [vmem:[%s3415 + $0x38] sm:$0xf]
        %v3431 = vld [vmem:[%s3415 + $0x3c] sm:$0xf]
        %v3448 = vunpack.c.l.b16 %v3416
        %v3449 = vunpack.c.l.b16 %v3417
        %v3450 = vunpack.c.l.b16 %v3418
        %v3451 = vunpack.c.l.b16 %v3419
        %v3452 = vunpack.c.l.b16 %v3420
        %v3453 = vunpack.c.l.b16 %v3421
        %v3454 = vunpack.c.l.b16 %v3422
        %v3455 = vunpack.c.l.b16 %v3423
        %v3456 = vunpack.c.l.b16 %v3424
        %v3457 = vunpack.c.l.b16 %v3425
        %v3458 = vunpack.c.l.b16 %v3426
        %v3459 = vunpack.c.l.b16 %v3427
        %v3460 = vunpack.c.l.b16 %v3428
        %v3461 = vunpack.c.l.b16 %v3429
        %v3462 = vunpack.c.l.b16 %v3430
        %v3463 = vunpack.c.l.b16 %v3431
        %v3464 = vpack.c.b16 %v3449, %v3448
        %v3465 = vpack.c.b16 %v3451, %v3450
        %v3466 = vpack.c.b16 %v3453, %v3452
        %v3467 = vpack.c.b16 %v3455, %v3454
        %v3468 = vpack.c.b16 %v3457, %v3456
        %v3469 = vpack.c.b16 %v3459, %v3458
        %v3470 = vpack.c.b16 %v3461, %v3460
        %v3471 = vpack.c.b16 %v3463, %v3462
        %3480 = vmatpush.bf16.msra.mxu0 %v3471
        %3481 = vmatpush.bf16.msra.mxu0 %v3470
        %3482 = vmatpush.bf16.msra.mxu0 %v3469
        %3483 = vmatpush.bf16.msra.mxu0 %v3468
        %3484 = vmatpush.bf16.msra.mxu0 %v3467
        %3485 = vmatpush.bf16.msra.mxu0 %v3466
        %3486 = vmatpush.bf16.msra.mxu0 %v3465
        %3487 = vmatpush.bf16.msra.mxu0 %v3464
        %3488 = vmatmul.bf16.gmra.mxu0 %v3414
        %v3489 = vpop.f32.mrf.mxu0
        %v3490 = vadd.f32 0.0, %v3489
        %v3491 = vpop.f32.mrf.mxu0
        %v3492 = vadd.f32 0.0, %v3491
        %3493 = vdwg.mxu0
        %v3494 = vadd.f32 %v3410, %v3490
        %v3495 = vadd.f32 %v3411, %v3492
        %v3496 = vld [vmem:[%s917] ss:$2 sm:$0xff]
        %v3497 = vld [vmem:[%s919] ss:$2 sm:$0xff]
        %v3498 = vpack.c.bf16 %v3497, %v3496
        %s3499 = scalar_lea.vmem %s1, 1472
        %v3500 = vld [vmem:[%s3499] sm:$0xf]
        %v3501 = vld [vmem:[%s3499 + $0x4] sm:$0xf]
        %v3502 = vld [vmem:[%s3499 + $0x8] sm:$0xf]
        %v3503 = vld [vmem:[%s3499 + $0xc] sm:$0xf]
        %v3504 = vld [vmem:[%s3499 + $0x10] sm:$0xf]
        %v3505 = vld [vmem:[%s3499 + $0x14] sm:$0xf]
        %v3506 = vld [vmem:[%s3499 + $0x18] sm:$0xf]
        %v3507 = vld [vmem:[%s3499 + $0x1c] sm:$0xf]
        %v3508 = vld [vmem:[%s3499 + $0x20] sm:$0xf]
        %v3509 = vld [vmem:[%s3499 + $0x24] sm:$0xf]
        %v3510 = vld [vmem:[%s3499 + $0x28] sm:$0xf]
        %v3511 = vld [vmem:[%s3499 + $0x2c] sm:$0xf]
        %v3512 = vld [vmem:[%s3499 + $0x30] sm:$0xf]
        %v3513 = vld [vmem:[%s3499 + $0x34] sm:$0xf]
        %v3514 = vld [vmem:[%s3499 + $0x38] sm:$0xf]
        %v3515 = vld [vmem:[%s3499 + $0x3c] sm:$0xf]
        %v3532 = vunpack.c.l.b16 %v3500
        %v3533 = vunpack.c.l.b16 %v3501
        %v3534 = vunpack.c.l.b16 %v3502
        %v3535 = vunpack.c.l.b16 %v3503
        %v3536 = vunpack.c.l.b16 %v3504
        %v3537 = vunpack.c.l.b16 %v3505
        %v3538 = vunpack.c.l.b16 %v3506
        %v3539 = vunpack.c.l.b16 %v3507
        %v3540 = vunpack.c.l.b16 %v3508
        %v3541 = vunpack.c.l.b16 %v3509
        %v3542 = vunpack.c.l.b16 %v3510
        %v3543 = vunpack.c.l.b16 %v3511
        %v3544 = vunpack.c.l.b16 %v3512
        %v3545 = vunpack.c.l.b16 %v3513
        %v3546 = vunpack.c.l.b16 %v3514
        %v3547 = vunpack.c.l.b16 %v3515
        %v3548 = vpack.c.b16 %v3533, %v3532
        %v3549 = vpack.c.b16 %v3535, %v3534
        %v3550 = vpack.c.b16 %v3537, %v3536
        %v3551 = vpack.c.b16 %v3539, %v3538
        %v3552 = vpack.c.b16 %v3541, %v3540
        %v3553 = vpack.c.b16 %v3543, %v3542
        %v3554 = vpack.c.b16 %v3545, %v3544
        %v3555 = vpack.c.b16 %v3547, %v3546
        %3564 = vmatpush.bf16.msra.mxu0 %v3555
        %3565 = vmatpush.bf16.msra.mxu0 %v3554
        %3566 = vmatpush.bf16.msra.mxu0 %v3553
        %3567 = vmatpush.bf16.msra.mxu0 %v3552
        %3568 = vmatpush.bf16.msra.mxu0 %v3551
        %3569 = vmatpush.bf16.msra.mxu0 %v3550
        %3570 = vmatpush.bf16.msra.mxu0 %v3549
        %3571 = vmatpush.bf16.msra.mxu0 %v3548
        %3572 = vmatmul.bf16.gmra.mxu0 %v3498
        %v3573 = vpop.f32.mrf.mxu0
        %v3574 = vadd.f32 0.0, %v3573
        %v3575 = vpop.f32.mrf.mxu0
        %v3576 = vadd.f32 0.0, %v3575
        %3577 = vdwg.mxu0
        %v3578 = vadd.f32 %v3494, %v3574
        %v3579 = vadd.f32 %v3495, %v3576
        %v3580 = vld [vmem:[%s1039] ss:$2 sm:$0xff]
        %v3581 = vld [vmem:[%s1041] ss:$2 sm:$0xff]
        %v3582 = vpack.c.bf16 %v3581, %v3580
        %s3583 = scalar_lea.vmem %s1, 1536
        %v3584 = vld [vmem:[%s3583] sm:$0xf]
        %v3585 = vld [vmem:[%s3583 + $0x4] sm:$0xf]
        %v3586 = vld [vmem:[%s3583 + $0x8] sm:$0xf]
        %v3587 = vld [vmem:[%s3583 + $0xc] sm:$0xf]
        %v3588 = vld [vmem:[%s3583 + $0x10] sm:$0xf]
        %v3589 = vld [vmem:[%s3583 + $0x14] sm:$0xf]
        %v3590 = vld [vmem:[%s3583 + $0x18] sm:$0xf]
        %v3591 = vld [vmem:[%s3583 + $0x1c] sm:$0xf]
        %v3592 = vld [vmem:[%s3583 + $0x20] sm:$0xf]
        %v3593 = vld [vmem:[%s3583 + $0x24] sm:$0xf]
        %v3594 = vld [vmem:[%s3583 + $0x28] sm:$0xf]
        %v3595 = vld [vmem:[%s3583 + $0x2c] sm:$0xf]
        %v3596 = vld [vmem:[%s3583 + $0x30] sm:$0xf]
        %v3597 = vld [vmem:[%s3583 + $0x34] sm:$0xf]
        %v3598 = vld [vmem:[%s3583 + $0x38] sm:$0xf]
        %v3599 = vld [vmem:[%s3583 + $0x3c] sm:$0xf]
        %v3616 = vunpack.c.l.b16 %v3584
        %v3617 = vunpack.c.l.b16 %v3585
        %v3618 = vunpack.c.l.b16 %v3586
        %v3619 = vunpack.c.l.b16 %v3587
        %v3620 = vunpack.c.l.b16 %v3588
        %v3621 = vunpack.c.l.b16 %v3589
        %v3622 = vunpack.c.l.b16 %v3590
        %v3623 = vunpack.c.l.b16 %v3591
        %v3624 = vunpack.c.l.b16 %v3592
        %v3625 = vunpack.c.l.b16 %v3593
        %v3626 = vunpack.c.l.b16 %v3594
        %v3627 = vunpack.c.l.b16 %v3595
        %v3628 = vunpack.c.l.b16 %v3596
        %v3629 = vunpack.c.l.b16 %v3597
        %v3630 = vunpack.c.l.b16 %v3598
        %v3631 = vunpack.c.l.b16 %v3599
        %v3632 = vpack.c.b16 %v3617, %v3616
        %v3633 = vpack.c.b16 %v3619, %v3618
        %v3634 = vpack.c.b16 %v3621, %v3620
        %v3635 = vpack.c.b16 %v3623, %v3622
        %v3636 = vpack.c.b16 %v3625, %v3624
        %v3637 = vpack.c.b16 %v3627, %v3626
        %v3638 = vpack.c.b16 %v3629, %v3628
        %v3639 = vpack.c.b16 %v3631, %v3630
        %3648 = vmatpush.bf16.msra.mxu0 %v3639
        %3649 = vmatpush.bf16.msra.mxu0 %v3638
        %3650 = vmatpush.bf16.msra.mxu0 %v3637
        %3651 = vmatpush.bf16.msra.mxu0 %v3636
        %3652 = vmatpush.bf16.msra.mxu0 %v3635
        %3653 = vmatpush.bf16.msra.mxu0 %v3634
        %3654 = vmatpush.bf16.msra.mxu0 %v3633
        %3655 = vmatpush.bf16.msra.mxu0 %v3632
        %3656 = vmatmul.bf16.gmra.mxu0 %v3582
        %v3657 = vpop.f32.mrf.mxu0
        %v3658 = vadd.f32 0.0, %v3657
        %v3659 = vpop.f32.mrf.mxu0
        %v3660 = vadd.f32 0.0, %v3659
        %3661 = vdwg.mxu0
        %v3662 = vadd.f32 %v3578, %v3658
        %v3663 = vadd.f32 %v3579, %v3660
        %v3664 = vld [vmem:[%s1161] ss:$2 sm:$0xff]
        %v3665 = vld [vmem:[%s1163] ss:$2 sm:$0xff]
        %v3666 = vpack.c.bf16 %v3665, %v3664
        %s3667 = scalar_lea.vmem %s1, 1600
        %v3668 = vld [vmem:[%s3667] sm:$0xf]
        %v3669 = vld [vmem:[%s3667 + $0x4] sm:$0xf]
        %v3670 = vld [vmem:[%s3667 + $0x8] sm:$0xf]
        %v3671 = vld [vmem:[%s3667 + $0xc] sm:$0xf]
        %v3672 = vld [vmem:[%s3667 + $0x10] sm:$0xf]
        %v3673 = vld [vmem:[%s3667 + $0x14] sm:$0xf]
        %v3674 = vld [vmem:[%s3667 + $0x18] sm:$0xf]
        %v3675 = vld [vmem:[%s3667 + $0x1c] sm:$0xf]
        %v3676 = vld [vmem:[%s3667 + $0x20] sm:$0xf]
        %v3677 = vld [vmem:[%s3667 + $0x24] sm:$0xf]
        %v3678 = vld [vmem:[%s3667 + $0x28] sm:$0xf]
        %v3679 = vld [vmem:[%s3667 + $0x2c] sm:$0xf]
        %v3680 = vld [vmem:[%s3667 + $0x30] sm:$0xf]
        %v3681 = vld [vmem:[%s3667 + $0x34] sm:$0xf]
        %v3682 = vld [vmem:[%s3667 + $0x38] sm:$0xf]
        %v3683 = vld [vmem:[%s3667 + $0x3c] sm:$0xf]
        %v3700 = vunpack.c.l.b16 %v3668
        %v3701 = vunpack.c.l.b16 %v3669
        %v3702 = vunpack.c.l.b16 %v3670
        %v3703 = vunpack.c.l.b16 %v3671
        %v3704 = vunpack.c.l.b16 %v3672
        %v3705 = vunpack.c.l.b16 %v3673
        %v3706 = vunpack.c.l.b16 %v3674
        %v3707 = vunpack.c.l.b16 %v3675
        %v3708 = vunpack.c.l.b16 %v3676
        %v3709 = vunpack.c.l.b16 %v3677
        %v3710 = vunpack.c.l.b16 %v3678
        %v3711 = vunpack.c.l.b16 %v3679
        %v3712 = vunpack.c.l.b16 %v3680
        %v3713 = vunpack.c.l.b16 %v3681
        %v3714 = vunpack.c.l.b16 %v3682
        %v3715 = vunpack.c.l.b16 %v3683
        %v3716 = vpack.c.b16 %v3701, %v3700
        %v3717 = vpack.c.b16 %v3703, %v3702
        %v3718 = vpack.c.b16 %v3705, %v3704
        %v3719 = vpack.c.b16 %v3707, %v3706
        %v3720 = vpack.c.b16 %v3709, %v3708
        %v3721 = vpack.c.b16 %v3711, %v3710
        %v3722 = vpack.c.b16 %v3713, %v3712
        %v3723 = vpack.c.b16 %v3715, %v3714
        %3732 = vmatpush.bf16.msra.mxu0 %v3723
        %3733 = vmatpush.bf16.msra.mxu0 %v3722
        %3734 = vmatpush.bf16.msra.mxu0 %v3721
        %3735 = vmatpush.bf16.msra.mxu0 %v3720
        %3736 = vmatpush.bf16.msra.mxu0 %v3719
        %3737 = vmatpush.bf16.msra.mxu0 %v3718
        %3738 = vmatpush.bf16.msra.mxu0 %v3717
        %3739 = vmatpush.bf16.msra.mxu0 %v3716
        %3740 = vmatmul.bf16.gmra.mxu0 %v3666
        %v3741 = vpop.f32.mrf.mxu0
        %v3742 = vadd.f32 0.0, %v3741
        %v3743 = vpop.f32.mrf.mxu0
        %v3744 = vadd.f32 0.0, %v3743
        %3745 = vdwg.mxu0
        %v3746 = vadd.f32 %v3662, %v3742
        %v3747 = vadd.f32 %v3663, %v3744
        %v3748 = vld [vmem:[%s1283] ss:$2 sm:$0xff]
        %v3749 = vld [vmem:[%s1285] ss:$2 sm:$0xff]
        %v3750 = vpack.c.bf16 %v3749, %v3748
        %s3751 = scalar_lea.vmem %s1, 1664
        %v3752 = vld [vmem:[%s3751] sm:$0xf]
        %v3753 = vld [vmem:[%s3751 + $0x4] sm:$0xf]
        %v3754 = vld [vmem:[%s3751 + $0x8] sm:$0xf]
        %v3755 = vld [vmem:[%s3751 + $0xc] sm:$0xf]
        %v3756 = vld [vmem:[%s3751 + $0x10] sm:$0xf]
        %v3757 = vld [vmem:[%s3751 + $0x14] sm:$0xf]
        %v3758 = vld [vmem:[%s3751 + $0x18] sm:$0xf]
        %v3759 = vld [vmem:[%s3751 + $0x1c] sm:$0xf]
        %v3760 = vld [vmem:[%s3751 + $0x20] sm:$0xf]
        %v3761 = vld [vmem:[%s3751 + $0x24] sm:$0xf]
        %v3762 = vld [vmem:[%s3751 + $0x28] sm:$0xf]
        %v3763 = vld [vmem:[%s3751 + $0x2c] sm:$0xf]
        %v3764 = vld [vmem:[%s3751 + $0x30] sm:$0xf]
        %v3765 = vld [vmem:[%s3751 + $0x34] sm:$0xf]
        %v3766 = vld [vmem:[%s3751 + $0x38] sm:$0xf]
        %v3767 = vld [vmem:[%s3751 + $0x3c] sm:$0xf]
        %v3784 = vunpack.c.l.b16 %v3752
        %v3785 = vunpack.c.l.b16 %v3753
        %v3786 = vunpack.c.l.b16 %v3754
        %v3787 = vunpack.c.l.b16 %v3755
        %v3788 = vunpack.c.l.b16 %v3756
        %v3789 = vunpack.c.l.b16 %v3757
        %v3790 = vunpack.c.l.b16 %v3758
        %v3791 = vunpack.c.l.b16 %v3759
        %v3792 = vunpack.c.l.b16 %v3760
        %v3793 = vunpack.c.l.b16 %v3761
        %v3794 = vunpack.c.l.b16 %v3762
        %v3795 = vunpack.c.l.b16 %v3763
        %v3796 = vunpack.c.l.b16 %v3764
        %v3797 = vunpack.c.l.b16 %v3765
        %v3798 = vunpack.c.l.b16 %v3766
        %v3799 = vunpack.c.l.b16 %v3767
        %v3800 = vpack.c.b16 %v3785, %v3784
        %v3801 = vpack.c.b16 %v3787, %v3786
        %v3802 = vpack.c.b16 %v3789, %v3788
        %v3803 = vpack.c.b16 %v3791, %v3790
        %v3804 = vpack.c.b16 %v3793, %v3792
        %v3805 = vpack.c.b16 %v3795, %v3794
        %v3806 = vpack.c.b16 %v3797, %v3796
        %v3807 = vpack.c.b16 %v3799, %v3798
        %3816 = vmatpush.bf16.msra.mxu0 %v3807
        %3817 = vmatpush.bf16.msra.mxu0 %v3806
        %3818 = vmatpush.bf16.msra.mxu0 %v3805
        %3819 = vmatpush.bf16.msra.mxu0 %v3804
        %3820 = vmatpush.bf16.msra.mxu0 %v3803
        %3821 = vmatpush.bf16.msra.mxu0 %v3802
        %3822 = vmatpush.bf16.msra.mxu0 %v3801
        %3823 = vmatpush.bf16.msra.mxu0 %v3800
        %3824 = vmatmul.bf16.gmra.mxu0 %v3750
        %v3825 = vpop.f32.mrf.mxu0
        %v3826 = vadd.f32 0.0, %v3825
        %v3827 = vpop.f32.mrf.mxu0
        %v3828 = vadd.f32 0.0, %v3827
        %3829 = vdwg.mxu0
        %v3830 = vadd.f32 %v3746, %v3826
        %v3831 = vadd.f32 %v3747, %v3828
        %s3832 = scalar_lea.vmem %s2, 8
        %v3833 = vld [vmem:[%s3832] sm:$0x1]
        %v3834 = vperm.slane %v3833, 0
        %v3835 = vadd.f32 %v3830, %v3834
        %v3836 = vadd.f32 %v3831, %v3834
        %3837 = vadd.xlane.f32.xlu0 %v3835
        %v3838 = vpop.xlane.xlu0 %3837
        %3839 = vadd.xlane.f32.xlu0 %v3836
        %v3840 = vpop.xlane.xlu0 %3839
        %v3841 = vmul.f32 %v3838, 0.0625
        %v3842 = vmul.f32 %v3840, 0.0625
        %v3843 = vmul.f32 %v3835, %v3835
        %v3844 = vmul.f32 %v3836, %v3836
        %3845 = vadd.xlane.f32.xlu0 %v3843
        %v3846 = vpop.xlane.xlu0 %3845
        %3847 = vadd.xlane.f32.xlu0 %v3844
        %v3848 = vpop.xlane.xlu0 %3847
        %v3849 = vmul.f32 %v3846, 0.0625
        %v3850 = vmul.f32 %v3848, 0.0625
        %v3851 = vsub.f32 %v3835, %v3841
        %v3852 = vsub.f32 %v3836, %v3842
        %v3853 = vmul.f32 %v3841, %v3841
        %v3854 = vmul.f32 %v3842, %v3842
        %v3855 = vsub.f32 %v3849, %v3853
        %v3856 = vsub.f32 %v3850, %v3854
        %v3857 = vadd.f32 %v3855, 1e-06
        %v3858 = vadd.f32 %v3856, 1e-06
        %v3859 = vrsqrt.pop %v3857
        %v3860 = vmul.f32 %v3859, %v3857
        %v3861 = vmul.f32 %v3860, %v3859
        %v3862 = vmul.f32 0.5, %v3861
        %v3863 = vsub.f32 1.5, %v3862
        %v3864 = vmul.f32 %v3859, %v3863
        %vm3865 = vweird.f32 %v3857
        %vm3866 = vweird.f32 %v3859
        %vm3867 = vmor %vm3865, %vm3866
        %v3868 = vsel %vm3867, %v3859, %v3864
        %v3869 = vrsqrt.pop %v3858
        %v3870 = vmul.f32 %v3869, %v3858
        %v3871 = vmul.f32 %v3870, %v3869
        %v3872 = vmul.f32 0.5, %v3871
        %v3873 = vsub.f32 1.5, %v3872
        %v3874 = vmul.f32 %v3869, %v3873
        %vm3875 = vweird.f32 %v3858
        %vm3876 = vweird.f32 %v3869
        %vm3877 = vmor %vm3875, %vm3876
        %v3878 = vsel %vm3877, %v3869, %v3874
        %v3879 = vmul.f32 %v3851, %v3868
        %v3880 = vmul.f32 %v3852, %v3878
        %v3881 = vld [vmem:[%s3832 + $0x1] sm:$0x1]
        %v3882 = vperm.slane %v3881, 0
        %v3883 = vmul.f32 %v3882, %v3879
        %v3884 = vmul.f32 %v3882, %v3880
        %v3885 = vld [vmem:[%s3832 + $0x2] sm:$0x1]
        %v3886 = vperm.slane %v3885, 0
        %v3887 = vadd.f32 %v3883, %v3886
        %v3888 = vadd.f32 %v3884, %v3886
        %v3889 = vmul.f32 %v3887, 0.5
        %v3890 = vmul.f32 %v3888, 0.5
        %v3891 = vmul.f32 %v3887, 0.70710677
        %v3892 = vmul.f32 %v3888, 0.70710677
        %v3893 = vand.u32 2147483647, %v3891
        %v3894 = vand.u32 2147483647, %v3892
        %v3895 = vmul.f32 %v3893, 0.3275911
        %v3896 = vmul.f32 %v3894, 0.3275911
        %v3897 = vadd.f32 %v3895, 1.0
        %v3898 = vadd.f32 %v3896, 1.0
        %v3899 = vrcp.pop %v3897
        %v3900 = vmul.f32 %v3897, %v3899
        %v3901 = vsub.f32 1.0, %v3900
        %v3902 = vmul.f32 %v3899, %v3901
        %v3903 = vadd.f32 %v3899, %v3902
        %vm3904 = vweird.f32 %v3897
        %vm3905 = vweird.f32 %v3899
        %vm3906 = vmor %vm3904, %vm3905
        %v3907 = vsel %vm3906, %v3899, %v3903
        %v3908 = vand.u32 2147483647, %v3897
        %vm3909 = vcmp.eq.f32.partialorder %v3908, 8.507059e+37
        %v3910 = vand.u32 %v3897, 2147483648
        %v3911 = vor.u32 1.1754944e-38, %v3910
        %v3912 = vsel %vm3909, %v3911, %v3907
        %v3913 = vmul.f32 1.0, %v3912
        %v3914 = vrcp.pop %v3898
        %v3915 = vmul.f32 %v3898, %v3914
        %v3916 = vsub.f32 1.0, %v3915
        %v3917 = vmul.f32 %v3914, %v3916
        %v3918 = vadd.f32 %v3914, %v3917
        %vm3919 = vweird.f32 %v3898
        %vm3920 = vweird.f32 %v3914
        %vm3921 = vmor %vm3919, %vm3920
        %v3922 = vsel %vm3921, %v3914, %v3918
        %v3923 = vand.u32 2147483647, %v3898
        %vm3924 = vcmp.eq.f32.partialorder %v3923, 8.507059e+37
        %v3925 = vand.u32 %v3898, 2147483648
        %v3926 = vor.u32 1.1754944e-38, %v3925
        %v3927 = vsel %vm3924, %v3926, %v3922
        %v3928 = vmul.f32 1.0, %v3927
        %v3929 = vmul.f32 %v3913, 1.0614054
        %v3930 = vmul.f32 %v3928, 1.0614054
        %v3931 = vadd.f32 %v3929, -1.4531521
        %v3932 = vadd.f32 %v3930, -1.4531521
        %v3933 = vmul.f32 %v3931, %v3913
        %v3934 = vmul.f32 %v3932, %v3928
        %v3935 = vadd.f32 %v3933, 1.4214138
        %v3936 = vadd.f32 %v3934, 1.4214138
        %v3937 = vmul.f32 %v3935, %v3913
        %v3938 = vmul.f32 %v3936, %v3928
        %v3939 = vadd.f32 %v3937, -0.28449672
        %v3940 = vadd.f32 %v3938, -0.28449672
        %v3941 = vmul.f32 %v3939, %v3913
        %v3942 = vmul.f32 %v3940, %v3928
        %v3943 = vadd.f32 %v3941, 0.2548296
        %v3944 = vadd.f32 %v3942, 0.2548296
        %v3945 = vmul.f32 %v3943, %v3913
        %v3946 = vmul.f32 %v3944, %v3928
        %v3947 = vsub.f32 0.0, %v3893
        %v3948 = vsub.f32 0.0, %v3894
        %v3949 = vmul.f32 %v3947, %v3893
        %v3950 = vmul.f32 %v3948, %v3894
        %v3951 = vmul.f32 %v3949, 1.442695
        %v3952 = vpow.pop %v3951
        %v3953 = vmul.f32 %v3950, 1.442695
        %v3954 = vpow.pop %v3953
        %v3955 = vmul.f32 %v3945, %v3952
        %v3956 = vmul.f32 %v3946, %v3954
        %v3957 = vsub.f32 1.0, %v3955
        %v3958 = vsub.f32 1.0, %v3956
        %vm3959 = vcmp.ge.f32.partialorder %v3891, 0.0
        %vm3960 = vcmp.ge.f32.partialorder %v3892, 0.0
        %v3961 = vsub.f32 0.0, %v3957
        %v3962 = vsub.f32 0.0, %v3958
        %v3963 = vsel %vm3959, %v3957, %v3961
        %v3964 = vsel %vm3960, %v3958, %v3962
        %v3965 = vadd.f32 %v3963, 1.0
        %v3966 = vadd.f32 %v3964, 1.0
        %v3967 = vmul.f32 %v3889, %v3965
        %v3968 = vmul.f32 %v3890, %v3966
        %3969 = vst [vmem:[#allocation2] sm:$0xf] 0.0
        %s3970 = scalar_lea.vmem [#allocation2], 72
        %3971 = vst [vmem:[%s3970] sm:$0xf] 0.0
        %3972 = vst [vmem:[%s261] sm:$0x1] 0.0
        %3973 = vst [vmem:[%s261 + $0x18] sm:$0x1] 0.0
        %3974 = vst [vmem:[%s261 + $0x3] sm:$0x1] 0.0
        %3975 = vst [vmem:[%s261 + $0x1b] sm:$0x1] 0.0
        %3976 = vst [vmem:[%s261 + $0x1] sm:$0x3] %v3967
        %3977 = vst [vmem:[%s261 + $0x19] sm:$0x3] %v3968
        %v3978 = vld [vmem:[#allocation2] ss:$2 sm:$0xff]
        %v3979 = vpack.c.bf16 %v3978, %v3978
        %s3980 = scalar_lea.vmem %s1, 1728
        %v3981 = vld [vmem:[%s3980] sm:$0xf]
        %v3982 = vld [vmem:[%s3980 + $0x4] sm:$0xf]
        %v3983 = vld [vmem:[%s3980 + $0x8] sm:$0xf]
        %v3984 = vld [vmem:[%s3980 + $0xc] sm:$0xf]
        %v3985 = vld [vmem:[%s3980 + $0x10] sm:$0xf]
        %v3986 = vld [vmem:[%s3980 + $0x14] sm:$0xf]
        %v3987 = vld [vmem:[%s3980 + $0x18] sm:$0xf]
        %v3988 = vld [vmem:[%s3980 + $0x1c] sm:$0xf]
        %v3989 = vld [vmem:[%s3980 + $0x20] sm:$0xf]
        %v3990 = vld [vmem:[%s3980 + $0x24] sm:$0xf]
        %v3991 = vld [vmem:[%s3980 + $0x28] sm:$0xf]
        %v3992 = vld [vmem:[%s3980 + $0x2c] sm:$0xf]
        %v3993 = vld [vmem:[%s3980 + $0x30] sm:$0xf]
        %v3994 = vld [vmem:[%s3980 + $0x34] sm:$0xf]
        %v3995 = vld [vmem:[%s3980 + $0x38] sm:$0xf]
        %v3996 = vld [vmem:[%s3980 + $0x3c] sm:$0xf]
        %v3997 = vld [vmem:[%s361] ss:$2 sm:$0xff]
        %v3998 = vpack.c.bf16 %v3997, %v3997
        %s3999 = scalar_lea.vmem %s1, 1792
        %v4000 = vld [vmem:[%s3999] sm:$0xf]
        %v4001 = vld [vmem:[%s3999 + $0x4] sm:$0xf]
        %v4002 = vld [vmem:[%s3999 + $0x8] sm:$0xf]
        %v4003 = vld [vmem:[%s3999 + $0xc] sm:$0xf]
        %v4004 = vld [vmem:[%s3999 + $0x10] sm:$0xf]
        %v4005 = vld [vmem:[%s3999 + $0x14] sm:$0xf]
        %v4006 = vld [vmem:[%s3999 + $0x18] sm:$0xf]
        %v4007 = vld [vmem:[%s3999 + $0x1c] sm:$0xf]
        %v4008 = vld [vmem:[%s3999 + $0x20] sm:$0xf]
        %v4009 = vld [vmem:[%s3999 + $0x24] sm:$0xf]
        %v4010 = vld [vmem:[%s3999 + $0x28] sm:$0xf]
        %v4011 = vld [vmem:[%s3999 + $0x2c] sm:$0xf]
        %v4012 = vld [vmem:[%s3999 + $0x30] sm:$0xf]
        %v4013 = vld [vmem:[%s3999 + $0x34] sm:$0xf]
        %v4014 = vld [vmem:[%s3999 + $0x38] sm:$0xf]
        %v4015 = vld [vmem:[%s3999 + $0x3c] sm:$0xf]
        %v4032 = vunpack.c.l.b16 %v4000
        %v4033 = vunpack.c.l.b16 %v4001
        %v4034 = vunpack.c.l.b16 %v4002
        %v4035 = vunpack.c.l.b16 %v4003
        %v4036 = vunpack.c.l.b16 %v4004
        %v4037 = vunpack.c.l.b16 %v4005
        %v4038 = vunpack.c.l.b16 %v4006
        %v4039 = vunpack.c.l.b16 %v4007
        %v4040 = vunpack.c.l.b16 %v4008
        %v4041 = vunpack.c.l.b16 %v4009
        %v4042 = vunpack.c.l.b16 %v4010
        %v4043 = vunpack.c.l.b16 %v4011
        %v4044 = vunpack.c.l.b16 %v4012
        %v4045 = vunpack.c.l.b16 %v4013
        %v4046 = vunpack.c.l.b16 %v4014
        %v4047 = vunpack.c.l.b16 %v4015
        %v4048 = vpack.c.b16 %v4033, %v4032
        %v4049 = vpack.c.b16 %v4035, %v4034
        %v4050 = vpack.c.b16 %v4037, %v4036
        %v4051 = vpack.c.b16 %v4039, %v4038
        %v4052 = vpack.c.b16 %v4041, %v4040
        %v4053 = vpack.c.b16 %v4043, %v4042
        %v4054 = vpack.c.b16 %v4045, %v4044
        %v4055 = vpack.c.b16 %v4047, %v4046
        %4064 = vmatpush.bf16.msra.mxu0 %v4055
        %4065 = vmatpush.bf16.msra.mxu0 %v4054
        %4066 = vmatpush.bf16.msra.mxu0 %v4053
        %4067 = vmatpush.bf16.msra.mxu0 %v4052
        %4068 = vmatpush.bf16.msra.mxu0 %v4051
        %4069 = vmatpush.bf16.msra.mxu0 %v4050
        %4070 = vmatpush.bf16.msra.mxu0 %v4049
        %4071 = vmatpush.bf16.msra.mxu0 %v4048
        %4072 = vmatmul.bf16.gmra.mxu0 %v3998
        %v4073 = vpop.f32.mrf.mxu0
        %v4074 = vadd.f32 0.0, %v4073
        %v4075 = vpop.f32.mrf.mxu0
        %4076 = vdwg.mxu0
        %v4093 = vunpack.c.l.b16 %v3981
        %v4094 = vunpack.c.l.b16 %v3982
        %v4095 = vunpack.c.l.b16 %v3983
        %v4096 = vunpack.c.l.b16 %v3984
        %v4097 = vunpack.c.l.b16 %v3985
        %v4098 = vunpack.c.l.b16 %v3986
        %v4099 = vunpack.c.l.b16 %v3987
        %v4100 = vunpack.c.l.b16 %v3988
        %v4101 = vunpack.c.l.b16 %v3989
        %v4102 = vunpack.c.l.b16 %v3990
        %v4103 = vunpack.c.l.b16 %v3991
        %v4104 = vunpack.c.l.b16 %v3992
        %v4105 = vunpack.c.l.b16 %v3993
        %v4106 = vunpack.c.l.b16 %v3994
        %v4107 = vunpack.c.l.b16 %v3995
        %v4108 = vunpack.c.l.b16 %v3996
        %v4109 = vpack.c.b16 %v4094, %v4093
        %v4110 = vpack.c.b16 %v4096, %v4095
        %v4111 = vpack.c.b16 %v4098, %v4097
        %v4112 = vpack.c.b16 %v4100, %v4099
        %v4113 = vpack.c.b16 %v4102, %v4101
        %v4114 = vpack.c.b16 %v4104, %v4103
        %v4115 = vpack.c.b16 %v4106, %v4105
        %v4116 = vpack.c.b16 %v4108, %v4107
        %4125 = vmatpush.bf16.msra.mxu0 %v4116
        %4126 = vmatpush.bf16.msra.mxu0 %v4115
        %4127 = vmatpush.bf16.msra.mxu0 %v4114
        %4128 = vmatpush.bf16.msra.mxu0 %v4113
        %4129 = vmatpush.bf16.msra.mxu0 %v4112
        %4130 = vmatpush.bf16.msra.mxu0 %v4111
        %4131 = vmatpush.bf16.msra.mxu0 %v4110
        %4132 = vmatpush.bf16.msra.mxu0 %v4109
        %4133 = vmatmul.bf16.gmra.mxu0 %v3979
        %v4134 = vpop.f32.mrf.mxu0
        %v4135 = vadd.f32 %v4074, %v4134
        %v4136 = vpop.f32.mrf.mxu0
        %4137 = vdwg.mxu0
        %v4138 = vld [vmem:[%s552] ss:$2 sm:$0xff]
        %v4139 = vpack.c.bf16 %v4138, %v4138
        %s4140 = scalar_lea.vmem %s1, 1856
        %v4141 = vld [vmem:[%s4140] sm:$0xf]
        %v4142 = vld [vmem:[%s4140 + $0x4] sm:$0xf]
        %v4143 = vld [vmem:[%s4140 + $0x8] sm:$0xf]
        %v4144 = vld [vmem:[%s4140 + $0xc] sm:$0xf]
        %v4145 = vld [vmem:[%s4140 + $0x10] sm:$0xf]
        %v4146 = vld [vmem:[%s4140 + $0x14] sm:$0xf]
        %v4147 = vld [vmem:[%s4140 + $0x18] sm:$0xf]
        %v4148 = vld [vmem:[%s4140 + $0x1c] sm:$0xf]
        %v4149 = vld [vmem:[%s4140 + $0x20] sm:$0xf]
        %v4150 = vld [vmem:[%s4140 + $0x24] sm:$0xf]
        %v4151 = vld [vmem:[%s4140 + $0x28] sm:$0xf]
        %v4152 = vld [vmem:[%s4140 + $0x2c] sm:$0xf]
        %v4153 = vld [vmem:[%s4140 + $0x30] sm:$0xf]
        %v4154 = vld [vmem:[%s4140 + $0x34] sm:$0xf]
        %v4155 = vld [vmem:[%s4140 + $0x38] sm:$0xf]
        %v4156 = vld [vmem:[%s4140 + $0x3c] sm:$0xf]
        %v4173 = vunpack.c.l.b16 %v4141
        %v4174 = vunpack.c.l.b16 %v4142
        %v4175 = vunpack.c.l.b16 %v4143
        %v4176 = vunpack.c.l.b16 %v4144
        %v4177 = vunpack.c.l.b16 %v4145
        %v4178 = vunpack.c.l.b16 %v4146
        %v4179 = vunpack.c.l.b16 %v4147
        %v4180 = vunpack.c.l.b16 %v4148
        %v4181 = vunpack.c.l.b16 %v4149
        %v4182 = vunpack.c.l.b16 %v4150
        %v4183 = vunpack.c.l.b16 %v4151
        %v4184 = vunpack.c.l.b16 %v4152
        %v4185 = vunpack.c.l.b16 %v4153
        %v4186 = vunpack.c.l.b16 %v4154
        %v4187 = vunpack.c.l.b16 %v4155
        %v4188 = vunpack.c.l.b16 %v4156
        %v4189 = vpack.c.b16 %v4174, %v4173
        %v4190 = vpack.c.b16 %v4176, %v4175
        %v4191 = vpack.c.b16 %v4178, %v4177
        %v4192 = vpack.c.b16 %v4180, %v4179
        %v4193 = vpack.c.b16 %v4182, %v4181
        %v4194 = vpack.c.b16 %v4184, %v4183
        %v4195 = vpack.c.b16 %v4186, %v4185
        %v4196 = vpack.c.b16 %v4188, %v4187
        %4205 = vmatpush.bf16.msra.mxu0 %v4196
        %4206 = vmatpush.bf16.msra.mxu0 %v4195
        %4207 = vmatpush.bf16.msra.mxu0 %v4194
        %4208 = vmatpush.bf16.msra.mxu0 %v4193
        %4209 = vmatpush.bf16.msra.mxu0 %v4192
        %4210 = vmatpush.bf16.msra.mxu0 %v4191
        %4211 = vmatpush.bf16.msra.mxu0 %v4190
        %4212 = vmatpush.bf16.msra.mxu0 %v4189
        %4213 = vmatmul.bf16.gmra.mxu0 %v4139
        %v4214 = vpop.f32.mrf.mxu0
        %v4215 = vadd.f32 0.0, %v4214
        %v4216 = vpop.f32.mrf.mxu0
        %4217 = vdwg.mxu0
        %v4218 = vadd.f32 %v4135, %v4215
        %v4219 = vld [vmem:[%s261] ss:$2 sm:$0xff]
        %v4220 = vpack.c.bf16 %v4219, %v4219
        %s4221 = scalar_lea.vmem %s1, 1920
        %v4222 = vld [vmem:[%s4221] sm:$0xf]
        %v4223 = vld [vmem:[%s4221 + $0x4] sm:$0xf]
        %v4224 = vld [vmem:[%s4221 + $0x8] sm:$0xf]
        %v4225 = vld [vmem:[%s4221 + $0xc] sm:$0xf]
        %v4226 = vld [vmem:[%s4221 + $0x10] sm:$0xf]
        %v4227 = vld [vmem:[%s4221 + $0x14] sm:$0xf]
        %v4228 = vld [vmem:[%s4221 + $0x18] sm:$0xf]
        %v4229 = vld [vmem:[%s4221 + $0x1c] sm:$0xf]
        %v4230 = vld [vmem:[%s4221 + $0x20] sm:$0xf]
        %v4231 = vld [vmem:[%s4221 + $0x24] sm:$0xf]
        %v4232 = vld [vmem:[%s4221 + $0x28] sm:$0xf]
        %v4233 = vld [vmem:[%s4221 + $0x2c] sm:$0xf]
        %v4234 = vld [vmem:[%s4221 + $0x30] sm:$0xf]
        %v4235 = vld [vmem:[%s4221 + $0x34] sm:$0xf]
        %v4236 = vld [vmem:[%s4221 + $0x38] sm:$0xf]
        %v4237 = vld [vmem:[%s4221 + $0x3c] sm:$0xf]
        %v4254 = vunpack.c.l.b16 %v4222
        %v4255 = vunpack.c.l.b16 %v4223
        %v4256 = vunpack.c.l.b16 %v4224
        %v4257 = vunpack.c.l.b16 %v4225
        %v4258 = vunpack.c.l.b16 %v4226
        %v4259 = vunpack.c.l.b16 %v4227
        %v4260 = vunpack.c.l.b16 %v4228
        %v4261 = vunpack.c.l.b16 %v4229
        %v4262 = vunpack.c.l.b16 %v4230
        %v4263 = vunpack.c.l.b16 %v4231
        %v4264 = vunpack.c.l.b16 %v4232
        %v4265 = vunpack.c.l.b16 %v4233
        %v4266 = vunpack.c.l.b16 %v4234
        %v4267 = vunpack.c.l.b16 %v4235
        %v4268 = vunpack.c.l.b16 %v4236
        %v4269 = vunpack.c.l.b16 %v4237
        %v4270 = vpack.c.b16 %v4255, %v4254
        %v4271 = vpack.c.b16 %v4257, %v4256
        %v4272 = vpack.c.b16 %v4259, %v4258
        %v4273 = vpack.c.b16 %v4261, %v4260
        %v4274 = vpack.c.b16 %v4263, %v4262
        %v4275 = vpack.c.b16 %v4265, %v4264
        %v4276 = vpack.c.b16 %v4267, %v4266
        %v4277 = vpack.c.b16 %v4269, %v4268
        %4286 = vmatpush.bf16.msra.mxu0 %v4277
        %4287 = vmatpush.bf16.msra.mxu0 %v4276
        %4288 = vmatpush.bf16.msra.mxu0 %v4275
        %4289 = vmatpush.bf16.msra.mxu0 %v4274
        %4290 = vmatpush.bf16.msra.mxu0 %v4273
        %4291 = vmatpush.bf16.msra.mxu0 %v4272
        %4292 = vmatpush.bf16.msra.mxu0 %v4271
        %4293 = vmatpush.bf16.msra.mxu0 %v4270
        %4294 = vmatmul.bf16.gmra.mxu0 %v4220
        %v4295 = vpop.f32.mrf.mxu0
        %v4296 = vadd.f32 0.0, %v4295
        %v4297 = vpop.f32.mrf.mxu0
        %4298 = vdwg.mxu0
        %v4299 = vadd.f32 %v4218, %v4296
        %v4300 = vld [vmem:[%s795] ss:$2 sm:$0xff]
        %v4301 = vpack.c.bf16 %v4300, %v4300
        %s4302 = scalar_lea.vmem %s1, 1984
        %v4303 = vld [vmem:[%s4302] sm:$0xf]
        %v4304 = vld [vmem:[%s4302 + $0x4] sm:$0xf]
        %v4305 = vld [vmem:[%s4302 + $0x8] sm:$0xf]
        %v4306 = vld [vmem:[%s4302 + $0xc] sm:$0xf]
        %v4307 = vld [vmem:[%s4302 + $0x10] sm:$0xf]
        %v4308 = vld [vmem:[%s4302 + $0x14] sm:$0xf]
        %v4309 = vld [vmem:[%s4302 + $0x18] sm:$0xf]
        %v4310 = vld [vmem:[%s4302 + $0x1c] sm:$0xf]
        %v4311 = vld [vmem:[%s4302 + $0x20] sm:$0xf]
        %v4312 = vld [vmem:[%s4302 + $0x24] sm:$0xf]
        %v4313 = vld [vmem:[%s4302 + $0x28] sm:$0xf]
        %v4314 = vld [vmem:[%s4302 + $0x2c] sm:$0xf]
        %v4315 = vld [vmem:[%s4302 + $0x30] sm:$0xf]
        %v4316 = vld [vmem:[%s4302 + $0x34] sm:$0xf]
        %v4317 = vld [vmem:[%s4302 + $0x38] sm:$0xf]
        %v4318 = vld [vmem:[%s4302 + $0x3c] sm:$0xf]
        %v4335 = vunpack.c.l.b16 %v4303
        %v4336 = vunpack.c.l.b16 %v4304
        %v4337 = vunpack.c.l.b16 %v4305
        %v4338 = vunpack.c.l.b16 %v4306
        %v4339 = vunpack.c.l.b16 %v4307
        %v4340 = vunpack.c.l.b16 %v4308
        %v4341 = vunpack.c.l.b16 %v4309
        %v4342 = vunpack.c.l.b16 %v4310
        %v4343 = vunpack.c.l.b16 %v4311
        %v4344 = vunpack.c.l.b16 %v4312
        %v4345 = vunpack.c.l.b16 %v4313
        %v4346 = vunpack.c.l.b16 %v4314
        %v4347 = vunpack.c.l.b16 %v4315
        %v4348 = vunpack.c.l.b16 %v4316
        %v4349 = vunpack.c.l.b16 %v4317
        %v4350 = vunpack.c.l.b16 %v4318
        %v4351 = vpack.c.b16 %v4336, %v4335
        %v4352 = vpack.c.b16 %v4338, %v4337
        %v4353 = vpack.c.b16 %v4340, %v4339
        %v4354 = vpack.c.b16 %v4342, %v4341
        %v4355 = vpack.c.b16 %v4344, %v4343
        %v4356 = vpack.c.b16 %v4346, %v4345
        %v4357 = vpack.c.b16 %v4348, %v4347
        %v4358 = vpack.c.b16 %v4350, %v4349
        %4367 = vmatpush.bf16.msra.mxu0 %v4358
        %4368 = vmatpush.bf16.msra.mxu0 %v4357
        %4369 = vmatpush.bf16.msra.mxu0 %v4356
        %4370 = vmatpush.bf16.msra.mxu0 %v4355
        %4371 = vmatpush.bf16.msra.mxu0 %v4354
        %4372 = vmatpush.bf16.msra.mxu0 %v4353
        %4373 = vmatpush.bf16.msra.mxu0 %v4352
        %4374 = vmatpush.bf16.msra.mxu0 %v4351
        %4375 = vmatmul.bf16.gmra.mxu0 %v4301
        %v4376 = vpop.f32.mrf.mxu0
        %v4377 = vadd.f32 0.0, %v4376
        %v4378 = vpop.f32.mrf.mxu0
        %4379 = vdwg.mxu0
        %v4380 = vadd.f32 %v4299, %v4377
        %v4381 = vld [vmem:[%s917] ss:$2 sm:$0xff]
        %v4382 = vpack.c.bf16 %v4381, %v4381
        %s4383 = scalar_lea.vmem %s1, 2048
        %v4384 = vld [vmem:[%s4383] sm:$0xf]
        %v4385 = vld [vmem:[%s4383 + $0x4] sm:$0xf]
        %v4386 = vld [vmem:[%s4383 + $0x8] sm:$0xf]
        %v4387 = vld [vmem:[%s4383 + $0xc] sm:$0xf]
        %v4388 = vld [vmem:[%s4383 + $0x10] sm:$0xf]
        %v4389 = vld [vmem:[%s4383 + $0x14] sm:$0xf]
        %v4390 = vld [vmem:[%s4383 + $0x18] sm:$0xf]
        %v4391 = vld [vmem:[%s4383 + $0x1c] sm:$0xf]
        %v4392 = vld [vmem:[%s4383 + $0x20] sm:$0xf]
        %v4393 = vld [vmem:[%s4383 + $0x24] sm:$0xf]
        %v4394 = vld [vmem:[%s4383 + $0x28] sm:$0xf]
        %v4395 = vld [vmem:[%s4383 + $0x2c] sm:$0xf]
        %v4396 = vld [vmem:[%s4383 + $0x30] sm:$0xf]
        %v4397 = vld [vmem:[%s4383 + $0x34] sm:$0xf]
        %v4398 = vld [vmem:[%s4383 + $0x38] sm:$0xf]
        %v4399 = vld [vmem:[%s4383 + $0x3c] sm:$0xf]
        %v4416 = vunpack.c.l.b16 %v4384
        %v4417 = vunpack.c.l.b16 %v4385
        %v4418 = vunpack.c.l.b16 %v4386
        %v4419 = vunpack.c.l.b16 %v4387
        %v4420 = vunpack.c.l.b16 %v4388
        %v4421 = vunpack.c.l.b16 %v4389
        %v4422 = vunpack.c.l.b16 %v4390
        %v4423 = vunpack.c.l.b16 %v4391
        %v4424 = vunpack.c.l.b16 %v4392
        %v4425 = vunpack.c.l.b16 %v4393
        %v4426 = vunpack.c.l.b16 %v4394
        %v4427 = vunpack.c.l.b16 %v4395
        %v4428 = vunpack.c.l.b16 %v4396
        %v4429 = vunpack.c.l.b16 %v4397
        %v4430 = vunpack.c.l.b16 %v4398
        %v4431 = vunpack.c.l.b16 %v4399
        %v4432 = vpack.c.b16 %v4417, %v4416
        %v4433 = vpack.c.b16 %v4419, %v4418
        %v4434 = vpack.c.b16 %v4421, %v4420
        %v4435 = vpack.c.b16 %v4423, %v4422
        %v4436 = vpack.c.b16 %v4425, %v4424
        %v4437 = vpack.c.b16 %v4427, %v4426
        %v4438 = vpack.c.b16 %v4429, %v4428
        %v4439 = vpack.c.b16 %v4431, %v4430
        %4448 = vmatpush.bf16.msra.mxu0 %v4439
        %4449 = vmatpush.bf16.msra.mxu0 %v4438
        %4450 = vmatpush.bf16.msra.mxu0 %v4437
        %4451 = vmatpush.bf16.msra.mxu0 %v4436
        %4452 = vmatpush.bf16.msra.mxu0 %v4435
        %4453 = vmatpush.bf16.msra.mxu0 %v4434
        %4454 = vmatpush.bf16.msra.mxu0 %v4433
        %4455 = vmatpush.bf16.msra.mxu0 %v4432
        %4456 = vmatmul.bf16.gmra.mxu0 %v4382
        %v4457 = vpop.f32.mrf.mxu0
        %v4458 = vadd.f32 0.0, %v4457
        %v4459 = vpop.f32.mrf.mxu0
        %4460 = vdwg.mxu0
        %v4461 = vadd.f32 %v4380, %v4458
        %v4462 = vld [vmem:[%s1039] ss:$2 sm:$0xff]
        %v4463 = vpack.c.bf16 %v4462, %v4462
        %s4464 = scalar_lea.vmem %s1, 2112
        %v4465 = vld [vmem:[%s4464] sm:$0xf]
        %v4466 = vld [vmem:[%s4464 + $0x4] sm:$0xf]
        %v4467 = vld [vmem:[%s4464 + $0x8] sm:$0xf]
        %v4468 = vld [vmem:[%s4464 + $0xc] sm:$0xf]
        %v4469 = vld [vmem:[%s4464 + $0x10] sm:$0xf]
        %v4470 = vld [vmem:[%s4464 + $0x14] sm:$0xf]
        %v4471 = vld [vmem:[%s4464 + $0x18] sm:$0xf]
        %v4472 = vld [vmem:[%s4464 + $0x1c] sm:$0xf]
        %v4473 = vld [vmem:[%s4464 + $0x20] sm:$0xf]
        %v4474 = vld [vmem:[%s4464 + $0x24] sm:$0xf]
        %v4475 = vld [vmem:[%s4464 + $0x28] sm:$0xf]
        %v4476 = vld [vmem:[%s4464 + $0x2c] sm:$0xf]
        %v4477 = vld [vmem:[%s4464 + $0x30] sm:$0xf]
        %v4478 = vld [vmem:[%s4464 + $0x34] sm:$0xf]
        %v4479 = vld [vmem:[%s4464 + $0x38] sm:$0xf]
        %v4480 = vld [vmem:[%s4464 + $0x3c] sm:$0xf]
        %v4497 = vunpack.c.l.b16 %v4465
        %v4498 = vunpack.c.l.b16 %v4466
        %v4499 = vunpack.c.l.b16 %v4467
        %v4500 = vunpack.c.l.b16 %v4468
        %v4501 = vunpack.c.l.b16 %v4469
        %v4502 = vunpack.c.l.b16 %v4470
        %v4503 = vunpack.c.l.b16 %v4471
        %v4504 = vunpack.c.l.b16 %v4472
        %v4505 = vunpack.c.l.b16 %v4473
        %v4506 = vunpack.c.l.b16 %v4474
        %v4507 = vunpack.c.l.b16 %v4475
        %v4508 = vunpack.c.l.b16 %v4476
        %v4509 = vunpack.c.l.b16 %v4477
        %v4510 = vunpack.c.l.b16 %v4478
        %v4511 = vunpack.c.l.b16 %v4479
        %v4512 = vunpack.c.l.b16 %v4480
        %v4513 = vpack.c.b16 %v4498, %v4497
        %v4514 = vpack.c.b16 %v4500, %v4499
        %v4515 = vpack.c.b16 %v4502, %v4501
        %v4516 = vpack.c.b16 %v4504, %v4503
        %v4517 = vpack.c.b16 %v4506, %v4505
        %v4518 = vpack.c.b16 %v4508, %v4507
        %v4519 = vpack.c.b16 %v4510, %v4509
        %v4520 = vpack.c.b16 %v4512, %v4511
        %4529 = vmatpush.bf16.msra.mxu0 %v4520
        %4530 = vmatpush.bf16.msra.mxu0 %v4519
        %4531 = vmatpush.bf16.msra.mxu0 %v4518
        %4532 = vmatpush.bf16.msra.mxu0 %v4517
        %4533 = vmatpush.bf16.msra.mxu0 %v4516
        %4534 = vmatpush.bf16.msra.mxu0 %v4515
        %4535 = vmatpush.bf16.msra.mxu0 %v4514
        %4536 = vmatpush.bf16.msra.mxu0 %v4513
        %4537 = vmatmul.bf16.gmra.mxu0 %v4463
        %v4538 = vpop.f32.mrf.mxu0
        %v4539 = vadd.f32 0.0, %v4538
        %v4540 = vpop.f32.mrf.mxu0
        %4541 = vdwg.mxu0
        %v4542 = vadd.f32 %v4461, %v4539
        %v4543 = vld [vmem:[%s1161] ss:$2 sm:$0xff]
        %v4544 = vpack.c.bf16 %v4543, %v4543
        %s4545 = scalar_lea.vmem %s1, 2176
        %v4546 = vld [vmem:[%s4545] sm:$0xf]
        %v4547 = vld [vmem:[%s4545 + $0x4] sm:$0xf]
        %v4548 = vld [vmem:[%s4545 + $0x8] sm:$0xf]
        %v4549 = vld [vmem:[%s4545 + $0xc] sm:$0xf]
        %v4550 = vld [vmem:[%s4545 + $0x10] sm:$0xf]
        %v4551 = vld [vmem:[%s4545 + $0x14] sm:$0xf]
        %v4552 = vld [vmem:[%s4545 + $0x18] sm:$0xf]
        %v4553 = vld [vmem:[%s4545 + $0x1c] sm:$0xf]
        %v4554 = vld [vmem:[%s4545 + $0x20] sm:$0xf]
        %v4555 = vld [vmem:[%s4545 + $0x24] sm:$0xf]
        %v4556 = vld [vmem:[%s4545 + $0x28] sm:$0xf]
        %v4557 = vld [vmem:[%s4545 + $0x2c] sm:$0xf]
        %v4558 = vld [vmem:[%s4545 + $0x30] sm:$0xf]
        %v4559 = vld [vmem:[%s4545 + $0x34] sm:$0xf]
        %v4560 = vld [vmem:[%s4545 + $0x38] sm:$0xf]
        %v4561 = vld [vmem:[%s4545 + $0x3c] sm:$0xf]
        %v4578 = vunpack.c.l.b16 %v4546
        %v4579 = vunpack.c.l.b16 %v4547
        %v4580 = vunpack.c.l.b16 %v4548
        %v4581 = vunpack.c.l.b16 %v4549
        %v4582 = vunpack.c.l.b16 %v4550
        %v4583 = vunpack.c.l.b16 %v4551
        %v4584 = vunpack.c.l.b16 %v4552
        %v4585 = vunpack.c.l.b16 %v4553
        %v4586 = vunpack.c.l.b16 %v4554
        %v4587 = vunpack.c.l.b16 %v4555
        %v4588 = vunpack.c.l.b16 %v4556
        %v4589 = vunpack.c.l.b16 %v4557
        %v4590 = vunpack.c.l.b16 %v4558
        %v4591 = vunpack.c.l.b16 %v4559
        %v4592 = vunpack.c.l.b16 %v4560
        %v4593 = vunpack.c.l.b16 %v4561
        %v4594 = vpack.c.b16 %v4579, %v4578
        %v4595 = vpack.c.b16 %v4581, %v4580
        %v4596 = vpack.c.b16 %v4583, %v4582
        %v4597 = vpack.c.b16 %v4585, %v4584
        %v4598 = vpack.c.b16 %v4587, %v4586
        %v4599 = vpack.c.b16 %v4589, %v4588
        %v4600 = vpack.c.b16 %v4591, %v4590
        %v4601 = vpack.c.b16 %v4593, %v4592
        %4610 = vmatpush.bf16.msra.mxu0 %v4601
        %4611 = vmatpush.bf16.msra.mxu0 %v4600
        %4612 = vmatpush.bf16.msra.mxu0 %v4599
        %4613 = vmatpush.bf16.msra.mxu0 %v4598
        %4614 = vmatpush.bf16.msra.mxu0 %v4597
        %4615 = vmatpush.bf16.msra.mxu0 %v4596
        %4616 = vmatpush.bf16.msra.mxu0 %v4595
        %4617 = vmatpush.bf16.msra.mxu0 %v4594
        %4618 = vmatmul.bf16.gmra.mxu0 %v4544
        %v4619 = vpop.f32.mrf.mxu0
        %v4620 = vadd.f32 0.0, %v4619
        %v4621 = vpop.f32.mrf.mxu0
        %4622 = vdwg.mxu0
        %v4623 = vadd.f32 %v4542, %v4620
        %v4624 = vld [vmem:[%s1283] ss:$2 sm:$0xff]
        %v4625 = vpack.c.bf16 %v4624, %v4624
        %s4626 = scalar_lea.vmem %s1, 2240
        %v4627 = vld [vmem:[%s4626] sm:$0xf]
        %v4628 = vld [vmem:[%s4626 + $0x4] sm:$0xf]
        %v4629 = vld [vmem:[%s4626 + $0x8] sm:$0xf]
        %v4630 = vld [vmem:[%s4626 + $0xc] sm:$0xf]
        %v4631 = vld [vmem:[%s4626 + $0x10] sm:$0xf]
        %v4632 = vld [vmem:[%s4626 + $0x14] sm:$0xf]
        %v4633 = vld [vmem:[%s4626 + $0x18] sm:$0xf]
        %v4634 = vld [vmem:[%s4626 + $0x1c] sm:$0xf]
        %v4635 = vld [vmem:[%s4626 + $0x20] sm:$0xf]
        %v4636 = vld [vmem:[%s4626 + $0x24] sm:$0xf]
        %v4637 = vld [vmem:[%s4626 + $0x28] sm:$0xf]
        %v4638 = vld [vmem:[%s4626 + $0x2c] sm:$0xf]
        %v4639 = vld [vmem:[%s4626 + $0x30] sm:$0xf]
        %v4640 = vld [vmem:[%s4626 + $0x34] sm:$0xf]
        %v4641 = vld [vmem:[%s4626 + $0x38] sm:$0xf]
        %v4642 = vld [vmem:[%s4626 + $0x3c] sm:$0xf]
        %v4659 = vunpack.c.l.b16 %v4627
        %v4660 = vunpack.c.l.b16 %v4628
        %v4661 = vunpack.c.l.b16 %v4629
        %v4662 = vunpack.c.l.b16 %v4630
        %v4663 = vunpack.c.l.b16 %v4631
        %v4664 = vunpack.c.l.b16 %v4632
        %v4665 = vunpack.c.l.b16 %v4633
        %v4666 = vunpack.c.l.b16 %v4634
        %v4667 = vunpack.c.l.b16 %v4635
        %v4668 = vunpack.c.l.b16 %v4636
        %v4669 = vunpack.c.l.b16 %v4637
        %v4670 = vunpack.c.l.b16 %v4638
        %v4671 = vunpack.c.l.b16 %v4639
        %v4672 = vunpack.c.l.b16 %v4640
        %v4673 = vunpack.c.l.b16 %v4641
        %v4674 = vunpack.c.l.b16 %v4642
        %v4675 = vpack.c.b16 %v4660, %v4659
        %v4676 = vpack.c.b16 %v4662, %v4661
        %v4677 = vpack.c.b16 %v4664, %v4663
        %v4678 = vpack.c.b16 %v4666, %v4665
        %v4679 = vpack.c.b16 %v4668, %v4667
        %v4680 = vpack.c.b16 %v4670, %v4669
        %v4681 = vpack.c.b16 %v4672, %v4671
        %v4682 = vpack.c.b16 %v4674, %v4673
        %4691 = vmatpush.bf16.msra.mxu0 %v4682
        %4692 = vmatpush.bf16.msra.mxu0 %v4681
        %4693 = vmatpush.bf16.msra.mxu0 %v4680
        %4694 = vmatpush.bf16.msra.mxu0 %v4679
        %4695 = vmatpush.bf16.msra.mxu0 %v4678
        %4696 = vmatpush.bf16.msra.mxu0 %v4677
        %4697 = vmatpush.bf16.msra.mxu0 %v4676
        %4698 = vmatpush.bf16.msra.mxu0 %v4675
        %4699 = vmatmul.bf16.gmra.mxu0 %v4625
        %v4700 = vpop.f32.mrf.mxu0
        %v4701 = vadd.f32 0.0, %v4700
        %v4702 = vpop.f32.mrf.mxu0
        %4703 = vdwg.mxu0
        %v4704 = vadd.f32 %v4623, %v4701
        %s4705 = scalar_lea.vmem %s2, 12
        %v4706 = vld [vmem:[%s4705] sm:$0x1]
        %v4707 = vperm.slane %v4706, 0
        %v4708 = vadd.f32 %v4704, %v4707
        %4709 = vadd.xlane.f32.xlu0 %v4708
        %v4710 = vpop.xlane.xlu0 %4709
        %v4711 = vmul.f32 %v4710, 0.03125
        %v4712 = vmul.f32 %v4708, %v4708
        %4713 = vadd.xlane.f32.xlu0 %v4712
        %v4714 = vpop.xlane.xlu0 %4713
        %v4715 = vmul.f32 %v4714, 0.03125
        %v4716 = vsub.f32 %v4708, %v4711
        %v4717 = vmul.f32 %v4711, %v4711
        %v4718 = vsub.f32 %v4715, %v4717
        %v4719 = vadd.f32 %v4718, 1e-06
        %v4720 = vrsqrt.pop %v4719
        %v4721 = vmul.f32 %v4720, %v4719
        %v4722 = vmul.f32 %v4721, %v4720
        %v4723 = vmul.f32 0.5, %v4722
        %v4724 = vsub.f32 1.5, %v4723
        %v4725 = vmul.f32 %v4720, %v4724
        %vm4726 = vweird.f32 %v4719
        %vm4727 = vweird.f32 %v4720
        %vm4728 = vmor %vm4726, %vm4727
        %v4729 = vsel %vm4728, %v4720, %v4725
        %v4730 = vmul.f32 %v4716, %v4729
        %v4731 = vld [vmem:[%s4705 + $0x1] sm:$0x1]
        %v4732 = vperm.slane %v4731, 0
        %v4733 = vmul.f32 %v4732, %v4730
        %v4734 = vld [vmem:[%s4705 + $0x2] sm:$0x1]
        %v4735 = vperm.slane %v4734, 0
        %v4736 = vadd.f32 %v4733, %v4735
        %v4737 = vmul.f32 %v4736, 0.5
        %v4738 = vmul.f32 %v4736, 0.70710677
        %v4739 = vand.u32 2147483647, %v4738
        %v4740 = vmul.f32 %v4739, 0.3275911
        %v4741 = vadd.f32 %v4740, 1.0
        %v4742 = vrcp.pop %v4741
        %v4743 = vmul.f32 %v4741, %v4742
        %v4744 = vsub.f32 1.0, %v4743
        %v4745 = vmul.f32 %v4742, %v4744
        %v4746 = vadd.f32 %v4742, %v4745
        %vm4747 = vweird.f32 %v4741
        %vm4748 = vweird.f32 %v4742
        %vm4749 = vmor %vm4747, %vm4748
        %v4750 = vsel %vm4749, %v4742, %v4746
        %v4751 = vand.u32 2147483647, %v4741
        %vm4752 = vcmp.eq.f32.partialorder %v4751, 8.507059e+37
        %v4753 = vand.u32 %v4741, 2147483648
        %v4754 = vor.u32 1.1754944e-38, %v4753
        %v4755 = vsel %vm4752, %v4754, %v4750
        %v4756 = vmul.f32 1.0, %v4755
        %v4757 = vmul.f32 %v4756, 1.0614054
        %v4758 = vadd.f32 %v4757, -1.4531521
        %v4759 = vmul.f32 %v4758, %v4756
        %v4760 = vadd.f32 %v4759, 1.4214138
        %v4761 = vmul.f32 %v4760, %v4756
        %v4762 = vadd.f32 %v4761, -0.28449672
        %v4763 = vmul.f32 %v4762, %v4756
        %v4764 = vadd.f32 %v4763, 0.2548296
        %v4765 = vmul.f32 %v4764, %v4756
        %v4766 = vsub.f32 0.0, %v4739
        %v4767 = vmul.f32 %v4766, %v4739
        %v4768 = vmul.f32 %v4767, 1.442695
        %v4769 = vpow.pop %v4768
        %v4770 = vmul.f32 %v4765, %v4769
        %v4771 = vsub.f32 1.0, %v4770
        %vm4772 = vcmp.ge.f32.partialorder %v4738, 0.0
        %v4773 = vsub.f32 0.0, %v4771
        %v4774 = vsel %vm4772, %v4771, %v4773
        %v4775 = vadd.f32 %v4774, 1.0
        %v4776 = vmul.f32 %v4737, %v4775
        %v4777 = vpack.c.bf16 %v4776, %v4776
        %v4778 = vld [vmem:[%s3] sm:$0xf]
        %v4779 = vld [vmem:[%s3 + $0x4] sm:$0xf]
        %v4780 = vld [vmem:[%s3 + $0x8] sm:$0xf]
        %v4781 = vld [vmem:[%s3 + $0xc] sm:$0xf]
        %v4782 = vld [vmem:[%s3 + $0x10] sm:$0xf]
        %v4783 = vld [vmem:[%s3 + $0x14] sm:$0xf]
        %v4784 = vld [vmem:[%s3 + $0x18] sm:$0xf]
        %v4785 = vld [vmem:[%s3 + $0x1c] sm:$0xf]
        %v4786 = vld [vmem:[%s3 + $0x20] sm:$0xf]
        %v4787 = vld [vmem:[%s3 + $0x24] sm:$0xf]
        %v4788 = vld [vmem:[%s3 + $0x28] sm:$0xf]
        %v4789 = vld [vmem:[%s3 + $0x2c] sm:$0xf]
        %v4790 = vld [vmem:[%s3 + $0x30] sm:$0xf]
        %v4791 = vld [vmem:[%s3 + $0x34] sm:$0xf]
        %v4792 = vld [vmem:[%s3 + $0x38] sm:$0xf]
        %v4793 = vld [vmem:[%s3 + $0x3c] sm:$0xf]
        %v4810 = vunpack.c.l.b16 %v4778
        %v4811 = vunpack.c.l.b16 %v4779
        %v4812 = vunpack.c.l.b16 %v4780
        %v4813 = vunpack.c.l.b16 %v4781
        %v4814 = vunpack.c.l.b16 %v4782
        %v4815 = vunpack.c.l.b16 %v4783
        %v4816 = vunpack.c.l.b16 %v4784
        %v4817 = vunpack.c.l.b16 %v4785
        %v4818 = vunpack.c.l.b16 %v4786
        %v4819 = vunpack.c.l.b16 %v4787
        %v4820 = vunpack.c.l.b16 %v4788
        %v4821 = vunpack.c.l.b16 %v4789
        %v4822 = vunpack.c.l.b16 %v4790
        %v4823 = vunpack.c.l.b16 %v4791
        %v4824 = vunpack.c.l.b16 %v4792
        %v4825 = vunpack.c.l.b16 %v4793
        %v4826 = vpack.c.b16 %v4811, %v4810
        %v4827 = vpack.c.b16 %v4813, %v4812
        %v4828 = vpack.c.b16 %v4815, %v4814
        %v4829 = vpack.c.b16 %v4817, %v4816
        %v4830 = vpack.c.b16 %v4819, %v4818
        %v4831 = vpack.c.b16 %v4821, %v4820
        %v4832 = vpack.c.b16 %v4823, %v4822
        %v4833 = vpack.c.b16 %v4825, %v4824
        %4842 = vmatpush.bf16.msra.mxu0 %v4833
        %4843 = vmatpush.bf16.msra.mxu0 %v4832
        %4844 = vmatpush.bf16.msra.mxu0 %v4831
        %4845 = vmatpush.bf16.msra.mxu0 %v4830
        %4846 = vmatpush.bf16.msra.mxu0 %v4829
        %4847 = vmatpush.bf16.msra.mxu0 %v4828
        %4848 = vmatpush.bf16.msra.mxu0 %v4827
        %4849 = vmatpush.bf16.msra.mxu0 %v4826
        %4850 = vmatmul.bf16.gmra.mxu0 %v4777
        %v4851 = vpop.f32.mrf.mxu0
        %v4852 = vadd.f32 0.0, %v4851
        %v4853 = vpop.f32.mrf.mxu0
        %4854 = vdwg.mxu0
        %v4855 = vld [vmem:[%s4] sm:$0x1]
        %v4856 = vadd.f32 %v4852, %v4855
        %4857 = vst [vmem:[%s216] sm:$0x1] %v4856
        %s4858 = sand.u32 %s137, 1
        %s4859 = scalar_lea.sflag [#allocation4], %s4858
        %s4860 = sand.u32 %s137, 1
        %s4861 = scalar_lea.vmem [#allocation3], %s4860
        // Predicated region
        $region41: #{conv_block_forward.1} parent=39 // pred_check
          %p4862 = pneg %p147
        $region42: #{conv_block_forward.1} parent=39 // pred_check_branch
          %4864 = sbr.rel (%p4862) target = $region44
        $region43: #{conv_block_forward.1} parent=39 // pred_region
          %4866 = vsyncadd %s4859, 0
          %s4867 = scalar_lea.hbm %s5, %s19
          %s4869 = sshll.u32 %s4861, 4
          %s4870 = int_to_ptr.vmem [resolvable:$true] %s4869
          %s4871 = sshll.u32 %s4867, 4
          %s4872 = int_to_ptr.hbm [resolvable:$true] %s4871
          %4874 = dma.vmem_to_hbm [thread:$0]  %s4870, 16, %s4872, %s4859
        $region44: #{conv_block_forward.1} parent=39 // pred_fallthru
          _
      $region40: #{conv_block_forward.1} parent=5 // pred_fallthru
        _
      %p4875 = scmp.le.s32.totalorder 2, %s14
      // Predicated region
      $region45: #{conv_block_forward.1} parent=5 // pred_check
        %p4876 = pneg %p4875
      $region46: #{conv_block_forward.1} parent=5 // pred_check_branch
        %4878 = sbr.rel (%p4876) target = $region48
      $region47: #{conv_block_forward.1} parent=5 // pred_region
        %s4879 = ssub.s32 %s14, 2
        // Predicated region
        $region49: #{conv_block_forward.1} parent=47 // pred_check
          %p4880 = pneg %p153
        $region50: #{conv_block_forward.1} parent=47 // pred_check_branch
          %4882 = sbr.rel (%p4880) target = $region52
        $region51: #{conv_block_forward.1} parent=47 // pred_region
          %s4883 = sand.u32 %s138, 1
          %s4884 = scalar_lea.sflag [#allocation4], %s4883
          %s4885 = sand.u32 %s138, 1
          %s4886 = scalar_lea.vmem [#allocation3], %s4885
          %4888 = dma.done %s4884, 16
        $region52: #{conv_block_forward.1} parent=47 // pred_fallthru
          _
      $region48: #{conv_block_forward.1} parent=5 // pred_fallthru
        _
    $region6: #{conv_block_forward.1} parent=1 // loop_footer
      %s18 = sadd.s32 1, %s14
    $region7: #{conv_block_forward.1} parent=1 // loop_footer_branch
      %13 = sbr.rel target = $region3
    $region8: #{conv_block_forward.1} parent=1 // loop_exit
      _
    %4889 = vsyncpa [#allocation4], 1
    %s4890 = scalar_lea.sflag [#allocation4], 1
    %4891 = vsyncpa %s4890, 1

</llo_original>
